<compile_context>
chip_gen: v6e
topology: v6e:2x2x1
jax: 0.10.0
libtpu: 0.0.40
codegen_flags: <defaults>
</compile_context>

<pallas_src>
import math

import jax
import jax.numpy as jnp
from jax.experimental import pallas as pl
from jax.experimental.pallas import tpu as pltpu

_INV_SQRT2 = 0.7071067811865476


# --------------------------------------------------------------------------
# Kernel
# --------------------------------------------------------------------------
def _make_kernel(depth, n_h, use_kron, matmul_dtype):
    """Build the fused all-layers kernel for one batch block.

    x_ref  : (TB, C, S)       S = H*W, lane-dense activations (f32 in/out)
    wqt_ref: (D, C, C/2)      sp_wq 1x1 conv weight, transposed (f32)
    bq_ref : (D, 1, C/2)      (f32)
    wv_ref : (D, C/2, C)      sp_wv 1x1 conv weight (f32)
    bv_ref : (D, C/2, 1)      (f32)
    w1_ref : (D, S, H*Hid) or (D, W, Hid)      (matmul_dtype, e.g. bf16)
    b1_ref : (D, 1, H*Hid) or (D, 1, Hid)      (f32)
    w2_ref : (D, H*Hid, S) or (D, Hid, W)      (matmul_dtype)
    b2_ref : (D, 1, S)     or (D, 1, W)        (f32)
    """

    def kernel(x_ref, wqt_ref, bq_ref, wv_ref, bv_ref,
               w1_ref, b1_ref, w2_ref, b2_ref, o_ref):
        x0 = x_ref[...].astype(jnp.float32)                     # (TB, C, S)
        tb, c, s = x0.shape

        def layer(d, x):
            wqt = wqt_ref[d]                                     # (C, C/2)
            bq = bq_ref[d]                                       # (1, C/2)
            wv = wv_ref[d]                                       # (C/2, C)
            bv = bv_ref[d]                                       # (C/2, 1)
            w1 = w1_ref[d]
            b1 = b1_ref[d]
            w2 = w2_ref[d]
            b2 = b2_ref[d]

            # --- TimeFrequencyAttention (avg-pool folded through sp_wq,
            #     gating contraction reassociated: q.(wv x + bv) = (q wv).x + q.bv)
            xmean = jnp.mean(x, axis=2)                          # (TB, C)
            q = jnp.dot(xmean, wqt, preferred_element_type=jnp.float32) + bq
            q = q - jnp.max(q, axis=-1, keepdims=True)           # softmax (lanes)
            q = jnp.exp(q)
            q = q / jnp.sum(q, axis=-1, keepdims=True)           # (TB, C/2)

            a = jnp.dot(q, wv, preferred_element_type=jnp.float32)   # (TB, C)
            qb = jnp.dot(q, bv, preferred_element_type=jnp.float32)  # (TB, 1)
            wz = jnp.sum(a[:, :, None] * x, axis=1) + qb             # (TB, S)
            x = jax.nn.sigmoid(wz)[:, None, :] * x + x               # psa(x) + x

            # --- FeedForward over the W axis -------------------------------
            if use_kron:
                # block-diagonal kron(I_H, w) weights -> stays lane-dense (S)
                xm = x.reshape(tb * c, s)
            else:
                # W already lane-dense (>=128): run per-row matmuls directly
                xm = x.reshape(tb * c * n_h, s // n_h)
            h1 = jnp.dot(xm.astype(matmul_dtype), w1,
                         preferred_element_type=jnp.float32) + b1
            h1 = 0.5 * h1 * (1.0 + jax.lax.erf(h1 * _INV_SQRT2))     # exact GELU
            y = jnp.dot(h1.astype(matmul_dtype), w2,
                        preferred_element_type=jnp.float32) + b2
            return y.reshape(tb, c, s) + x                           # ff(x) + x

        if depth <= 4:
            x = x0
            for d in range(depth):                               # static unroll
                x = layer(d, x)
        else:
            # bounded live ranges for deep stacks
            x = jax.lax.fori_loop(0, depth, layer, x0)

        o_ref[...] = x.astype(o_ref.dtype)

    return kernel


# --------------------------------------------------------------------------
# Sizing helpers
# --------------------------------------------------------------------------
def _physical_vmem_bytes():
    try:
        info = pltpu.get_tpu_info()
        v = getattr(info, "vmem_capacity_bytes", None)
        if v:
            return int(v)
    except Exception:
        pass
    try:
        kind = jax.devices()[0].device_kind.lower()
        if "v7" in kind:
            return 64 << 20
    except Exception:
        pass
    return 128 << 20          # v5e / v6e physical VMEM


def _tile_target_bytes(vmem_phys):
    # ~4 MiB activation tiles on 128 MiB parts (v5e/v6e), ~2 MiB on v7x (64 MiB).
    return int(min(4 << 20, max(1 << 20, vmem_phys // 32)))


def _pick_batch_block(B, C, S, itemsize, target_bytes):
    """Largest divisor of B whose (TB,C,S) block fits the target while keeping
    grid >= 2 (two TensorCores on v7x + pipeline overlap)."""
    cap = max(1, target_bytes // max(1, C * S * itemsize))
    if B >= 2:
        cap = min(cap, B // 2)
    cap = max(1, min(cap, B))
    best = 1
    for t in range(1, cap + 1):
        if B % t == 0:
            best = t
    return best


def _vmem_limit_bytes(tile_elems, itemsize, hidden, dim, weight_bytes, vmem_phys):
    act_io = 4 * tile_elems * itemsize                      # in+out, double-buffered
    h1_ratio = max(1, -(-hidden // max(1, dim)))            # ceil(hidden/dim)
    temps = tile_elems * 4 * (4 + h1_ratio)                 # f32 x, gate, y, h1, slack
    need = act_io + temps + 2 * weight_bytes
    limit = max(int(need * 1.5), 32 << 20)
    limit = min(limit, int(vmem_phys * 0.9))
    return max(limit, 16 << 20)


def _weight_spec(shape, single_buffer):
    nd = len(shape)
    if single_buffer:
        # Resident weights (constant index map): no need for 2-deep buffering.
        return pl.BlockSpec(shape, lambda b: (0,) * nd,
                            pipeline_mode=pl.Buffered(1))
    return pl.BlockSpec(shape, lambda b: (0,) * nd)


# --------------------------------------------------------------------------
# Wrapper
# --------------------------------------------------------------------------
def tfa_encoder(x, layer_params, *, matmul_dtype=jnp.bfloat16):
    """Apply the full TFA encoder; x is (B, C, H, W) (NCHW, as in PyTorch)."""
    B, C, H, W = x.shape
    S = H * W
    depth = len(layer_params)
    dim, hidden = layer_params[0][4].shape          # Linear1 stored as (dim, hidden)
    assert dim == W, "FeedForward dim must equal the W axis of the input"
    assert C % 2 == 0, "TimeFrequencyAttention requires an even channel count"
    # NOTE: C % 8 == 0 keeps the in-kernel (TB,C,S)<->(TB*C,S) reshapes pure
    # layout views (no VMEM relayout copy); other C still runs correctly.

    mm_size = jnp.dtype(matmul_dtype).itemsize
    kron_bytes = depth * 2 * S * H * hidden * mm_size
    use_kron = (W < 128) and (kron_bytes <= (16 << 20))

    # --- pack / transform weights once (wrapper-side, plain JAX) ------------
    wqt = jnp.stack([p[2].T for p in layer_params])                 # (D, C, C/2)
    bq = jnp.stack([p[3].reshape(1, -1) for p in layer_params])     # (D, 1, C/2)
    wv = jnp.stack([p[0] for p in layer_params])                    # (D, C/2, C)
    bv = jnp.stack([p[1] for p in layer_params])                    # (D, C/2, 1)
    if use_kron:
        eye_h = jnp.eye(H, dtype=jnp.float32)
        w1 = jnp.stack([jnp.kron(eye_h, p[4]) for p in layer_params])   # (D,S,H*Hid)
        b1 = jnp.stack([jnp.tile(p[5], (1, H)) for p in layer_params])  # (D,1,H*Hid)
        w2 = jnp.stack([jnp.kron(eye_h, p[6]) for p in layer_params])   # (D,H*Hid,S)
        b2 = jnp.stack([jnp.tile(p[7], (1, H)) for p in layer_params])  # (D,1,S)
    else:
        w1 = jnp.stack([p[4] for p in layer_params])                    # (D,W,Hid)
        b1 = jnp.stack([p[5] for p in layer_params])                    # (D,1,Hid)
        w2 = jnp.stack([p[6] for p in layer_params])                    # (D,Hid,W)
        b2 = jnp.stack([p[7] for p in layer_params])                    # (D,1,W)
    w1 = w1.astype(matmul_dtype)
    w2 = w2.astype(matmul_dtype)

    xs = x.reshape(B, C, S)                                          # lane-dense
    vmem_phys = _physical_vmem_bytes()
    TB = _pick_batch_block(B, C, S, xs.dtype.itemsize, _tile_target_bytes(vmem_phys))

    weights = (wqt, bq, wv, bv, w1, b1, w2, b2)
    weight_bytes = sum(int(a.size) * a.dtype.itemsize for a in weights)
    vmem_limit = _vmem_limit_bytes(TB * C * S, xs.dtype.itemsize, hidden, W,
                                   weight_bytes, vmem_phys)

    kernel = _make_kernel(depth, H, use_kron, matmul_dtype)

    def _call(single_buffer_weights):
        in_specs = [pl.BlockSpec((TB, C, S), lambda b: (b, 0, 0))]
        in_specs += [_weight_spec(a.shape, single_buffer_weights) for a in weights]
        return pl.pallas_call(
            kernel,
            out_shape=jax.ShapeDtypeStruct((B, C, S), x.dtype),
            grid=(B // TB,),
            in_specs=in_specs,
            out_specs=pl.BlockSpec((TB, C, S), lambda b: (b, 0, 0)),
            input_output_aliases={0: 0},
            compiler_params=pltpu.CompilerParams(
                dimension_semantics=("parallel",),
                vmem_limit_bytes=vmem_limit),
        )(xs, *weights)

    try:
        out = _call(True)
    except Exception:
        # pl.Buffered(1) single-buffering not supported by this jaxlib:
        # fall back to default (double-buffered) resident weight specs.
        out = _call(False)
    return out.reshape(B, C, H, W)


# --------------------------------------------------------------------------
# Parameters + pure-JAX reference (PyTorch forward semantics)
# --------------------------------------------------------------------------
def init_params(key, depth, channels, dim, hidden_dim):
    """Deterministic synthetic parameters (shapes follow the torch __init__)."""
    c2 = channels // 2
    params = []
    for d in range(depth):
        ks = jax.random.split(jax.random.fold_in(key, d), 8)
        wv = jax.random.normal(ks[0], (c2, channels), jnp.float32) * (1.0 / math.sqrt(channels))
        bv = jax.random.normal(ks[1], (c2, 1), jnp.float32) * 0.05
        wq = jax.random.normal(ks[2], (c2, channels), jnp.float32) * (1.0 / math.sqrt(channels))
        bq = jax.random.normal(ks[3], (c2, 1), jnp.float32) * 0.05
        # Linears stored pre-transposed: (in, out).
        w1 = jax.random.normal(ks[4], (dim, hidden_dim), jnp.float32) * (1.0 / math.sqrt(dim))
        b1 = jax.random.normal(ks[5], (1, hidden_dim), jnp.float32) * 0.05
        w2 = jax.random.normal(ks[6], (hidden_dim, dim), jnp.float32) * (1.0 / math.sqrt(hidden_dim))
        b2 = jax.random.normal(ks[7], (1, dim), jnp.float32) * 0.05
        params.append((wv, bv, wq, bq, w1, b1, w2, b2))
    return params


def tfa_encoder_ref(x, layer_params, ff_dtype=jnp.float32):
    """Pure-JAX reference matching the PyTorch forward; ff_dtype selects the
    FeedForward matmul input precision (f32 = exact torch semantics)."""
    for (wv, bv, wq, bq, w1, b1, w2, b2) in layer_params:
        B, C, H, W = x.shape
        xf = x.reshape(B, C, H * W)
        sv = jnp.einsum('oc,bcs->bos', wv, xf) + bv[None]           # (B, C/2, HW)
        sq = jnp.einsum('oc,bcs->bos', wq, xf) + bq[None]           # (B, C/2, HW)
        q = jax.nn.softmax(jnp.mean(sq, axis=2), axis=-1)           # (B, C/2)
        wz = jnp.einsum('bo,bos->bs', q, sv)                        # (B, HW)
        gate = jax.nn.sigmoid(wz).reshape(B, 1, H, W)
        x = gate * x + x
        h1 = jnp.dot(x.astype(ff_dtype), w1.astype(ff_dtype),
                     preferred_element_type=jnp.float32) + b1
        h1 = jax.nn.gelu(h1, approximate=False)
        y = jnp.dot(h1.astype(ff_dtype), w2.astype(ff_dtype),
                    preferred_element_type=jnp.float32) + b2
        x = y + x
    return x


if __name__ == "__main__":
    # NOTE: the torch module also defines ch_wz / LayerNorm / softmax_channel
    # but never uses them in forward(), so they are intentionally omitted.
    B, C, H, W = 2, 8, 8, 16
    depth, dim, hidden_dim = 2, W, 32   # dim must equal W for the FF Linear

    key = jax.random.PRNGKey(0)
    kx, kp = jax.random.split(key)
    x = jax.random.normal(kx, (B, C, H, W), jnp.float32)
    params = init_params(kp, depth, C, dim, hidden_dim)

    out = jax.block_until_ready(tfa_encoder(x, params))
    assert out.shape == (B, C, H, W)

    # Tight check vs a reference with the same FF matmul-input precision
    # (bf16 inputs, f32 accumulation), loose check vs the exact f32 reference
    # (bounds the bf16 MXU rounding error).
    ref_matched = tfa_encoder_ref(x, params, ff_dtype=jnp.bfloat16)
    ref_f32 = tfa_encoder_ref(x, params, ff_dtype=jnp.float32)
    assert jnp.allclose(out, ref_matched, atol=5e-3, rtol=5e-3), \
        "Pallas kernel mismatch vs precision-matched reference"
    assert jnp.allclose(out, ref_f32, atol=5e-2, rtol=5e-2), \
        "Pallas kernel mismatch vs f32 reference"

    print("KERNEL_OK")
</pallas_src>

<mosaic_0001>
module attributes {stable_mosaic.version = 11 : i64} {
  func.func @kernel(%arg0: i32, %arg1: memref<1x8x128xf32, #tpu.memory_space<vmem>>, %arg2: memref<2x8x4xf32, #tpu.memory_space<vmem>>, %arg3: memref<2x1x4xf32, #tpu.memory_space<vmem>>, %arg4: memref<2x4x8xf32, #tpu.memory_space<vmem>>, %arg5: memref<2x4x1xf32, #tpu.memory_space<vmem>>, %arg6: memref<2x128x256xbf16, #tpu.memory_space<vmem>>, %arg7: memref<2x1x256xf32, #tpu.memory_space<vmem>>, %arg8: memref<2x256x128xbf16, #tpu.memory_space<vmem>>, %arg9: memref<2x1x128xf32, #tpu.memory_space<vmem>>, %arg10: memref<1x8x128xf32, #tpu.memory_space<vmem>>) attributes {dimension_semantics = [#tpu.dimension_semantics<parallel>], iteration_bounds = array<i64: 2>, scalar_prefetch = 0 : i64, scratch_operands = 0 : i64, tpu.core_type = #tpu.core_type<tc>, window_params = [{transform_indices = @transform_0, window_bounds = array<i64: 1, 8, 128>}, {pipeline_mode = #tpu.pipeline_mode<synchronous>, transform_indices = @transform_1, window_bounds = array<i64: 2, 8, 4>}, {pipeline_mode = #tpu.pipeline_mode<synchronous>, transform_indices = @transform_2, window_bounds = array<i64: 2, 1, 4>}, {pipeline_mode = #tpu.pipeline_mode<synchronous>, transform_indices = @transform_3, window_bounds = array<i64: 2, 4, 8>}, {pipeline_mode = #tpu.pipeline_mode<synchronous>, transform_indices = @transform_4, window_bounds = array<i64: 2, 4, 1>}, {pipeline_mode = #tpu.pipeline_mode<synchronous>, transform_indices = @transform_5, window_bounds = array<i64: 2, 128, 256>}, {pipeline_mode = #tpu.pipeline_mode<synchronous>, transform_indices = @transform_6, window_bounds = array<i64: 2, 1, 256>}, {pipeline_mode = #tpu.pipeline_mode<synchronous>, transform_indices = @transform_7, window_bounds = array<i64: 2, 256, 128>}, {pipeline_mode = #tpu.pipeline_mode<synchronous>, transform_indices = @transform_8, window_bounds = array<i64: 2, 1, 128>}, {transform_indices = @transform_9, window_bounds = array<i64: 1, 8, 128>}]} {
    %c0 = arith.constant 0 : index
    %c0_0 = arith.constant 0 : index
    %c0_1 = arith.constant 0 : index
    %0 = vector.load %arg1[%c0, %c0_0, %c0_1] : memref<1x8x128xf32, #tpu.memory_space<vmem>>, vector<1x8x128xf32>
    %c0_2 = arith.constant 0 : index
    %c0_3 = arith.constant 0 : index
    %c0_4 = arith.constant 0 : index
    %1 = vector.load %arg2[%c0_2, %c0_3, %c0_4] : memref<2x8x4xf32, #tpu.memory_space<vmem>>, vector<1x8x4xf32>
    %2 = vector.shape_cast %1 : vector<1x8x4xf32> to vector<8x4xf32>
    %c0_5 = arith.constant 0 : index
    %c0_6 = arith.constant 0 : index
    %c0_7 = arith.constant 0 : index
    %3 = vector.load %arg3[%c0_5, %c0_6, %c0_7] : memref<2x1x4xf32, #tpu.memory_space<vmem>>, vector<1x1x4xf32>
    %4 = vector.shape_cast %3 : vector<1x1x4xf32> to vector<1x4xf32>
    %c0_8 = arith.constant 0 : index
    %c0_9 = arith.constant 0 : index
    %c0_10 = arith.constant 0 : index
    %5 = vector.load %arg4[%c0_8, %c0_9, %c0_10] : memref<2x4x8xf32, #tpu.memory_space<vmem>>, vector<1x4x8xf32>
    %6 = vector.shape_cast %5 : vector<1x4x8xf32> to vector<4x8xf32>
    %c0_11 = arith.constant 0 : index
    %c0_12 = arith.constant 0 : index
    %c0_13 = arith.constant 0 : index
    %7 = vector.load %arg5[%c0_11, %c0_12, %c0_13] : memref<2x4x1xf32, #tpu.memory_space<vmem>>, vector<1x4x1xf32>
    %8 = vector.shape_cast %7 : vector<1x4x1xf32> to vector<4x1xf32>
    %c0_14 = arith.constant 0 : index
    %c0_15 = arith.constant 0 : index
    %c0_16 = arith.constant 0 : index
    %9 = vector.load %arg6[%c0_14, %c0_15, %c0_16] : memref<2x128x256xbf16, #tpu.memory_space<vmem>>, vector<1x128x256xbf16>
    %10 = vector.shape_cast %9 : vector<1x128x256xbf16> to vector<128x256xbf16>
    %c0_17 = arith.constant 0 : index
    %c0_18 = arith.constant 0 : index
    %c0_19 = arith.constant 0 : index
    %11 = vector.load %arg7[%c0_17, %c0_18, %c0_19] : memref<2x1x256xf32, #tpu.memory_space<vmem>>, vector<1x1x256xf32>
    %12 = vector.shape_cast %11 : vector<1x1x256xf32> to vector<1x256xf32>
    %c0_20 = arith.constant 0 : index
    %c0_21 = arith.constant 0 : index
    %c0_22 = arith.constant 0 : index
    %13 = vector.load %arg8[%c0_20, %c0_21, %c0_22] : memref<2x256x128xbf16, #tpu.memory_space<vmem>>, vector<1x256x128xbf16>
    %14 = vector.shape_cast %13 : vector<1x256x128xbf16> to vector<256x128xbf16>
    %c0_23 = arith.constant 0 : index
    %c0_24 = arith.constant 0 : index
    %c0_25 = arith.constant 0 : index
    %15 = vector.load %arg9[%c0_23, %c0_24, %c0_25] : memref<2x1x128xf32, #tpu.memory_space<vmem>>, vector<1x1x128xf32>
    %16 = vector.shape_cast %15 : vector<1x1x128xf32> to vector<1x128xf32>
    %cst = arith.constant dense<0.000000e+00> : vector<1x8xf32>
    %17 = vector.multi_reduction <add>, %0, %cst [2] : vector<1x8x128xf32> to vector<1x8xf32>
    %cst_26 = arith.constant 1.280000e+02 : f32
    %18 = vector.broadcast %cst_26 : f32 to vector<1x8xf32>
    %19 = arith.divf %17, %18 : vector<1x8xf32>
    %cst_27 = arith.constant dense<0.000000e+00> : vector<1x4xf32>
    %20 = tpu.matmul %19, %2, %cst_27 {dimension_numbers = #tpu.dot_dimension_numbers<[1], [0], [0], [1], [0, 0, 1, 1], [], []>} : vector<1x8xf32>, vector<8x4xf32>, vector<1x4xf32> -> vector<1x4xf32>
    %21 = arith.addf %20, %4 : vector<1x4xf32>
    %cst_28 = arith.constant dense<0xFF800000> : vector<1xf32>
    %22 = vector.multi_reduction <maximumf>, %21, %cst_28 [1] : vector<1x4xf32> to vector<1xf32>
    %23 = vector.shape_cast %22 : vector<1xf32> to vector<1x1xf32>
    %24 = vector.broadcast %23 : vector<1x1xf32> to vector<1x4xf32>
    %25 = arith.subf %21, %24 : vector<1x4xf32>
    %26 = math.exp %25 : vector<1x4xf32>
    %cst_29 = arith.constant dense<0.000000e+00> : vector<1xf32>
    %27 = vector.multi_reduction <add>, %26, %cst_29 [1] : vector<1x4xf32> to vector<1xf32>
    %28 = vector.shape_cast %27 : vector<1xf32> to vector<1x1xf32>
    %29 = vector.broadcast %28 : vector<1x1xf32> to vector<1x4xf32>
    %30 = arith.divf %26, %29 : vector<1x4xf32>
    %cst_30 = arith.constant dense<0.000000e+00> : vector<1x8xf32>
    %31 = tpu.matmul %30, %6, %cst_30 {dimension_numbers = #tpu.dot_dimension_numbers<[1], [0], [0], [1], [0, 0, 1, 1], [], []>} : vector<1x4xf32>, vector<4x8xf32>, vector<1x8xf32> -> vector<1x8xf32>
    %cst_31 = arith.constant dense<0.000000e+00> : vector<1x1xf32>
    %32 = tpu.matmul %30, %8, %cst_31 {dimension_numbers = #tpu.dot_dimension_numbers<[1], [0], [0], [1], [0, 0, 1, 1], [], []>} : vector<1x4xf32>, vector<4x1xf32>, vector<1x1xf32> -> vector<1x1xf32>
    %33 = vector.shape_cast %31 : vector<1x8xf32> to vector<1x8x1xf32>
    %34 = vector.broadcast %33 : vector<1x8x1xf32> to vector<1x8x128xf32>
    %35 = arith.mulf %34, %0 : vector<1x8x128xf32>
    %cst_32 = arith.constant dense<0.000000e+00> : vector<1x128xf32>
    %36 = vector.multi_reduction <add>, %35, %cst_32 [1] : vector<1x8x128xf32> to vector<1x128xf32>
    %37 = vector.broadcast %32 : vector<1x1xf32> to vector<1x128xf32>
    %38 = arith.addf %36, %37 : vector<1x128xf32>
    %39 = arith.negf %38 : vector<1x128xf32>
    %40 = math.exp %39 : vector<1x128xf32>
    %cst_33 = arith.constant 1.000000e+00 : f32
    %41 = vector.broadcast %cst_33 : f32 to vector<1x128xf32>
    %42 = arith.addf %41, %40 : vector<1x128xf32>
    %43 = arith.divf %41, %42 : vector<1x128xf32>
    %44 = vector.shape_cast %43 : vector<1x128xf32> to vector<1x1x128xf32>
    %45 = vector.broadcast %44 : vector<1x1x128xf32> to vector<1x8x128xf32>
    %46 = arith.mulf %45, %0 : vector<1x8x128xf32>
    %47 = arith.addf %46, %0 : vector<1x8x128xf32>
    %48 = vector.shape_cast %47 : vector<1x8x128xf32> to vector<8x128xf32>
    %49 = arith.truncf %48 : vector<8x128xf32> to vector<8x128xbf16>
    %cst_34 = arith.constant dense<0.000000e+00> : vector<8x256xf32>
    %50 = tpu.matmul %49, %10, %cst_34 {dimension_numbers = #tpu.dot_dimension_numbers<[1], [0], [0], [1], [0, 0, 1, 1], [], []>} : vector<8x128xbf16>, vector<128x256xbf16>, vector<8x256xf32> -> vector<8x256xf32>
    %51 = vector.broadcast %12 : vector<1x256xf32> to vector<8x256xf32>
    %52 = arith.addf %50, %51 : vector<8x256xf32>
    %cst_35 = arith.constant 5.000000e-01 : f32
    %53 = vector.broadcast %cst_35 : f32 to vector<8x256xf32>
    %54 = arith.mulf %53, %52 : vector<8x256xf32>
    %cst_36 = arith.constant 0.707106769 : f32
    %55 = vector.broadcast %cst_36 : f32 to vector<8x256xf32>
    %56 = arith.mulf %52, %55 : vector<8x256xf32>
    %57 = math.erf %56 : vector<8x256xf32>
    %cst_37 = arith.constant 1.000000e+00 : f32
    %58 = vector.broadcast %cst_37 : f32 to vector<8x256xf32>
    %59 = arith.addf %58, %57 : vector<8x256xf32>
    %60 = arith.mulf %54, %59 : vector<8x256xf32>
    %61 = arith.truncf %60 : vector<8x256xf32> to vector<8x256xbf16>
    %cst_38 = arith.constant dense<0.000000e+00> : vector<8x128xf32>
    %62 = tpu.matmul %61, %14, %cst_38 {dimension_numbers = #tpu.dot_dimension_numbers<[1], [0], [0], [1], [0, 0, 1, 1], [], []>} : vector<8x256xbf16>, vector<256x128xbf16>, vector<8x128xf32> -> vector<8x128xf32>
    %63 = vector.broadcast %16 : vector<1x128xf32> to vector<8x128xf32>
    %64 = arith.addf %62, %63 : vector<8x128xf32>
    %65 = vector.shape_cast %64 : vector<8x128xf32> to vector<1x8x128xf32>
    %66 = arith.addf %65, %47 : vector<1x8x128xf32>
    %c1 = arith.constant 1 : index
    %c0_39 = arith.constant 0 : index
    %c0_40 = arith.constant 0 : index
    %67 = vector.load %arg2[%c1, %c0_39, %c0_40] : memref<2x8x4xf32, #tpu.memory_space<vmem>>, vector<1x8x4xf32>
    %68 = vector.shape_cast %67 : vector<1x8x4xf32> to vector<8x4xf32>
    %c1_41 = arith.constant 1 : index
    %c0_42 = arith.constant 0 : index
    %c0_43 = arith.constant 0 : index
    %69 = vector.load %arg3[%c1_41, %c0_42, %c0_43] : memref<2x1x4xf32, #tpu.memory_space<vmem>>, vector<1x1x4xf32>
    %70 = vector.shape_cast %69 : vector<1x1x4xf32> to vector<1x4xf32>
    %c1_44 = arith.constant 1 : index
    %c0_45 = arith.constant 0 : index
    %c0_46 = arith.constant 0 : index
    %71 = vector.load %arg4[%c1_44, %c0_45, %c0_46] : memref<2x4x8xf32, #tpu.memory_space<vmem>>, vector<1x4x8xf32>
    %72 = vector.shape_cast %71 : vector<1x4x8xf32> to vector<4x8xf32>
    %c1_47 = arith.constant 1 : index
    %c0_48 = arith.constant 0 : index
    %c0_49 = arith.constant 0 : index
    %73 = vector.load %arg5[%c1_47, %c0_48, %c0_49] : memref<2x4x1xf32, #tpu.memory_space<vmem>>, vector<1x4x1xf32>
    %74 = vector.shape_cast %73 : vector<1x4x1xf32> to vector<4x1xf32>
    %c1_50 = arith.constant 1 : index
    %c0_51 = arith.constant 0 : index
    %c0_52 = arith.constant 0 : index
    %75 = vector.load %arg6[%c1_50, %c0_51, %c0_52] : memref<2x128x256xbf16, #tpu.memory_space<vmem>>, vector<1x128x256xbf16>
    %76 = vector.shape_cast %75 : vector<1x128x256xbf16> to vector<128x256xbf16>
    %c1_53 = arith.constant 1 : index
    %c0_54 = arith.constant 0 : index
    %c0_55 = arith.constant 0 : index
    %77 = vector.load %arg7[%c1_53, %c0_54, %c0_55] : memref<2x1x256xf32, #tpu.memory_space<vmem>>, vector<1x1x256xf32>
    %78 = vector.shape_cast %77 : vector<1x1x256xf32> to vector<1x256xf32>
    %c1_56 = arith.constant 1 : index
    %c0_57 = arith.constant 0 : index
    %c0_58 = arith.constant 0 : index
    %79 = vector.load %arg8[%c1_56, %c0_57, %c0_58] : memref<2x256x128xbf16, #tpu.memory_space<vmem>>, vector<1x256x128xbf16>
    %80 = vector.shape_cast %79 : vector<1x256x128xbf16> to vector<256x128xbf16>
    %c1_59 = arith.constant 1 : index
    %c0_60 = arith.constant 0 : index
    %c0_61 = arith.constant 0 : index
    %81 = vector.load %arg9[%c1_59, %c0_60, %c0_61] : memref<2x1x128xf32, #tpu.memory_space<vmem>>, vector<1x1x128xf32>
    %82 = vector.shape_cast %81 : vector<1x1x128xf32> to vector<1x128xf32>
    %cst_62 = arith.constant dense<0.000000e+00> : vector<1x8xf32>
    %83 = vector.multi_reduction <add>, %66, %cst_62 [2] : vector<1x8x128xf32> to vector<1x8xf32>
    %cst_63 = arith.constant 1.280000e+02 : f32
    %84 = vector.broadcast %cst_63 : f32 to vector<1x8xf32>
    %85 = arith.divf %83, %84 : vector<1x8xf32>
    %cst_64 = arith.constant dense<0.000000e+00> : vector<1x4xf32>
    %86 = tpu.matmul %85, %68, %cst_64 {dimension_numbers = #tpu.dot_dimension_numbers<[1], [0], [0], [1], [0, 0, 1, 1], [], []>} : vector<1x8xf32>, vector<8x4xf32>, vector<1x4xf32> -> vector<1x4xf32>
    %87 = arith.addf %86, %70 : vector<1x4xf32>
    %cst_65 = arith.constant dense<0xFF800000> : vector<1xf32>
    %88 = vector.multi_reduction <maximumf>, %87, %cst_65 [1] : vector<1x4xf32> to vector<1xf32>
    %89 = vector.shape_cast %88 : vector<1xf32> to vector<1x1xf32>
    %90 = vector.broadcast %89 : vector<1x1xf32> to vector<1x4xf32>
    %91 = arith.subf %87, %90 : vector<1x4xf32>
    %92 = math.exp %91 : vector<1x4xf32>
    %cst_66 = arith.constant dense<0.000000e+00> : vector<1xf32>
    %93 = vector.multi_reduction <add>, %92, %cst_66 [1] : vector<1x4xf32> to vector<1xf32>
    %94 = vector.shape_cast %93 : vector<1xf32> to vector<1x1xf32>
    %95 = vector.broadcast %94 : vector<1x1xf32> to vector<1x4xf32>
    %96 = arith.divf %92, %95 : vector<1x4xf32>
    %cst_67 = arith.constant dense<0.000000e+00> : vector<1x8xf32>
    %97 = tpu.matmul %96, %72, %cst_67 {dimension_numbers = #tpu.dot_dimension_numbers<[1], [0], [0], [1], [0, 0, 1, 1], [], []>} : vector<1x4xf32>, vector<4x8xf32>, vector<1x8xf32> -> vector<1x8xf32>
    %cst_68 = arith.constant dense<0.000000e+00> : vector<1x1xf32>
    %98 = tpu.matmul %96, %74, %cst_68 {dimension_numbers = #tpu.dot_dimension_numbers<[1], [0], [0], [1], [0, 0, 1, 1], [], []>} : vector<1x4xf32>, vector<4x1xf32>, vector<1x1xf32> -> vector<1x1xf32>
    %99 = vector.shape_cast %97 : vector<1x8xf32> to vector<1x8x1xf32>
    %100 = vector.broadcast %99 : vector<1x8x1xf32> to vector<1x8x128xf32>
    %101 = arith.mulf %100, %66 : vector<1x8x128xf32>
    %cst_69 = arith.constant dense<0.000000e+00> : vector<1x128xf32>
    %102 = vector.multi_reduction <add>, %101, %cst_69 [1] : vector<1x8x128xf32> to vector<1x128xf32>
    %103 = vector.broadcast %98 : vector<1x1xf32> to vector<1x128xf32>
    %104 = arith.addf %102, %103 : vector<1x128xf32>
    %105 = arith.negf %104 : vector<1x128xf32>
    %106 = math.exp %105 : vector<1x128xf32>
    %cst_70 = arith.constant 1.000000e+00 : f32
    %107 = vector.broadcast %cst_70 : f32 to vector<1x128xf32>
    %108 = arith.addf %107, %106 : vector<1x128xf32>
    %109 = arith.divf %107, %108 : vector<1x128xf32>
    %110 = vector.shape_cast %109 : vector<1x128xf32> to vector<1x1x128xf32>
    %111 = vector.broadcast %110 : vector<1x1x128xf32> to vector<1x8x128xf32>
    %112 = arith.mulf %111, %66 : vector<1x8x128xf32>
    %113 = arith.addf %112, %66 : vector<1x8x128xf32>
    %114 = vector.shape_cast %113 : vector<1x8x128xf32> to vector<8x128xf32>
    %115 = arith.truncf %114 : vector<8x128xf32> to vector<8x128xbf16>
    %cst_71 = arith.constant dense<0.000000e+00> : vector<8x256xf32>
    %116 = tpu.matmul %115, %76, %cst_71 {dimension_numbers = #tpu.dot_dimension_numbers<[1], [0], [0], [1], [0, 0, 1, 1], [], []>} : vector<8x128xbf16>, vector<128x256xbf16>, vector<8x256xf32> -> vector<8x256xf32>
    %117 = vector.broadcast %78 : vector<1x256xf32> to vector<8x256xf32>
    %118 = arith.addf %116, %117 : vector<8x256xf32>
    %cst_72 = arith.constant 5.000000e-01 : f32
    %119 = vector.broadcast %cst_72 : f32 to vector<8x256xf32>
    %120 = arith.mulf %119, %118 : vector<8x256xf32>
    %cst_73 = arith.constant 0.707106769 : f32
    %121 = vector.broadcast %cst_73 : f32 to vector<8x256xf32>
    %122 = arith.mulf %118, %121 : vector<8x256xf32>
    %123 = math.erf %122 : vector<8x256xf32>
    %cst_74 = arith.constant 1.000000e+00 : f32
    %124 = vector.broadcast %cst_74 : f32 to vector<8x256xf32>
    %125 = arith.addf %124, %123 : vector<8x256xf32>
    %126 = arith.mulf %120, %125 : vector<8x256xf32>
    %127 = arith.truncf %126 : vector<8x256xf32> to vector<8x256xbf16>
    %cst_75 = arith.constant dense<0.000000e+00> : vector<8x128xf32>
    %128 = tpu.matmul %127, %80, %cst_75 {dimension_numbers = #tpu.dot_dimension_numbers<[1], [0], [0], [1], [0, 0, 1, 1], [], []>} : vector<8x256xbf16>, vector<256x128xbf16>, vector<8x128xf32> -> vector<8x128xf32>
    %129 = vector.broadcast %82 : vector<1x128xf32> to vector<8x128xf32>
    %130 = arith.addf %128, %129 : vector<8x128xf32>
    %131 = vector.shape_cast %130 : vector<8x128xf32> to vector<1x8x128xf32>
    %132 = arith.addf %131, %113 : vector<1x8x128xf32>
    %c0_76 = arith.constant 0 : index
    %c0_77 = arith.constant 0 : index
    %c0_78 = arith.constant 0 : index
    %133 = vector.load %arg10[%c0_76, %c0_77, %c0_78] : memref<1x8x128xf32, #tpu.memory_space<vmem>>, vector<1x8x128xf32>
    tpu.vector_store %arg10[%c0_76, %c0_77, %c0_78], %132 {strides = array<i32>} : memref<1x8x128xf32, #tpu.memory_space<vmem>>, vector<1x8x128xf32>,
    return
  }
  func.func @transform_0(%arg0: i32) -> (i32, i32, i32) {
    %c0_i32 = arith.constant 0 : i32
    %c0_i32_0 = arith.constant 0 : i32
    %c0_i32_1 = arith.constant 0 : i32
    return %arg0, %c0_i32, %c0_i32_0 : i32, i32, i32
  }
  func.func @transform_1(%arg0: i32) -> (i32, i32, i32) {
    %c0_i32 = arith.constant 0 : i32
    %c0_i32_0 = arith.constant 0 : i32
    %c0_i32_1 = arith.constant 0 : i32
    %c0_i32_2 = arith.constant 0 : i32
    return %c0_i32, %c0_i32_0, %c0_i32_1 : i32, i32, i32
  }
  func.func @transform_2(%arg0: i32) -> (i32, i32, i32) {
    %c0_i32 = arith.constant 0 : i32
    %c0_i32_0 = arith.constant 0 : i32
    %c0_i32_1 = arith.constant 0 : i32
    %c0_i32_2 = arith.constant 0 : i32
    return %c0_i32, %c0_i32_0, %c0_i32_1 : i32, i32, i32
  }
  func.func @transform_3(%arg0: i32) -> (i32, i32, i32) {
    %c0_i32 = arith.constant 0 : i32
    %c0_i32_0 = arith.constant 0 : i32
    %c0_i32_1 = arith.constant 0 : i32
    %c0_i32_2 = arith.constant 0 : i32
    return %c0_i32, %c0_i32_0, %c0_i32_1 : i32, i32, i32
  }
  func.func @transform_4(%arg0: i32) -> (i32, i32, i32) {
    %c0_i32 = arith.constant 0 : i32
    %c0_i32_0 = arith.constant 0 : i32
    %c0_i32_1 = arith.constant 0 : i32
    %c0_i32_2 = arith.constant 0 : i32
    return %c0_i32, %c0_i32_0, %c0_i32_1 : i32, i32, i32
  }
  func.func @transform_5(%arg0: i32) -> (i32, i32, i32) {
    %c0_i32 = arith.constant 0 : i32
    %c0_i32_0 = arith.constant 0 : i32
    %c0_i32_1 = arith.constant 0 : i32
    %c0_i32_2 = arith.constant 0 : i32
    return %c0_i32, %c0_i32_0, %c0_i32_1 : i32, i32, i32
  }
  func.func @transform_6(%arg0: i32) -> (i32, i32, i32) {
    %c0_i32 = arith.constant 0 : i32
    %c0_i32_0 = arith.constant 0 : i32
    %c0_i32_1 = arith.constant 0 : i32
    %c0_i32_2 = arith.constant 0 : i32
    return %c0_i32, %c0_i32_0, %c0_i32_1 : i32, i32, i32
  }
  func.func @transform_7(%arg0: i32) -> (i32, i32, i32) {
    %c0_i32 = arith.constant 0 : i32
    %c0_i32_0 = arith.constant 0 : i32
    %c0_i32_1 = arith.constant 0 : i32
    %c0_i32_2 = arith.constant 0 : i32
    return %c0_i32, %c0_i32_0, %c0_i32_1 : i32, i32, i32
  }
  func.func @transform_8(%arg0: i32) -> (i32, i32, i32) {
    %c0_i32 = arith.constant 0 : i32
    %c0_i32_0 = arith.constant 0 : i32
    %c0_i32_1 = arith.constant 0 : i32
    %c0_i32_2 = arith.constant 0 : i32
    return %c0_i32, %c0_i32_0, %c0_i32_1 : i32, i32, i32
  }
  func.func @transform_9(%arg0: i32) -> (i32, i32, i32) {
    %c0_i32 = arith.constant 0 : i32
    %c0_i32_0 = arith.constant 0 : i32
    %c0_i32_1 = arith.constant 0 : i32
    return %arg0, %c0_i32, %c0_i32_0 : i32, i32, i32
  }
}

module attributes {stable_mosaic.version = 11 : i64} {
  func.func @kernel(%arg0: i32, %arg1: memref<1x8x128xf32, #tpu.memory_space<vmem>>, %arg2: memref<2x8x4xf32, #tpu.memory_space<vmem>>, %arg3: memref<2x1x4xf32, #tpu.memory_space<vmem>>, %arg4: memref<2x4x8xf32, #tpu.memory_space<vmem>>, %arg5: memref<2x4x1xf32, #tpu.memory_space<vmem>>, %arg6: memref<2x128x256xbf16, #tpu.memory_space<vmem>>, %arg7: memref<2x1x256xf32, #tpu.memory_space<vmem>>, %arg8: memref<2x256x128xbf16, #tpu.memory_space<vmem>>, %arg9: memref<2x1x128xf32, #tpu.memory_space<vmem>>, %arg10: memref<1x8x128xf32, #tpu.memory_space<vmem>>) attributes {dimension_semantics = [#tpu.dimension_semantics<parallel>], iteration_bounds = array<i64: 2>, scalar_prefetch = 0 : i64, scratch_operands = 0 : i64, tpu.core_type = #tpu.core_type<tc>, window_params = [{transform_indices = @transform_0, window_bounds = array<i64: 1, 8, 128>}, {pipeline_mode = #tpu.pipeline_mode<synchronous>, transform_indices = @transform_1, window_bounds = array<i64: 2, 8, 4>}, {pipeline_mode = #tpu.pipeline_mode<synchronous>, transform_indices = @transform_2, window_bounds = array<i64: 2, 1, 4>}, {pipeline_mode = #tpu.pipeline_mode<synchronous>, transform_indices = @transform_3, window_bounds = array<i64: 2, 4, 8>}, {pipeline_mode = #tpu.pipeline_mode<synchronous>, transform_indices = @transform_4, window_bounds = array<i64: 2, 4, 1>}, {pipeline_mode = #tpu.pipeline_mode<synchronous>, transform_indices = @transform_5, window_bounds = array<i64: 2, 128, 256>}, {pipeline_mode = #tpu.pipeline_mode<synchronous>, transform_indices = @transform_6, window_bounds = array<i64: 2, 1, 256>}, {pipeline_mode = #tpu.pipeline_mode<synchronous>, transform_indices = @transform_7, window_bounds = array<i64: 2, 256, 128>}, {pipeline_mode = #tpu.pipeline_mode<synchronous>, transform_indices = @transform_8, window_bounds = array<i64: 2, 1, 128>}, {transform_indices = @transform_9, window_bounds = array<i64: 1, 8, 128>}]} {
    %c0 = arith.constant 0 : index
    %c0_0 = arith.constant 0 : index
    %c0_1 = arith.constant 0 : index
    %0 = vector.load %arg1[%c0, %c0_0, %c0_1] : memref<1x8x128xf32, #tpu.memory_space<vmem>>, vector<1x8x128xf32>
    %c0_2 = arith.constant 0 : index
    %c0_3 = arith.constant 0 : index
    %c0_4 = arith.constant 0 : index
    %1 = vector.load %arg2[%c0_2, %c0_3, %c0_4] : memref<2x8x4xf32, #tpu.memory_space<vmem>>, vector<1x8x4xf32>
    %2 = vector.shape_cast %1 : vector<1x8x4xf32> to vector<8x4xf32>
    %c0_5 = arith.constant 0 : index
    %c0_6 = arith.constant 0 : index
    %c0_7 = arith.constant 0 : index
    %3 = vector.load %arg3[%c0_5, %c0_6, %c0_7] : memref<2x1x4xf32, #tpu.memory_space<vmem>>, vector<1x1x4xf32>
    %4 = vector.shape_cast %3 : vector<1x1x4xf32> to vector<1x4xf32>
    %c0_8 = arith.constant 0 : index
    %c0_9 = arith.constant 0 : index
    %c0_10 = arith.constant 0 : index
    %5 = vector.load %arg4[%c0_8, %c0_9, %c0_10] : memref<2x4x8xf32, #tpu.memory_space<vmem>>, vector<1x4x8xf32>
    %6 = vector.shape_cast %5 : vector<1x4x8xf32> to vector<4x8xf32>
    %c0_11 = arith.constant 0 : index
    %c0_12 = arith.constant 0 : index
    %c0_13 = arith.constant 0 : index
    %7 = vector.load %arg5[%c0_11, %c0_12, %c0_13] : memref<2x4x1xf32, #tpu.memory_space<vmem>>, vector<1x4x1xf32>
    %8 = vector.shape_cast %7 : vector<1x4x1xf32> to vector<4x1xf32>
    %c0_14 = arith.constant 0 : index
    %c0_15 = arith.constant 0 : index
    %c0_16 = arith.constant 0 : index
    %9 = vector.load %arg6[%c0_14, %c0_15, %c0_16] : memref<2x128x256xbf16, #tpu.memory_space<vmem>>, vector<1x128x256xbf16>
    %10 = vector.shape_cast %9 : vector<1x128x256xbf16> to vector<128x256xbf16>
    %c0_17 = arith.constant 0 : index
    %c0_18 = arith.constant 0 : index
    %c0_19 = arith.constant 0 : index
    %11 = vector.load %arg7[%c0_17, %c0_18, %c0_19] : memref<2x1x256xf32, #tpu.memory_space<vmem>>, vector<1x1x256xf32>
    %12 = vector.shape_cast %11 : vector<1x1x256xf32> to vector<1x256xf32>
    %c0_20 = arith.constant 0 : index
    %c0_21 = arith.constant 0 : index
    %c0_22 = arith.constant 0 : index
    %13 = vector.load %arg8[%c0_20, %c0_21, %c0_22] : memref<2x256x128xbf16, #tpu.memory_space<vmem>>, vector<1x256x128xbf16>
    %14 = vector.shape_cast %13 : vector<1x256x128xbf16> to vector<256x128xbf16>
    %c0_23 = arith.constant 0 : index
    %c0_24 = arith.constant 0 : index
    %c0_25 = arith.constant 0 : index
    %15 = vector.load %arg9[%c0_23, %c0_24, %c0_25] : memref<2x1x128xf32, #tpu.memory_space<vmem>>, vector<1x1x128xf32>
    %16 = vector.shape_cast %15 : vector<1x1x128xf32> to vector<1x128xf32>
    %cst = arith.constant dense<0.000000e+00> : vector<1x8xf32>
    %17 = vector.multi_reduction <add>, %0, %cst [2] : vector<1x8x128xf32> to vector<1x8xf32>
    %cst_26 = arith.constant 1.280000e+02 : f32
    %18 = vector.broadcast %cst_26 : f32 to vector<1x8xf32>
    %19 = arith.divf %17, %18 : vector<1x8xf32>
    %cst_27 = arith.constant dense<0.000000e+00> : vector<1x4xf32>
    %20 = tpu.matmul %19, %2, %cst_27 {dimension_numbers = #tpu.dot_dimension_numbers<[1], [0], [0], [1], [0, 0, 1, 1], [], []>} : vector<1x8xf32>, vector<8x4xf32>, vector<1x4xf32> -> vector<1x4xf32>
    %21 = arith.addf %20, %4 : vector<1x4xf32>
    %cst_28 = arith.constant dense<0xFF800000> : vector<1xf32>
    %22 = vector.multi_reduction <maximumf>, %21, %cst_28 [1] : vector<1x4xf32> to vector<1xf32>
    %23 = vector.shape_cast %22 : vector<1xf32> to vector<1x1xf32>
    %24 = vector.broadcast %23 : vector<1x1xf32> to vector<1x4xf32>
    %25 = arith.subf %21, %24 : vector<1x4xf32>
    %26 = math.exp %25 : vector<1x4xf32>
    %cst_29 = arith.constant dense<0.000000e+00> : vector<1xf32>
    %27 = vector.multi_reduction <add>, %26, %cst_29 [1] : vector<1x4xf32> to vector<1xf32>
    %28 = vector.shape_cast %27 : vector<1xf32> to vector<1x1xf32>
    %29 = vector.broadcast %28 : vector<1x1xf32> to vector<1x4xf32>
    %30 = arith.divf %26, %29 : vector<1x4xf32>
    %cst_30 = arith.constant dense<0.000000e+00> : vector<1x8xf32>
    %31 = tpu.matmul %30, %6, %cst_30 {dimension_numbers = #tpu.dot_dimension_numbers<[1], [0], [0], [1], [0, 0, 1, 1], [], []>} : vector<1x4xf32>, vector<4x8xf32>, vector<1x8xf32> -> vector<1x8xf32>
    %cst_31 = arith.constant dense<0.000000e+00> : vector<1x1xf32>
    %32 = tpu.matmul %30, %8, %cst_31 {dimension_numbers = #tpu.dot_dimension_numbers<[1], [0], [0], [1], [0, 0, 1, 1], [], []>} : vector<1x4xf32>, vector<4x1xf32>, vector<1x1xf32> -> vector<1x1xf32>
    %33 = vector.shape_cast %31 : vector<1x8xf32> to vector<1x8x1xf32>
    %34 = vector.broadcast %33 : vector<1x8x1xf32> to vector<1x8x128xf32>
    %35 = arith.mulf %34, %0 : vector<1x8x128xf32>
    %cst_32 = arith.constant dense<0.000000e+00> : vector<1x128xf32>
    %36 = vector.multi_reduction <add>, %35, %cst_32 [1] : vector<1x8x128xf32> to vector<1x128xf32>
    %37 = vector.broadcast %32 : vector<1x1xf32> to vector<1x128xf32>
    %38 = arith.addf %36, %37 : vector<1x128xf32>
    %39 = arith.negf %38 : vector<1x128xf32>
    %40 = math.exp %39 : vector<1x128xf32>
    %cst_33 = arith.constant 1.000000e+00 : f32
    %41 = vector.broadcast %cst_33 : f32 to vector<1x128xf32>
    %42 = arith.addf %41, %40 : vector<1x128xf32>
    %43 = arith.divf %41, %42 : vector<1x128xf32>
    %44 = vector.shape_cast %43 : vector<1x128xf32> to vector<1x1x128xf32>
    %45 = vector.broadcast %44 : vector<1x1x128xf32> to vector<1x8x128xf32>
    %46 = arith.mulf %45, %0 : vector<1x8x128xf32>
    %47 = arith.addf %46, %0 : vector<1x8x128xf32>
    %48 = vector.shape_cast %47 : vector<1x8x128xf32> to vector<8x128xf32>
    %49 = arith.truncf %48 : vector<8x128xf32> to vector<8x128xbf16>
    %cst_34 = arith.constant dense<0.000000e+00> : vector<8x256xf32>
    %50 = tpu.matmul %49, %10, %cst_34 {dimension_numbers = #tpu.dot_dimension_numbers<[1], [0], [0], [1], [0, 0, 1, 1], [], []>} : vector<8x128xbf16>, vector<128x256xbf16>, vector<8x256xf32> -> vector<8x256xf32>
    %51 = vector.broadcast %12 : vector<1x256xf32> to vector<8x256xf32>
    %52 = arith.addf %50, %51 : vector<8x256xf32>
    %cst_35 = arith.constant 5.000000e-01 : f32
    %53 = vector.broadcast %cst_35 : f32 to vector<8x256xf32>
    %54 = arith.mulf %53, %52 : vector<8x256xf32>
    %cst_36 = arith.constant 0.707106769 : f32
    %55 = vector.broadcast %cst_36 : f32 to vector<8x256xf32>
    %56 = arith.mulf %52, %55 : vector<8x256xf32>
    %57 = math.erf %56 : vector<8x256xf32>
    %cst_37 = arith.constant 1.000000e+00 : f32
    %58 = vector.broadcast %cst_37 : f32 to vector<8x256xf32>
    %59 = arith.addf %58, %57 : vector<8x256xf32>
    %60 = arith.mulf %54, %59 : vector<8x256xf32>
    %61 = arith.truncf %60 : vector<8x256xf32> to vector<8x256xbf16>
    %cst_38 = arith.constant dense<0.000000e+00> : vector<8x128xf32>
    %62 = tpu.matmul %61, %14, %cst_38 {dimension_numbers = #tpu.dot_dimension_numbers<[1], [0], [0], [1], [0, 0, 1, 1], [], []>} : vector<8x256xbf16>, vector<256x128xbf16>, vector<8x128xf32> -> vector<8x128xf32>
    %63 = vector.broadcast %16 : vector<1x128xf32> to vector<8x128xf32>
    %64 = arith.addf %62, %63 : vector<8x128xf32>
    %65 = vector.shape_cast %64 : vector<8x128xf32> to vector<1x8x128xf32>
    %66 = arith.addf %65, %47 : vector<1x8x128xf32>
    %c1 = arith.constant 1 : index
    %c0_39 = arith.constant 0 : index
    %c0_40 = arith.constant 0 : index
    %67 = vector.load %arg2[%c1, %c0_39, %c0_40] : memref<2x8x4xf32, #tpu.memory_space<vmem>>, vector<1x8x4xf32>
    %68 = vector.shape_cast %67 : vector<1x8x4xf32> to vector<8x4xf32>
    %c1_41 = arith.constant 1 : index
    %c0_42 = arith.constant 0 : index
    %c0_43 = arith.constant 0 : index
    %69 = vector.load %arg3[%c1_41, %c0_42, %c0_43] : memref<2x1x4xf32, #tpu.memory_space<vmem>>, vector<1x1x4xf32>
    %70 = vector.shape_cast %69 : vector<1x1x4xf32> to vector<1x4xf32>
    %c1_44 = arith.constant 1 : index
    %c0_45 = arith.constant 0 : index
    %c0_46 = arith.constant 0 : index
    %71 = vector.load %arg4[%c1_44, %c0_45, %c0_46] : memref<2x4x8xf32, #tpu.memory_space<vmem>>, vector<1x4x8xf32>
    %72 = vector.shape_cast %71 : vector<1x4x8xf32> to vector<4x8xf32>
    %c1_47 = arith.constant 1 : index
    %c0_48 = arith.constant 0 : index
    %c0_49 = arith.constant 0 : index
    %73 = vector.load %arg5[%c1_47, %c0_48, %c0_49] : memref<2x4x1xf32, #tpu.memory_space<vmem>>, vector<1x4x1xf32>
    %74 = vector.shape_cast %73 : vector<1x4x1xf32> to vector<4x1xf32>
    %c1_50 = arith.constant 1 : index
    %c0_51 = arith.constant 0 : index
    %c0_52 = arith.constant 0 : index
    %75 = vector.load %arg6[%c1_50, %c0_51, %c0_52] : memref<2x128x256xbf16, #tpu.memory_space<vmem>>, vector<1x128x256xbf16>
    %76 = vector.shape_cast %75 : vector<1x128x256xbf16> to vector<128x256xbf16>
    %c1_53 = arith.constant 1 : index
    %c0_54 = arith.constant 0 : index
    %c0_55 = arith.constant 0 : index
    %77 = vector.load %arg7[%c1_53, %c0_54, %c0_55] : memref<2x1x256xf32, #tpu.memory_space<vmem>>, vector<1x1x256xf32>
    %78 = vector.shape_cast %77 : vector<1x1x256xf32> to vector<1x256xf32>
    %c1_56 = arith.constant 1 : index
    %c0_57 = arith.constant 0 : index
    %c0_58 = arith.constant 0 : index
    %79 = vector.load %arg8[%c1_56, %c0_57, %c0_58] : memref<2x256x128xbf16, #tpu.memory_space<vmem>>, vector<1x256x128xbf16>
    %80 = vector.shape_cast %79 : vector<1x256x128xbf16> to vector<256x128xbf16>
    %c1_59 = arith.constant 1 : index
    %c0_60 = arith.constant 0 : index
    %c0_61 = arith.constant 0 : index
    %81 = vector.load %arg9[%c1_59, %c0_60, %c0_61] : memref<2x1x128xf32, #tpu.memory_space<vmem>>, vector<1x1x128xf32>
    %82 = vector.shape_cast %81 : vector<1x1x128xf32> to vector<1x128xf32>
    %cst_62 = arith.constant dense<0.000000e+00> : vector<1x8xf32>
    %83 = vector.multi_reduction <add>, %66, %cst_62 [2] : vector<1x8x128xf32> to vector<1x8xf32>
    %cst_63 = arith.constant 1.280000e+02 : f32
    %84 = vector.broadcast %cst_63 : f32 to vector<1x8xf32>
    %85 = arith.divf %83, %84 : vector<1x8xf32>
    %cst_64 = arith.constant dense<0.000000e+00> : vector<1x4xf32>
    %86 = tpu.matmul %85, %68, %cst_64 {dimension_numbers = #tpu.dot_dimension_numbers<[1], [0], [0], [1], [0, 0, 1, 1], [], []>} : vector<1x8xf32>, vector<8x4xf32>, vector<1x4xf32> -> vector<1x4xf32>
    %87 = arith.addf %86, %70 : vector<1x4xf32>
    %cst_65 = arith.constant dense<0xFF800000> : vector<1xf32>
    %88 = vector.multi_reduction <maximumf>, %87, %cst_65 [1] : vector<1x4xf32> to vector<1xf32>
    %89 = vector.shape_cast %88 : vector<1xf32> to vector<1x1xf32>
    %90 = vector.broadcast %89 : vector<1x1xf32> to vector<1x4xf32>
    %91 = arith.subf %87, %90 : vector<1x4xf32>
    %92 = math.exp %91 : vector<1x4xf32>
    %cst_66 = arith.constant dense<0.000000e+00> : vector<1xf32>
    %93 = vector.multi_reduction <add>, %92, %cst_66 [1] : vector<1x4xf32> to vector<1xf32>
    %94 = vector.shape_cast %93 : vector<1xf32> to vector<1x1xf32>
    %95 = vector.broadcast %94 : vector<1x1xf32> to vector<1x4xf32>
    %96 = arith.divf %92, %95 : vector<1x4xf32>
    %cst_67 = arith.constant dense<0.000000e+00> : vector<1x8xf32>
    %97 = tpu.matmul %96, %72, %cst_67 {dimension_numbers = #tpu.dot_dimension_numbers<[1], [0], [0], [1], [0, 0, 1, 1], [], []>} : vector<1x4xf32>, vector<4x8xf32>, vector<1x8xf32> -> vector<1x8xf32>
    %cst_68 = arith.constant dense<0.000000e+00> : vector<1x1xf32>
    %98 = tpu.matmul %96, %74, %cst_68 {dimension_numbers = #tpu.dot_dimension_numbers<[1], [0], [0], [1], [0, 0, 1, 1], [], []>} : vector<1x4xf32>, vector<4x1xf32>, vector<1x1xf32> -> vector<1x1xf32>
    %99 = vector.shape_cast %97 : vector<1x8xf32> to vector<1x8x1xf32>
    %100 = vector.broadcast %99 : vector<1x8x1xf32> to vector<1x8x128xf32>
    %101 = arith.mulf %100, %66 : vector<1x8x128xf32>
    %cst_69 = arith.constant dense<0.000000e+00> : vector<1x128xf32>
    %102 = vector.multi_reduction <add>, %101, %cst_69 [1] : vector<1x8x128xf32> to vector<1x128xf32>
    %103 = vector.broadcast %98 : vector<1x1xf32> to vector<1x128xf32>
    %104 = arith.addf %102, %103 : vector<1x128xf32>
    %105 = arith.negf %104 : vector<1x128xf32>
    %106 = math.exp %105 : vector<1x128xf32>
    %cst_70 = arith.constant 1.000000e+00 : f32
    %107 = vector.broadcast %cst_70 : f32 to vector<1x128xf32>
    %108 = arith.addf %107, %106 : vector<1x128xf32>
    %109 = arith.divf %107, %108 : vector<1x128xf32>
    %110 = vector.shape_cast %109 : vector<1x128xf32> to vector<1x1x128xf32>
    %111 = vector.broadcast %110 : vector<1x1x128xf32> to vector<1x8x128xf32>
    %112 = arith.mulf %111, %66 : vector<1x8x128xf32>
    %113 = arith.addf %112, %66 : vector<1x8x128xf32>
    %114 = vector.shape_cast %113 : vector<1x8x128xf32> to vector<8x128xf32>
    %115 = arith.truncf %114 : vector<8x128xf32> to vector<8x128xbf16>
    %cst_71 = arith.constant dense<0.000000e+00> : vector<8x256xf32>
    %116 = tpu.matmul %115, %76, %cst_71 {dimension_numbers = #tpu.dot_dimension_numbers<[1], [0], [0], [1], [0, 0, 1, 1], [], []>} : vector<8x128xbf16>, vector<128x256xbf16>, vector<8x256xf32> -> vector<8x256xf32>
    %117 = vector.broadcast %78 : vector<1x256xf32> to vector<8x256xf32>
    %118 = arith.addf %116, %117 : vector<8x256xf32>
    %cst_72 = arith.constant 5.000000e-01 : f32
    %119 = vector.broadcast %cst_72 : f32 to vector<8x256xf32>
    %120 = arith.mulf %119, %118 : vector<8x256xf32>
    %cst_73 = arith.constant 0.707106769 : f32
    %121 = vector.broadcast %cst_73 : f32 to vector<8x256xf32>
    %122 = arith.mulf %118, %121 : vector<8x256xf32>
    %123 = math.erf %122 : vector<8x256xf32>
    %cst_74 = arith.constant 1.000000e+00 : f32
    %124 = vector.broadcast %cst_74 : f32 to vector<8x256xf32>
    %125 = arith.addf %124, %123 : vector<8x256xf32>
    %126 = arith.mulf %120, %125 : vector<8x256xf32>
    %127 = arith.truncf %126 : vector<8x256xf32> to vector<8x256xbf16>
    %cst_75 = arith.constant dense<0.000000e+00> : vector<8x128xf32>
    %128 = tpu.matmul %127, %80, %cst_75 {dimension_numbers = #tpu.dot_dimension_numbers<[1], [0], [0], [1], [0, 0, 1, 1], [], []>} : vector<8x256xbf16>, vector<256x128xbf16>, vector<8x128xf32> -> vector<8x128xf32>
    %129 = vector.broadcast %82 : vector<1x128xf32> to vector<8x128xf32>
    %130 = arith.addf %128, %129 : vector<8x128xf32>
    %131 = vector.shape_cast %130 : vector<8x128xf32> to vector<1x8x128xf32>
    %132 = arith.addf %131, %113 : vector<1x8x128xf32>
    %c0_76 = arith.constant 0 : index
    %c0_77 = arith.constant 0 : index
    %c0_78 = arith.constant 0 : index
    %133 = vector.load %arg10[%c0_76, %c0_77, %c0_78] : memref<1x8x128xf32, #tpu.memory_space<vmem>>, vector<1x8x128xf32>
    tpu.vector_store %arg10[%c0_76, %c0_77, %c0_78], %132 {strides = array<i32>} : memref<1x8x128xf32, #tpu.memory_space<vmem>>, vector<1x8x128xf32>,
    return
  }
  func.func @transform_0(%arg0: i32) -> (i32, i32, i32) {
    %c0_i32 = arith.constant 0 : i32
    %c0_i32_0 = arith.constant 0 : i32
    %c0_i32_1 = arith.constant 0 : i32
    return %arg0, %c0_i32, %c0_i32_0 : i32, i32, i32
  }
  func.func @transform_1(%arg0: i32) -> (i32, i32, i32) {
    %c0_i32 = arith.constant 0 : i32
    %c0_i32_0 = arith.constant 0 : i32
    %c0_i32_1 = arith.constant 0 : i32
    %c0_i32_2 = arith.constant 0 : i32
    return %c0_i32, %c0_i32_0, %c0_i32_1 : i32, i32, i32
  }
  func.func @transform_2(%arg0: i32) -> (i32, i32, i32) {
    %c0_i32 = arith.constant 0 : i32
    %c0_i32_0 = arith.constant 0 : i32
    %c0_i32_1 = arith.constant 0 : i32
    %c0_i32_2 = arith.constant 0 : i32
    return %c0_i32, %c0_i32_0, %c0_i32_1 : i32, i32, i32
  }
  func.func @transform_3(%arg0: i32) -> (i32, i32, i32) {
    %c0_i32 = arith.constant 0 : i32
    %c0_i32_0 = arith.constant 0 : i32
    %c0_i32_1 = arith.constant 0 : i32
    %c0_i32_2 = arith.constant 0 : i32
    return %c0_i32, %c0_i32_0, %c0_i32_1 : i32, i32, i32
  }
  func.func @transform_4(%arg0: i32) -> (i32, i32, i32) {
    %c0_i32 = arith.constant 0 : i32
    %c0_i32_0 = arith.constant 0 : i32
    %c0_i32_1 = arith.constant 0 : i32
    %c0_i32_2 = arith.constant 0 : i32
    return %c0_i32, %c0_i32_0, %c0_i32_1 : i32, i32, i32
  }
  func.func @transform_5(%arg0: i32) -> (i32, i32, i32) {
    %c0_i32 = arith.constant 0 : i32
    %c0_i32_0 = arith.constant 0 : i32
    %c0_i32_1 = arith.constant 0 : i32
    %c0_i32_2 = arith.constant 0 : i32
    return %c0_i32, %c0_i32_0, %c0_i32_1 : i32, i32, i32
  }
  func.func @transform_6(%arg0: i32) -> (i32, i32, i32) {
    %c0_i32 = arith.constant 0 : i32
    %c0_i32_0 = arith.constant 0 : i32
    %c0_i32_1 = arith.constant 0 : i32
    %c0_i32_2 = arith.constant 0 : i32
    return %c0_i32, %c0_i32_0, %c0_i32_1 : i32, i32, i32
  }
  func.func @transform_7(%arg0: i32) -> (i32, i32, i32) {
    %c0_i32 = arith.constant 0 : i32
    %c0_i32_0 = arith.constant 0 : i32
    %c0_i32_1 = arith.constant 0 : i32
    %c0_i32_2 = arith.constant 0 : i32
    return %c0_i32, %c0_i32_0, %c0_i32_1 : i32, i32, i32
  }
  func.func @transform_8(%arg0: i32) -> (i32, i32, i32) {
    %c0_i32 = arith.constant 0 : i32
    %c0_i32_0 = arith.constant 0 : i32
    %c0_i32_1 = arith.constant 0 : i32
    %c0_i32_2 = arith.constant 0 : i32
    return %c0_i32, %c0_i32_0, %c0_i32_1 : i32, i32, i32
  }
  func.func @transform_9(%arg0: i32) -> (i32, i32, i32) {
    %c0_i32 = arith.constant 0 : i32
    %c0_i32_0 = arith.constant 0 : i32
    %c0_i32_1 = arith.constant 0 : i32
    return %arg0, %c0_i32, %c0_i32_0 : i32, i32, i32
  }
}

</mosaic_0001>

<llo_original>
// kernel: tpu_custom_call.1
$region0: #{tpu_custom_call.1}
  #allocation0 [shape = 'u32[]', space=smem, size = 0x4, offset = 0x4, fixed_abs, tag = 'smem constant byte address 0x4 - core index']
  #allocation1 [shape = 'u32[144,128]{1,0:T(1,128)}', space=vmem, size = 0x12000, scoped, tag = 'internal scratch']
  %s0 = inlined_call_operand.hbm [shape: f32[2,8,128], index: 0, kind: input, shape index: {}, may-alias: {0,9}]
  %s1 = inlined_call_operand.vmem [shape: f32[2,8,4], index: 1, kind: input, shape index: {}]
  %s2 = inlined_call_operand.vmem [shape: f32[2,1,4], index: 2, kind: input, shape index: {}]
  %s3 = inlined_call_operand.vmem [shape: f32[2,4,8], index: 3, kind: input, shape index: {}]
  %s4 = inlined_call_operand.vmem [shape: f32[2,4,1], index: 4, kind: input, shape index: {}]
  %s5 = inlined_call_operand.hbm [shape: bf16[2,128,256], index: 5, kind: input, shape index: {}]
  %s6 = inlined_call_operand.vmem [shape: f32[2,1,256], index: 6, kind: input, shape index: {}]
  %s7 = inlined_call_operand.hbm [shape: bf16[2,256,128], index: 7, kind: input, shape index: {}]
  %s8 = inlined_call_operand.vmem [shape: f32[2,1,128], index: 8, kind: input, shape index: {}]
  %s9 = inlined_call_operand.hbm [shape: f32[2,8,128], index: 9, kind: output, shape index: {}, may-alias: {0,9}]
  %s10 = sld [smem:[#allocation0]]
  $region81: #{tpu_custom_call.1} parent=0
    _
  %s12 = ssub.s32 1, %s10
  %s13 = scalar_select 0, %s12, %s10
  $region1: #{tpu_custom_call.1} parent=0
    #allocation2 [shape = 'u8[8192]{0}', space=vmem, size = 0x2000, scoped, tag = 'input window, operand 0']
    #allocation3 [shape = 's32[2]{0}', space=sflag, size = 0x8, scoped, tag = 'scoped memory for tpu_custom_call.1']
    #allocation4 [shape = 's32[2]{0}', space=sflag, size = 0x8, scoped, tag = 'scoped memory for tpu_custom_call.1']
    #allocation5 [shape = 'u8[131072]{0}', space=vmem, size = 0x20000, scoped, tag = 'input window, operand 5, single buffered']
    #allocation6 [shape = 's32[1]{0}', space=sflag, size = 0x4, scoped, tag = 'scoped memory for tpu_custom_call.1']
    #allocation7 [shape = 'u8[131072]{0}', space=vmem, size = 0x20000, scoped, tag = 'input window, operand 7, single buffered']
    #allocation8 [shape = 'u8[8192]{0}', space=vmem, size = 0x2000, scoped, tag = 'output window, operand 0']
    %14 = vsyncpa [#allocation3], 0
    %s15 = scalar_lea.sflag [#allocation3], 1
    %16 = vsyncpa %s15, 0
    %17 = vsyncpa [#allocation6], 0
    %18 = vsyncpa [#allocation4], 0
    %s19 = scalar_lea.sflag [#allocation4], 1
    %20 = vsyncpa %s19, 0
    loop: start=0, step=1, limit=4
    $region2: #{tpu_custom_call.1} parent=1 // loop_pre_header
      _
    $region3: #{tpu_custom_call.1} parent=1 // loop_header
      %s22 = sphi 0, %s26
      %p23 = scmp.ge.s32.totalorder %s22, 4
      %s32 = sphi 0, %s34
      %s35 = sphi 0, %s32
      %s36 = sphi 0, %s35
      %s52 = sphi 0, %s36
      %s56 = sphi 0, %s56
      %s58 = sphi 0, %s56
      %s59 = sphi 0, %s58
      %s73 = sphi 0, %s59
      %s77 = sphi 0, %s77
      %s79 = sphi 0, %s77
      %s80 = sphi 0, %s79
      %s94 = sphi 0, %s80
      %s98 = sphi 0, %s98
      %s100 = sphi 0, %s98
      %s101 = sphi 0, %s100
      %s115 = sphi 0, %s101
      %s119 = sphi 0, %s119
      %s121 = sphi 0, %s119
      %s122 = sphi 0, %s121
      %s136 = sphi 0, %s122
      %s140 = sphi 0, %s140
      %s142 = sphi 0, %s140
      %s143 = sphi 0, %s142
      %s157 = sphi 0, %s143
      %s161 = sphi 0, %s161
      %s163 = sphi 0, %s161
      %s164 = sphi 0, %s163
      %s178 = sphi 0, %s164
      %s182 = sphi 0, %s182
      %s184 = sphi 0, %s182
      %s185 = sphi 0, %s184
      %s199 = sphi 0, %s185
      %s203 = sphi 0, %s203
      %s205 = sphi 0, %s203
      %s206 = sphi 0, %s205
      %s220 = sphi 0, %s206
      %s226 = sphi 0, %s228
      %s229 = sphi 0, %s226
      %s230 = sphi 0, %s229
      %s246 = sphi 0, %s230
    $region4: #{tpu_custom_call.1} parent=1 // loop_header_branch
      %25 = sbr.rel (%p23) target = $region8
    $region5: #{tpu_custom_call.1} parent=1 // loop_body
      %s27 = ssub.s32 %s22, 1
      %s28 = ssub.s32 %s22, 2
      %s29 = sadd.s32 %s22, 1
      %s30 = ssub.s32 %s22, %s29
      %p31 = scmp.eq.s32.totalorder %s30, 0
      %s33 = sadd.s32 %s32, 1
      %s34 = scalar_select %p31, %s32, %s33
      %p37 = pneg %p31
      %p38 = scmp.eq.s32.totalorder %s22, 1
      %p39 = por %p37, %p38
      %p40 = scmp.ne.s32.totalorder %s32, %s35
      %p41 = scmp.eq.s32.totalorder %s22, 0
      %p42 = por %p40, %p41
      %p43 = scmp.ne.s32.totalorder %s32, %s35
      %p44 = scmp.eq.s32.totalorder %s27, 1
      %p45 = por %p43, %p44
      %p46 = scmp.ne.s32.totalorder %s35, %s36
      %p47 = scmp.eq.s32.totalorder %s27, 0
      %p48 = por %p46, %p47
      %p49 = scmp.ne.s32.totalorder %s35, %s36
      %p50 = scmp.eq.s32.totalorder %s28, 1
      %p51 = por %p49, %p50
      %p53 = scmp.ne.s32.totalorder %s36, %s52
      %p54 = scmp.eq.s32.totalorder %s28, 0
      %p55 = por %p53, %p54
      %s57 = sadd.s32 %s56, 1
      %p60 = scmp.eq.s32.totalorder %s22, 1
      %p61 = scmp.ne.s32.totalorder %s56, %s58
      %p62 = scmp.eq.s32.totalorder %s22, 0
      %p63 = por %p61, %p62
      %p64 = scmp.ne.s32.totalorder %s56, %s58
      %p65 = scmp.eq.s32.totalorder %s27, 1
      %p66 = por %p64, %p65
      %p67 = scmp.ne.s32.totalorder %s58, %s59
      %p68 = scmp.eq.s32.totalorder %s27, 0
      %p69 = por %p67, %p68
      %p70 = scmp.ne.s32.totalorder %s58, %s59
      %p71 = scmp.eq.s32.totalorder %s28, 1
      %p72 = por %p70, %p71
      %p74 = scmp.ne.s32.totalorder %s59, %s73
      %p75 = scmp.eq.s32.totalorder %s28, 0
      %p76 = por %p74, %p75
      %s78 = sadd.s32 %s77, 1
      %p81 = scmp.eq.s32.totalorder %s22, 1
      %p82 = scmp.ne.s32.totalorder %s77, %s79
      %p83 = scmp.eq.s32.totalorder %s22, 0
      %p84 = por %p82, %p83
      %p85 = scmp.ne.s32.totalorder %s77, %s79
      %p86 = scmp.eq.s32.totalorder %s27, 1
      %p87 = por %p85, %p86
      %p88 = scmp.ne.s32.totalorder %s79, %s80
      %p89 = scmp.eq.s32.totalorder %s27, 0
      %p90 = por %p88, %p89
      %p91 = scmp.ne.s32.totalorder %s79, %s80
      %p92 = scmp.eq.s32.totalorder %s28, 1
      %p93 = por %p91, %p92
      %p95 = scmp.ne.s32.totalorder %s80, %s94
      %p96 = scmp.eq.s32.totalorder %s28, 0
      %p97 = por %p95, %p96
      %s99 = sadd.s32 %s98, 1
      %p102 = scmp.eq.s32.totalorder %s22, 1
      %p103 = scmp.ne.s32.totalorder %s98, %s100
      %p104 = scmp.eq.s32.totalorder %s22, 0
      %p105 = por %p103, %p104
      %p106 = scmp.ne.s32.totalorder %s98, %s100
      %p107 = scmp.eq.s32.totalorder %s27, 1
      %p108 = por %p106, %p107
      %p109 = scmp.ne.s32.totalorder %s100, %s101
      %p110 = scmp.eq.s32.totalorder %s27, 0
      %p111 = por %p109, %p110
      %p112 = scmp.ne.s32.totalorder %s100, %s101
      %p113 = scmp.eq.s32.totalorder %s28, 1
      %p114 = por %p112, %p113
      %p116 = scmp.ne.s32.totalorder %s101, %s115
      %p117 = scmp.eq.s32.totalorder %s28, 0
      %p118 = por %p116, %p117
      %s120 = sadd.s32 %s119, 1
      %p123 = scmp.eq.s32.totalorder %s22, 1
      %p124 = scmp.ne.s32.totalorder %s119, %s121
      %p125 = scmp.eq.s32.totalorder %s22, 0
      %p126 = por %p124, %p125
      %p127 = scmp.ne.s32.totalorder %s119, %s121
      %p128 = scmp.eq.s32.totalorder %s27, 1
      %p129 = por %p127, %p128
      %p130 = scmp.ne.s32.totalorder %s121, %s122
      %p131 = scmp.eq.s32.totalorder %s27, 0
      %p132 = por %p130, %p131
      %p133 = scmp.ne.s32.totalorder %s121, %s122
      %p134 = scmp.eq.s32.totalorder %s28, 1
      %p135 = por %p133, %p134
      %p137 = scmp.ne.s32.totalorder %s122, %s136
      %p138 = scmp.eq.s32.totalorder %s28, 0
      %p139 = por %p137, %p138
      %s141 = sadd.s32 %s140, 1
      %p144 = scmp.eq.s32.totalorder %s22, 1
      %p145 = scmp.ne.s32.totalorder %s140, %s142
      %p146 = scmp.eq.s32.totalorder %s22, 0
      %p147 = por %p145, %p146
      %p148 = scmp.ne.s32.totalorder %s140, %s142
      %p149 = scmp.eq.s32.totalorder %s27, 1
      %p150 = por %p148, %p149
      %p151 = scmp.ne.s32.totalorder %s142, %s143
      %p152 = scmp.eq.s32.totalorder %s27, 0
      %p153 = por %p151, %p152
      %p154 = scmp.ne.s32.totalorder %s142, %s143
      %p155 = scmp.eq.s32.totalorder %s28, 1
      %p156 = por %p154, %p155
      %p158 = scmp.ne.s32.totalorder %s143, %s157
      %p159 = scmp.eq.s32.totalorder %s28, 0
      %p160 = por %p158, %p159
      %s162 = sadd.s32 %s161, 1
      %p165 = scmp.eq.s32.totalorder %s22, 1
      %p166 = scmp.ne.s32.totalorder %s161, %s163
      %p167 = scmp.eq.s32.totalorder %s22, 0
      %p168 = por %p166, %p167
      %p169 = scmp.ne.s32.totalorder %s161, %s163
      %p170 = scmp.eq.s32.totalorder %s27, 1
      %p171 = por %p169, %p170
      %p172 = scmp.ne.s32.totalorder %s163, %s164
      %p173 = scmp.eq.s32.totalorder %s27, 0
      %p174 = por %p172, %p173
      %p175 = scmp.ne.s32.totalorder %s163, %s164
      %p176 = scmp.eq.s32.totalorder %s28, 1
      %p177 = por %p175, %p176
      %p179 = scmp.ne.s32.totalorder %s164, %s178
      %p180 = scmp.eq.s32.totalorder %s28, 0
      %p181 = por %p179, %p180
      %s183 = sadd.s32 %s182, 1
      %p186 = scmp.eq.s32.totalorder %s22, 1
      %p187 = scmp.ne.s32.totalorder %s182, %s184
      %p188 = scmp.eq.s32.totalorder %s22, 0
      %p189 = por %p187, %p188
      %p190 = scmp.ne.s32.totalorder %s182, %s184
      %p191 = scmp.eq.s32.totalorder %s27, 1
      %p192 = por %p190, %p191
      %p193 = scmp.ne.s32.totalorder %s184, %s185
      %p194 = scmp.eq.s32.totalorder %s27, 0
      %p195 = por %p193, %p194
      %p196 = scmp.ne.s32.totalorder %s184, %s185
      %p197 = scmp.eq.s32.totalorder %s28, 1
      %p198 = por %p196, %p197
      %p200 = scmp.ne.s32.totalorder %s185, %s199
      %p201 = scmp.eq.s32.totalorder %s28, 0
      %p202 = por %p200, %p201
      %s204 = sadd.s32 %s203, 1
      %p207 = scmp.eq.s32.totalorder %s22, 1
      %p208 = scmp.ne.s32.totalorder %s203, %s205
      %p209 = scmp.eq.s32.totalorder %s22, 0
      %p210 = por %p208, %p209
      %p211 = scmp.ne.s32.totalorder %s203, %s205
      %p212 = scmp.eq.s32.totalorder %s27, 1
      %p213 = por %p211, %p212
      %p214 = scmp.ne.s32.totalorder %s205, %s206
      %p215 = scmp.eq.s32.totalorder %s27, 0
      %p216 = por %p214, %p215
      %p217 = scmp.ne.s32.totalorder %s205, %s206
      %p218 = scmp.eq.s32.totalorder %s28, 1
      %p219 = por %p217, %p218
      %p221 = scmp.ne.s32.totalorder %s206, %s220
      %p222 = scmp.eq.s32.totalorder %s28, 0
      %p223 = por %p221, %p222
      %s224 = ssub.s32 %s22, %s29
      %p225 = scmp.eq.s32.totalorder %s224, 0
      %s227 = sadd.s32 %s226, 1
      %s228 = scalar_select %p225, %s226, %s227
      %p231 = pneg %p225
      %p232 = scmp.eq.s32.totalorder %s22, 1
      %p233 = por %p231, %p232
      %p234 = scmp.ne.s32.totalorder %s226, %s229
      %p235 = scmp.eq.s32.totalorder %s22, 0
      %p236 = por %p234, %p235
      %p237 = scmp.ne.s32.totalorder %s226, %s229
      %p238 = scmp.eq.s32.totalorder %s27, 1
      %p239 = por %p237, %p238
      %p240 = scmp.ne.s32.totalorder %s229, %s230
      %p241 = scmp.eq.s32.totalorder %s27, 0
      %p242 = por %p240, %p241
      %p243 = scmp.ne.s32.totalorder %s229, %s230
      %p244 = scmp.eq.s32.totalorder %s28, 1
      %p245 = por %p243, %p244
      %p247 = scmp.ne.s32.totalorder %s230, %s246
      %p248 = scmp.eq.s32.totalorder %s28, 0
      %p249 = por %p247, %p248
      %p250 = scmp.le.s32.totalorder 1, %s22
      %p251 = scmp.lt.s32.totalorder %s22, 3
      %p252 = pnand %p250, %p251
      %p253 = pneg %p252
      // Predicated region
      $region9: #{tpu_custom_call.1} parent=5 // pred_check
        _
      $region10: #{tpu_custom_call.1} parent=5 // pred_check_branch
        %255 = sbr.rel (%p252) target = $region12
      $region11: #{tpu_custom_call.1} parent=5 // pred_region
        %s256 = ssub.s32 %s22, 1
        // Predicated region
        $region13: #{tpu_custom_call.1} parent=11 // pred_check
          %p257 = pneg %p69
        $region14: #{tpu_custom_call.1} parent=11 // pred_check_branch
          %259 = sbr.rel (%p257) target = $region16
        $region15: #{tpu_custom_call.1} parent=11 // pred_region
          _
        $region16: #{tpu_custom_call.1} parent=11 // pred_fallthru
          _
        // Predicated region
        $region17: #{tpu_custom_call.1} parent=11 // pred_check
          %p260 = pneg %p90
        $region18: #{tpu_custom_call.1} parent=11 // pred_check_branch
          %262 = sbr.rel (%p260) target = $region20
        $region19: #{tpu_custom_call.1} parent=11 // pred_region
          _
        $region20: #{tpu_custom_call.1} parent=11 // pred_fallthru
          _
        // Predicated region
        $region21: #{tpu_custom_call.1} parent=11 // pred_check
          %p263 = pneg %p111
        $region22: #{tpu_custom_call.1} parent=11 // pred_check_branch
          %265 = sbr.rel (%p263) target = $region24
        $region23: #{tpu_custom_call.1} parent=11 // pred_region
          _
        $region24: #{tpu_custom_call.1} parent=11 // pred_fallthru
          _
        // Predicated region
        $region25: #{tpu_custom_call.1} parent=11 // pred_check
          %p266 = pneg %p132
        $region26: #{tpu_custom_call.1} parent=11 // pred_check_branch
          %268 = sbr.rel (%p266) target = $region28
        $region27: #{tpu_custom_call.1} parent=11 // pred_region
          _
        $region28: #{tpu_custom_call.1} parent=11 // pred_fallthru
          _
        // Predicated region
        $region29: #{tpu_custom_call.1} parent=11 // pred_check
          %p269 = pneg %p153
        $region30: #{tpu_custom_call.1} parent=11 // pred_check_branch
          %271 = sbr.rel (%p269) target = $region32
        $region31: #{tpu_custom_call.1} parent=11 // pred_region
          %s273 = ssub.s32 4096, 4096
          %274 = vsyncadd [#allocation6], %s273
          %s275 = sshll.u32 [#allocation5], 4
          %s276 = int_to_ptr.vmem [resolvable:$true] %s275
          %281 = dma.hbm_to_vmem [thread:$0]  %s5, 4096, %s276, [#allocation6], 128, 128, 8
        $region32: #{tpu_custom_call.1} parent=11 // pred_fallthru
          _
        // Predicated region
        $region33: #{tpu_custom_call.1} parent=11 // pred_check
          %p282 = pneg %p174
        $region34: #{tpu_custom_call.1} parent=11 // pred_check_branch
          %284 = sbr.rel (%p282) target = $region36
        $region35: #{tpu_custom_call.1} parent=11 // pred_region
          _
        $region36: #{tpu_custom_call.1} parent=11 // pred_fallthru
          _
        // Predicated region
        $region37: #{tpu_custom_call.1} parent=11 // pred_check
          %p285 = pneg %p195
        $region38: #{tpu_custom_call.1} parent=11 // pred_check_branch
          %287 = sbr.rel (%p285) target = $region40
        $region39: #{tpu_custom_call.1} parent=11 // pred_region
          %s289 = ssub.s32 4096, 4096
          %290 = vsyncadd [#allocation6], %s289
          %s291 = sshll.u32 [#allocation7], 4
          %s292 = int_to_ptr.vmem [resolvable:$true] %s291
          %297 = dma.hbm_to_vmem [thread:$0]  %s7, 4096, %s292, [#allocation6], 64, 64, 4
        $region40: #{tpu_custom_call.1} parent=11 // pred_fallthru
          _
        // Predicated region
        $region41: #{tpu_custom_call.1} parent=11 // pred_check
          %p298 = pneg %p216
        $region42: #{tpu_custom_call.1} parent=11 // pred_check_branch
          %300 = sbr.rel (%p298) target = $region44
        $region43: #{tpu_custom_call.1} parent=11 // pred_region
          _
        $region44: #{tpu_custom_call.1} parent=11 // pred_fallthru
          _
      $region12: #{tpu_custom_call.1} parent=5 // pred_fallthru
        _
      %p301 = scmp.lt.s32.totalorder %s22, 2
      // Predicated region
      $region45: #{tpu_custom_call.1} parent=5 // pred_check
        %p302 = pneg %p301
      $region46: #{tpu_custom_call.1} parent=5 // pred_check_branch
        %304 = sbr.rel (%p302) target = $region48
      $region47: #{tpu_custom_call.1} parent=5 // pred_region
        // Predicated region
        $region49: #{tpu_custom_call.1} parent=47 // pred_check
          %p305 = pneg %p42
        $region50: #{tpu_custom_call.1} parent=47 // pred_check_branch
          %307 = sbr.rel (%p305) target = $region52
        $region51: #{tpu_custom_call.1} parent=47 // pred_region
          %s308 = sand.u32 %s32, 1
          %s309 = scalar_lea.sflag [#allocation3], %s308
          %s310 = sand.u32 %s32, 1
          %s311 = smul.addr %s310, 8
          %s312 = scalar_lea.vmem [#allocation2], %s311
          %s314 = ssub.s32 128, 128
          %315 = vsyncadd %s309, %s314
          %s316 = smul.addr %s22, 128
          %s317 = scalar_lea.hbm %s0, %s316
          %s319 = sshll.u32 %s312, 4
          %s320 = int_to_ptr.vmem [resolvable:$true] %s319
          %322 = dma.hbm_to_vmem [thread:$0]  %s317, 128, %s320, %s309
        $region52: #{tpu_custom_call.1} parent=47 // pred_fallthru
          _
      $region48: #{tpu_custom_call.1} parent=5 // pred_fallthru
        _
      %p323 = scmp.le.s32.totalorder 1, %s22
      %p324 = scmp.lt.s32.totalorder %s22, 3
      %p325 = pnand %p323, %p324
      %p326 = pneg %p325
      // Predicated region
      $region53: #{tpu_custom_call.1} parent=5 // pred_check
        _
      $region54: #{tpu_custom_call.1} parent=5 // pred_check_branch
        %328 = sbr.rel (%p325) target = $region56
      $region55: #{tpu_custom_call.1} parent=5 // pred_region
        %s329 = ssub.s32 %s22, 1
        %s330 = sand.u32 %s35, 1
        %s331 = scalar_lea.sflag [#allocation3], %s330
        %s332 = sand.u32 %s35, 1
        %s333 = smul.addr %s332, 8
        %s334 = scalar_lea.vmem [#allocation2], %s333
        // Predicated region
        $region57: #{tpu_custom_call.1} parent=55 // pred_check
          %p335 = pneg %p48
        $region58: #{tpu_custom_call.1} parent=55 // pred_check_branch
          %337 = sbr.rel (%p335) target = $region60
        $region59: #{tpu_custom_call.1} parent=55 // pred_region
          %338 = dma.done %s331, 128
        $region60: #{tpu_custom_call.1} parent=55 // pred_fallthru
          _
        // Predicated region
        $region61: #{tpu_custom_call.1} parent=55 // pred_check
          %p339 = pneg %p153
        $region62: #{tpu_custom_call.1} parent=55 // pred_check_branch
          %341 = sbr.rel (%p339) target = $region64
        $region63: #{tpu_custom_call.1} parent=55 // pred_region
          %342 = dma.done [#allocation6], 4096
        $region64: #{tpu_custom_call.1} parent=55 // pred_fallthru
          _
        // Predicated region
        $region65: #{tpu_custom_call.1} parent=55 // pred_check
          %p343 = pneg %p195
        $region66: #{tpu_custom_call.1} parent=55 // pred_check_branch
          %345 = sbr.rel (%p343) target = $region68
        $region67: #{tpu_custom_call.1} parent=55 // pred_region
          %346 = dma.done [#allocation6], 4096
        $region68: #{tpu_custom_call.1} parent=55 // pred_fallthru
          _
        %s347 = sand.u32 %s35, 1
        %s348 = scalar_lea.sflag [#allocation3], %s347
        %s349 = sand.u32 %s35, 1
        %s350 = smul.addr %s349, 8
        %s351 = scalar_lea.vmem [#allocation2], %s350
        %p352 = pneg %p48
        %p353 = pneg %p45
        %p354 = pneg %p69
        %p355 = pneg %p66
        %p356 = pneg %p90
        %p357 = pneg %p87
        %p358 = pneg %p111
        %p359 = pneg %p108
        %p360 = pneg %p132
        %p361 = pneg %p129
        %p362 = pneg %p153
        %p363 = pneg %p150
        %p364 = pneg %p174
        %p365 = pneg %p171
        %p366 = pneg %p195
        %p367 = pneg %p192
        %p368 = pneg %p216
        %p369 = pneg %p213
        %p370 = pneg %p242
        %p371 = pneg %p239
        %s372 = sand.u32 %s229, 1
        %s373 = scalar_lea.sflag [#allocation4], %s372
        %s374 = sand.u32 %s229, 1
        %s375 = smul.addr %s374, 8
        %s376 = scalar_lea.vmem [#allocation8], %s375
        %v378 = vld [vmem:[%s334] sm:$0xff]
        %v379 = vld [vmem:[%s1] sm:$0xff]
        %v380 = vld [vmem:[%s2] sm:$0x1]
        %v381 = vld [vmem:[%s3] sm:$0xf]
        %v382 = vld [vmem:[%s4] sm:$0xf]
        %v383 = vld [vmem:[#allocation5] sm:$0xff]
        %v384 = vld [vmem:[#allocation5 + $0x8] sm:$0xff]
        %v385 = vld [vmem:[#allocation5 + $0x10] sm:$0xff]
        %v386 = vld [vmem:[#allocation5 + $0x18] sm:$0xff]
        %v387 = vld [vmem:[#allocation5 + $0x20] sm:$0xff]
        %v388 = vld [vmem:[#allocation5 + $0x28] sm:$0xff]
        %v389 = vld [vmem:[#allocation5 + $0x30] sm:$0xff]
        %v390 = vld [vmem:[#allocation5 + $0x38] sm:$0xff]
        %v391 = vld [vmem:[#allocation5 + $0x40] sm:$0xff]
        %v392 = vld [vmem:[#allocation5 + $0x48] sm:$0xff]
        %v393 = vld [vmem:[#allocation5 + $0x50] sm:$0xff]
        %v394 = vld [vmem:[#allocation5 + $0x58] sm:$0xff]
        %v395 = vld [vmem:[#allocation5 + $0x60] sm:$0xff]
        %v396 = vld [vmem:[#allocation5 + $0x68] sm:$0xff]
        %v397 = vld [vmem:[#allocation5 + $0x70] sm:$0xff]
        %v398 = vld [vmem:[#allocation5 + $0x78] sm:$0xff]
        %v399 = vld [vmem:[%s6] sm:$0x3]
        %v400 = vld [vmem:[#allocation7] sm:$0xf]
        %v401 = vld [vmem:[#allocation7 + $0x4] sm:$0xf]
        %v402 = vld [vmem:[#allocation7 + $0x8] sm:$0xf]
        %v403 = vld [vmem:[#allocation7 + $0xc] sm:$0xf]
        %v404 = vld [vmem:[#allocation7 + $0x10] sm:$0xf]
        %v405 = vld [vmem:[#allocation7 + $0x14] sm:$0xf]
        %v406 = vld [vmem:[#allocation7 + $0x18] sm:$0xf]
        %v407 = vld [vmem:[#allocation7 + $0x1c] sm:$0xf]
        %v408 = vld [vmem:[#allocation7 + $0x20] sm:$0xf]
        %v409 = vld [vmem:[#allocation7 + $0x24] sm:$0xf]
        %v410 = vld [vmem:[#allocation7 + $0x28] sm:$0xf]
        %v411 = vld [vmem:[#allocation7 + $0x2c] sm:$0xf]
        %v412 = vld [vmem:[#allocation7 + $0x30] sm:$0xf]
        %v413 = vld [vmem:[#allocation7 + $0x34] sm:$0xf]
        %v414 = vld [vmem:[#allocation7 + $0x38] sm:$0xf]
        %v415 = vld [vmem:[#allocation7 + $0x3c] sm:$0xf]
        %v416 = vld [vmem:[#allocation7 + $0x40] sm:$0xf]
        %v417 = vld [vmem:[#allocation7 + $0x44] sm:$0xf]
        %v418 = vld [vmem:[#allocation7 + $0x48] sm:$0xf]
        %v419 = vld [vmem:[#allocation7 + $0x4c] sm:$0xf]
        %v420 = vld [vmem:[#allocation7 + $0x50] sm:$0xf]
        %v421 = vld [vmem:[#allocation7 + $0x54] sm:$0xf]
        %v422 = vld [vmem:[#allocation7 + $0x58] sm:$0xf]
        %v423 = vld [vmem:[#allocation7 + $0x5c] sm:$0xf]
        %v424 = vld [vmem:[#allocation7 + $0x60] sm:$0xf]
        %v425 = vld [vmem:[#allocation7 + $0x64] sm:$0xf]
        %v426 = vld [vmem:[#allocation7 + $0x68] sm:$0xf]
        %v427 = vld [vmem:[#allocation7 + $0x6c] sm:$0xf]
        %v428 = vld [vmem:[#allocation7 + $0x70] sm:$0xf]
        %v429 = vld [vmem:[#allocation7 + $0x74] sm:$0xf]
        %v430 = vld [vmem:[#allocation7 + $0x78] sm:$0xf]
        %v431 = vld [vmem:[#allocation7 + $0x7c] sm:$0xf]
        %v432 = vld [vmem:[%s8] sm:$0x1]
        %433 = vadd.xlane.f32.xlu0 %v378
        %v434 = vpop.xlane.xlu0 %433
        %v435 = vrcp.pop 128.0
        %v436 = vmul.f32 %v434, %v435
        %v438 = vlaneseq
        %v439 = vand.u32 %v438, 127
        %v440 = vlaneseq
        %v441 = vshrl.u32 %v440, 7
        %v442 = vsub.s32 %v439, %v441
        %v443 = vrot.slane %v436, %v442
        %vm444 = vcmask 64512
        %v445 = vsel %vm444, %v443, 0
        %447 = vmatprep.subr.mxu0 0.0
        %448 = vmatpush1.msra.mxu0 0.0
        %449 = vmatprep.subr.mxu0 0.0
        %450 = vmatpush1.msra.mxu0 0.0
        %451 = vmatprep.subr.mxu0 0.0
        %452 = vmatpush1.msra.mxu0 0.0
        %453 = vmatprep.subr.mxu0 0.0
        %454 = vmatpush1.msra.mxu0 0.0
        %455 = vmatprep.subr.mxu0 0.0
        %456 = vmatpush1.msra.mxu0 0.0
        %457 = vmatprep.subr.mxu0 0.0
        %458 = vmatpush1.msra.mxu0 0.0
        %459 = vmatprep.subr.mxu0 0.0
        %460 = vmatpush1.msra.mxu0 0.0
        %461 = vmatprep.subr.mxu0 0.0
        %462 = vmatpush1.msra.mxu0 0.0
        %463 = vmatprep.subr.mxu0 0.0
        %464 = vmatpush1.msra.mxu0 0.0
        %465 = vmatprep.subr.mxu0 0.0
        %466 = vmatpush1.msra.mxu0 0.0
        %467 = vmatprep.subr.mxu0 0.0
        %468 = vmatpush1.msra.mxu0 0.0
        %469 = vmatprep.subr.mxu0 0.0
        %470 = vmatpush1.msra.mxu0 0.0
        %471 = vmatprep.subr.mxu0 0.0
        %472 = vmatpush1.msra.mxu0 0.0
        %473 = vmatprep.subr.mxu0 0.0
        %474 = vmatpush1.msra.mxu0 0.0
        %475 = vmatprep.subr.mxu0 0.0
        %476 = vmatpush1.msra.mxu0 0.0
        %477 = vmatprep.subr.mxu0 0.0
        %478 = vmatpush1.msra.mxu0 %v379
        %479 = vmatprep.subr.mxu0 0.0
        %480 = vmatpush2.msra.mxu0 0.0
        %481 = vmatprep.subr.mxu0 0.0
        %482 = vmatpush2.msra.mxu0 0.0
        %483 = vmatprep.subr.mxu0 0.0
        %484 = vmatpush2.msra.mxu0 0.0
        %485 = vmatprep.subr.mxu0 0.0
        %486 = vmatpush2.msra.mxu0 0.0
        %487 = vmatprep.subr.mxu0 0.0
        %488 = vmatpush2.msra.mxu0 0.0
        %489 = vmatprep.subr.mxu0 0.0
        %490 = vmatpush2.msra.mxu0 0.0
        %491 = vmatprep.subr.mxu0 0.0
        %492 = vmatpush2.msra.mxu0 0.0
        %493 = vmatprep.subr.mxu0 0.0
        %494 = vmatpush2.msra.mxu0 0.0
        %495 = vmatprep.subr.mxu0 0.0
        %496 = vmatpush2.msra.mxu0 0.0
        %497 = vmatprep.subr.mxu0 0.0
        %498 = vmatpush2.msra.mxu0 0.0
        %499 = vmatprep.subr.mxu0 0.0
        %500 = vmatpush2.msra.mxu0 0.0
        %501 = vmatprep.subr.mxu0 0.0
        %502 = vmatpush2.msra.mxu0 0.0
        %503 = vmatprep.subr.mxu0 0.0
        %504 = vmatpush2.msra.mxu0 0.0
        %505 = vmatprep.subr.mxu0 0.0
        %506 = vmatpush2.msra.mxu0 0.0
        %507 = vmatprep.subr.mxu0 0.0
        %508 = vmatpush2.msra.mxu0 0.0
        %509 = vmatprep.subr.mxu0 0.0
        %510 = vmatpush2.msra.mxu0 0.0
        %511 = vmatprep.mubr.f32.mxu0 0.0
        %512 = vmatmul.mubr.f32.gmra.mxu0 %v445
        %v513 = vpop.f32.mrf.mxu0
        %v514 = vadd.f32 %v380, %v513
        %v515 = vpop.f32.mrf.mxu0
        %516 = vdwg.mxu0
        %vm517 = vcmask 24576
        %v518 = vsel %vm517, %v514, -inf
        %519 = vmax.xlane.f32.xlu0 %v518
        %v520 = vpop.xlane.xlu0 %519
        %v521 = vsub.f32 %v514, %v520
        %v522 = vmul.f32 %v521, 1.442695
        %v523 = vpow.pop %v522
        %v524 = vsel %vm517, %v523, 0.0
        %525 = vadd.xlane.f32.xlu0 %v524
        %v526 = vpop.xlane.xlu0 %525
        %v527 = vrcp.pop %v526
        %v528 = vmul.f32 %v523, %v527
        %vm529 = vcmask 31744
        %v531 = vsel %vm529, %v528, 0
        %vm533 = vcmask 1043456
        %v535 = vsel %vm533, %v381, 0
        %537 = vmatprep.subr.mxu0 0.0
        %538 = vmatpush1.msra.mxu0 0.0
        %539 = vmatprep.subr.mxu0 0.0
        %540 = vmatpush1.msra.mxu0 0.0
        %541 = vmatprep.subr.mxu0 0.0
        %542 = vmatpush1.msra.mxu0 0.0
        %543 = vmatprep.subr.mxu0 0.0
        %544 = vmatpush1.msra.mxu0 0.0
        %545 = vmatprep.subr.mxu0 0.0
        %546 = vmatpush1.msra.mxu0 0.0
        %547 = vmatprep.subr.mxu0 0.0
        %548 = vmatpush1.msra.mxu0 0.0
        %549 = vmatprep.subr.mxu0 0.0
        %550 = vmatpush1.msra.mxu0 0.0
        %551 = vmatprep.subr.mxu0 0.0
        %552 = vmatpush1.msra.mxu0 0.0
        %553 = vmatprep.subr.mxu0 0.0
        %554 = vmatpush1.msra.mxu0 0.0
        %555 = vmatprep.subr.mxu0 0.0
        %556 = vmatpush1.msra.mxu0 0.0
        %557 = vmatprep.subr.mxu0 0.0
        %558 = vmatpush1.msra.mxu0 0.0
        %559 = vmatprep.subr.mxu0 0.0
        %560 = vmatpush1.msra.mxu0 0.0
        %561 = vmatprep.subr.mxu0 0.0
        %562 = vmatpush1.msra.mxu0 0.0
        %563 = vmatprep.subr.mxu0 0.0
        %564 = vmatpush1.msra.mxu0 0.0
        %565 = vmatprep.subr.mxu0 0.0
        %566 = vmatpush1.msra.mxu0 0.0
        %567 = vmatprep.subr.mxu0 0.0
        %568 = vmatpush1.msra.mxu0 %v535
        %569 = vmatprep.subr.mxu0 0.0
        %570 = vmatpush2.msra.mxu0 0.0
        %571 = vmatprep.subr.mxu0 0.0
        %572 = vmatpush2.msra.mxu0 0.0
        %573 = vmatprep.subr.mxu0 0.0
        %574 = vmatpush2.msra.mxu0 0.0
        %575 = vmatprep.subr.mxu0 0.0
        %576 = vmatpush2.msra.mxu0 0.0
        %577 = vmatprep.subr.mxu0 0.0
        %578 = vmatpush2.msra.mxu0 0.0
        %579 = vmatprep.subr.mxu0 0.0
        %580 = vmatpush2.msra.mxu0 0.0
        %581 = vmatprep.subr.mxu0 0.0
        %582 = vmatpush2.msra.mxu0 0.0
        %583 = vmatprep.subr.mxu0 0.0
        %584 = vmatpush2.msra.mxu0 0.0
        %585 = vmatprep.subr.mxu0 0.0
        %586 = vmatpush2.msra.mxu0 0.0
        %587 = vmatprep.subr.mxu0 0.0
        %588 = vmatpush2.msra.mxu0 0.0
        %589 = vmatprep.subr.mxu0 0.0
        %590 = vmatpush2.msra.mxu0 0.0
        %591 = vmatprep.subr.mxu0 0.0
        %592 = vmatpush2.msra.mxu0 0.0
        %593 = vmatprep.subr.mxu0 0.0
        %594 = vmatpush2.msra.mxu0 0.0
        %595 = vmatprep.subr.mxu0 0.0
        %596 = vmatpush2.msra.mxu0 0.0
        %597 = vmatprep.subr.mxu0 0.0
        %598 = vmatpush2.msra.mxu0 0.0
        %599 = vmatprep.subr.mxu0 0.0
        %600 = vmatpush2.msra.mxu0 0.0
        %601 = vmatprep.mubr.f32.mxu0 0.0
        %602 = vmatmul.mubr.f32.gmra.mxu0 %v531
        %v603 = vpop.f32.mrf.mxu0
        %v604 = vadd.f32 0.0, %v603
        %v605 = vpop.f32.mrf.mxu0
        %606 = vdwg.mxu0
        %v608 = vsel %vm533, %v382, 0
        %610 = vmatprep.subr.mxu0 0.0
        %611 = vmatpush1.msra.mxu0 0.0
        %612 = vmatprep.subr.mxu0 0.0
        %613 = vmatpush1.msra.mxu0 0.0
        %614 = vmatprep.subr.mxu0 0.0
        %615 = vmatpush1.msra.mxu0 0.0
        %616 = vmatprep.subr.mxu0 0.0
        %617 = vmatpush1.msra.mxu0 0.0
        %618 = vmatprep.subr.mxu0 0.0
        %619 = vmatpush1.msra.mxu0 0.0
        %620 = vmatprep.subr.mxu0 0.0
        %621 = vmatpush1.msra.mxu0 0.0
        %622 = vmatprep.subr.mxu0 0.0
        %623 = vmatpush1.msra.mxu0 0.0
        %624 = vmatprep.subr.mxu0 0.0
        %625 = vmatpush1.msra.mxu0 0.0
        %626 = vmatprep.subr.mxu0 0.0
        %627 = vmatpush1.msra.mxu0 0.0
        %628 = vmatprep.subr.mxu0 0.0
        %629 = vmatpush1.msra.mxu0 0.0
        %630 = vmatprep.subr.mxu0 0.0
        %631 = vmatpush1.msra.mxu0 0.0
        %632 = vmatprep.subr.mxu0 0.0
        %633 = vmatpush1.msra.mxu0 0.0
        %634 = vmatprep.subr.mxu0 0.0
        %635 = vmatpush1.msra.mxu0 0.0
        %636 = vmatprep.subr.mxu0 0.0
        %637 = vmatpush1.msra.mxu0 0.0
        %638 = vmatprep.subr.mxu0 0.0
        %639 = vmatpush1.msra.mxu0 0.0
        %640 = vmatprep.subr.mxu0 0.0
        %641 = vmatpush1.msra.mxu0 %v608
        %642 = vmatprep.subr.mxu0 0.0
        %643 = vmatpush2.msra.mxu0 0.0
        %644 = vmatprep.subr.mxu0 0.0
        %645 = vmatpush2.msra.mxu0 0.0
        %646 = vmatprep.subr.mxu0 0.0
        %647 = vmatpush2.msra.mxu0 0.0
        %648 = vmatprep.subr.mxu0 0.0
        %649 = vmatpush2.msra.mxu0 0.0
        %650 = vmatprep.subr.mxu0 0.0
        %651 = vmatpush2.msra.mxu0 0.0
        %652 = vmatprep.subr.mxu0 0.0
        %653 = vmatpush2.msra.mxu0 0.0
        %654 = vmatprep.subr.mxu0 0.0
        %655 = vmatpush2.msra.mxu0 0.0
        %656 = vmatprep.subr.mxu0 0.0
        %657 = vmatpush2.msra.mxu0 0.0
        %658 = vmatprep.subr.mxu0 0.0
        %659 = vmatpush2.msra.mxu0 0.0
        %660 = vmatprep.subr.mxu0 0.0
        %661 = vmatpush2.msra.mxu0 0.0
        %662 = vmatprep.subr.mxu0 0.0
        %663 = vmatpush2.msra.mxu0 0.0
        %664 = vmatprep.subr.mxu0 0.0
        %665 = vmatpush2.msra.mxu0 0.0
        %666 = vmatprep.subr.mxu0 0.0
        %667 = vmatpush2.msra.mxu0 0.0
        %668 = vmatprep.subr.mxu0 0.0
        %669 = vmatpush2.msra.mxu0 0.0
        %670 = vmatprep.subr.mxu0 0.0
        %671 = vmatpush2.msra.mxu0 0.0
        %672 = vmatprep.subr.mxu0 0.0
        %673 = vmatpush2.msra.mxu0 0.0
        %674 = vmatprep.mubr.f32.mxu0 0.0
        %675 = vmatmul.mubr.f32.gmra.mxu0 %v531
        %v676 = vpop.f32.mrf.mxu0
        %v677 = vadd.f32 0.0, %v676
        %v678 = vpop.f32.mrf.mxu0
        %679 = vdwg.mxu0
        %v680 = vlaneseq
        %v681 = vshrl.u32 %v680, 7
        %v682 = vsub.s32 0, %v681
        %v683 = vrot.slane %v604, %v682
        %685 = vbcast.lane.b32.xlu0 %v683, 256
        %v686 = vpop.permute.xlu0 %685
        %v687 = vmul.f32 %v686, %v378
        %v688 = vrot.slane %v687, 4
        %v689 = vadd.f32 %v687, %v688
        %v690 = vrot.slane %v689, 2
        %v691 = vadd.f32 %v689, %v690
        %v692 = vrot.slane %v691, 1
        %v693 = vadd.f32 %v691, %v692
        %695 = vset.pattern.permute.xlu0 0
        %696 = vperm.xlu0 %695, %v677
        %v697 = vpop.permute.xlu0 %696
        %v699 = vadd.f32 %v693, %v697
        %v700 = vxor.u32 %v699, 2147483648
        %v701 = vmul.f32 %v700, 1.442695
        %v702 = vpow.pop %v701
        %v703 = vadd.f32 %v702, 1.0
        %v704 = vrcp.pop %v703
        %v705 = vmul.f32 1.0, %v704
        %v706 = vlaneseq
        %v707 = vshrl.u32 %v706, 7
        %v708 = vsub.s32 0, %v707
        %v709 = vrot.slane %v705, %v708
        %v710 = vmul.f32 %v709, %v378
        %v711 = vadd.f32 %v710, %v378
        %v712 = vpack.c.bf16 %v711, %v711
        %v714 = vlaneseq
        %v715 = vshrl.u32 %v714, 7
        %v716 = vsub.s32 0, %v715
        %v717 = vrot.slane %v399, %v716
        %v718 = vlaneseq
        %v719 = vshrl.u32 %v718, 7
        %v720 = vsub.s32 1, %v719
        %v721 = vrot.slane %v399, %v720
        %v740 = vunpack.c.l.b16 %v383
        %v741 = vunpack.c.h.b16 %v383
        %v742 = vunpack.c.l.b16 %v384
        %v743 = vunpack.c.h.b16 %v384
        %v744 = vunpack.c.l.b16 %v385
        %v745 = vunpack.c.h.b16 %v385
        %v746 = vunpack.c.l.b16 %v386
        %v747 = vunpack.c.h.b16 %v386
        %v748 = vunpack.c.l.b16 %v387
        %v749 = vunpack.c.h.b16 %v387
        %v750 = vunpack.c.l.b16 %v388
        %v751 = vunpack.c.h.b16 %v388
        %v752 = vunpack.c.l.b16 %v389
        %v753 = vunpack.c.h.b16 %v389
        %v754 = vunpack.c.l.b16 %v390
        %v755 = vunpack.c.h.b16 %v390
        %v756 = vunpack.c.l.b16 %v391
        %v757 = vunpack.c.h.b16 %v391
        %v758 = vunpack.c.l.b16 %v392
        %v759 = vunpack.c.h.b16 %v392
        %v760 = vunpack.c.l.b16 %v393
        %v761 = vunpack.c.h.b16 %v393
        %v762 = vunpack.c.l.b16 %v394
        %v763 = vunpack.c.h.b16 %v394
        %v764 = vunpack.c.l.b16 %v395
        %v765 = vunpack.c.h.b16 %v395
        %v766 = vunpack.c.l.b16 %v396
        %v767 = vunpack.c.h.b16 %v396
        %v768 = vunpack.c.l.b16 %v397
        %v769 = vunpack.c.h.b16 %v397
        %v770 = vunpack.c.l.b16 %v398
        %v771 = vunpack.c.h.b16 %v398
        %v772 = vpack.c.b16 %v742, %v740
        %v773 = vpack.c.b16 %v743, %v741
        %v774 = vpack.c.b16 %v746, %v744
        %v775 = vpack.c.b16 %v747, %v745
        %v776 = vpack.c.b16 %v750, %v748
        %v777 = vpack.c.b16 %v751, %v749
        %v778 = vpack.c.b16 %v754, %v752
        %v779 = vpack.c.b16 %v755, %v753
        %v780 = vpack.c.b16 %v758, %v756
        %v781 = vpack.c.b16 %v759, %v757
        %v782 = vpack.c.b16 %v762, %v760
        %v783 = vpack.c.b16 %v763, %v761
        %v784 = vpack.c.b16 %v766, %v764
        %v785 = vpack.c.b16 %v767, %v765
        %v786 = vpack.c.b16 %v770, %v768
        %v787 = vpack.c.b16 %v771, %v769
        %804 = vmatprep.subr.bf16.mxu0 %v787
        %805 = vmatpush1.bf16.msra.mxu0 %v786
        %806 = vmatprep.subr.bf16.mxu0 %v785
        %807 = vmatpush1.bf16.msra.mxu0 %v784
        %808 = vmatprep.subr.bf16.mxu0 %v783
        %809 = vmatpush1.bf16.msra.mxu0 %v782
        %810 = vmatprep.subr.bf16.mxu0 %v781
        %811 = vmatpush1.bf16.msra.mxu0 %v780
        %812 = vmatprep.subr.bf16.mxu0 %v779
        %813 = vmatpush1.bf16.msra.mxu0 %v778
        %814 = vmatprep.subr.bf16.mxu0 %v777
        %815 = vmatpush1.bf16.msra.mxu0 %v776
        %816 = vmatprep.subr.bf16.mxu0 %v775
        %817 = vmatpush1.bf16.msra.mxu0 %v774
        %818 = vmatprep.subr.bf16.mxu0 %v773
        %819 = vmatpush1.bf16.msra.mxu0 %v772
        %820 = vmatprep.subr.bf16.mxu0 0
        %821 = vmatpush2.bf16.msra.mxu0 0
        %822 = vmatprep.subr.bf16.mxu0 0
        %823 = vmatpush2.bf16.msra.mxu0 0
        %824 = vmatprep.subr.bf16.mxu0 0
        %825 = vmatpush2.bf16.msra.mxu0 0
        %826 = vmatprep.subr.bf16.mxu0 0
        %827 = vmatpush2.bf16.msra.mxu0 0
        %828 = vmatprep.subr.bf16.mxu0 0
        %829 = vmatpush2.bf16.msra.mxu0 0
        %830 = vmatprep.subr.bf16.mxu0 0
        %831 = vmatpush2.bf16.msra.mxu0 0
        %832 = vmatprep.subr.bf16.mxu0 0
        %833 = vmatpush2.bf16.msra.mxu0 0
        %834 = vmatprep.subr.bf16.mxu0 0
        %835 = vmatpush2.bf16.msra.mxu0 0
        %836 = vmatprep.mubr.bf16.mxu0 0
        %837 = vmatmul.mubr.bf16.gmra.mxu0 %v712
        %v838 = vpop.f32.mrf.mxu0
        %v839 = vadd.f32 %v717, %v838
        %v840 = vpop.f32.mrf.mxu0
        %v841 = vadd.f32 %v721, %v840
        %v842 = vpop.f32.mrf.mxu0
        %v843 = vpop.f32.mrf.mxu0
        %844 = vdwg.mxu0
        %v845 = vmul.f32 %v839, 0.5
        %v846 = vmul.f32 %v841, 0.5
        %v847 = vmul.f32 %v839, 0.70710677
        %v848 = vmul.f32 %v841, 0.70710677
        %v849 = verf.f32.pop %v847
        %v850 = verf.f32.pop %v848
        %v851 = vadd.f32 %v849, 1.0
        %v852 = vadd.f32 %v850, 1.0
        %v853 = vmul.f32 %v845, %v851
        %v854 = vmul.f32 %v846, %v852
        %v855 = vpack.c.bf16 %v853, %v853
        %v856 = vpack.c.bf16 %v854, %v854
        %v858 = vlaneseq
        %v859 = vshrl.u32 %v858, 7
        %v860 = vsub.s32 0, %v859
        %v861 = vrot.slane %v432, %v860
        %v895 = vunpack.c.l.b16 %v400
        %v896 = vunpack.c.l.b16 %v401
        %v897 = vunpack.c.l.b16 %v402
        %v898 = vunpack.c.l.b16 %v403
        %v899 = vunpack.c.l.b16 %v404
        %v900 = vunpack.c.l.b16 %v405
        %v901 = vunpack.c.l.b16 %v406
        %v902 = vunpack.c.l.b16 %v407
        %v903 = vunpack.c.l.b16 %v408
        %v904 = vunpack.c.l.b16 %v409
        %v905 = vunpack.c.l.b16 %v410
        %v906 = vunpack.c.l.b16 %v411
        %v907 = vunpack.c.l.b16 %v412
        %v908 = vunpack.c.l.b16 %v413
        %v909 = vunpack.c.l.b16 %v414
        %v910 = vunpack.c.l.b16 %v415
        %v911 = vunpack.c.l.b16 %v416
        %v912 = vunpack.c.l.b16 %v417
        %v913 = vunpack.c.l.b16 %v418
        %v914 = vunpack.c.l.b16 %v419
        %v915 = vunpack.c.l.b16 %v420
        %v916 = vunpack.c.l.b16 %v421
        %v917 = vunpack.c.l.b16 %v422
        %v918 = vunpack.c.l.b16 %v423
        %v919 = vunpack.c.l.b16 %v424
        %v920 = vunpack.c.l.b16 %v425
        %v921 = vunpack.c.l.b16 %v426
        %v922 = vunpack.c.l.b16 %v427
        %v923 = vunpack.c.l.b16 %v428
        %v924 = vunpack.c.l.b16 %v429
        %v925 = vunpack.c.l.b16 %v430
        %v926 = vunpack.c.l.b16 %v431
        %v927 = vpack.c.b16 %v896, %v895
        %v928 = vpack.c.b16 %v898, %v897
        %v929 = vpack.c.b16 %v900, %v899
        %v930 = vpack.c.b16 %v902, %v901
        %v931 = vpack.c.b16 %v904, %v903
        %v932 = vpack.c.b16 %v906, %v905
        %v933 = vpack.c.b16 %v908, %v907
        %v934 = vpack.c.b16 %v910, %v909
        %v935 = vpack.c.b16 %v912, %v911
        %v936 = vpack.c.b16 %v914, %v913
        %v937 = vpack.c.b16 %v916, %v915
        %v938 = vpack.c.b16 %v918, %v917
        %v939 = vpack.c.b16 %v920, %v919
        %v940 = vpack.c.b16 %v922, %v921
        %v941 = vpack.c.b16 %v924, %v923
        %v942 = vpack.c.b16 %v926, %v925
        %959 = vmatprep.subr.bf16.mxu0 0
        %960 = vmatpush1.bf16.msra.mxu0 %v934
        %961 = vmatprep.subr.bf16.mxu0 0
        %962 = vmatpush1.bf16.msra.mxu0 %v933
        %963 = vmatprep.subr.bf16.mxu0 0
        %964 = vmatpush1.bf16.msra.mxu0 %v932
        %965 = vmatprep.subr.bf16.mxu0 0
        %966 = vmatpush1.bf16.msra.mxu0 %v931
        %967 = vmatprep.subr.bf16.mxu0 0
        %968 = vmatpush1.bf16.msra.mxu0 %v930
        %969 = vmatprep.subr.bf16.mxu0 0
        %970 = vmatpush1.bf16.msra.mxu0 %v929
        %971 = vmatprep.subr.bf16.mxu0 0
        %972 = vmatpush1.bf16.msra.mxu0 %v928
        %973 = vmatprep.subr.bf16.mxu0 0
        %974 = vmatpush1.bf16.msra.mxu0 %v927
        %975 = vmatprep.subr.bf16.mxu0 0
        %976 = vmatpush2.bf16.msra.mxu0 %v942
        %977 = vmatprep.subr.bf16.mxu0 0
        %978 = vmatpush2.bf16.msra.mxu0 %v941
        %979 = vmatprep.subr.bf16.mxu0 0
        %980 = vmatpush2.bf16.msra.mxu0 %v940
        %981 = vmatprep.subr.bf16.mxu0 0
        %982 = vmatpush2.bf16.msra.mxu0 %v939
        %983 = vmatprep.subr.bf16.mxu0 0
        %984 = vmatpush2.bf16.msra.mxu0 %v938
        %985 = vmatprep.subr.bf16.mxu0 0
        %986 = vmatpush2.bf16.msra.mxu0 %v937
        %987 = vmatprep.subr.bf16.mxu0 0
        %988 = vmatpush2.bf16.msra.mxu0 %v936
        %989 = vmatprep.subr.bf16.mxu0 0
        %990 = vmatpush2.bf16.msra.mxu0 %v935
        %991 = vmatprep.mubr.bf16.mxu0 %v856
        %992 = vmatmul.mubr.bf16.gmra.mxu0 %v855
        %v993 = vpop.f32.mrf.mxu0
        %v994 = vadd.f32 %v861, %v993
        %v995 = vpop.f32.mrf.mxu0
        %v996 = vpop.f32.mrf.mxu0
        %v997 = vpop.f32.mrf.mxu0
        %998 = vdwg.mxu0
        %v999 = vadd.f32 %v994, %v711
        %s1000 = scalar_lea.vmem %s1, 8
        %v1001 = vld [vmem:[%s1000] sm:$0xff]
        %s1002 = scalar_lea.vmem %s2, 1
        %v1003 = vld [vmem:[%s1002] sm:$0x1]
        %s1004 = scalar_lea.vmem %s3, 4
        %v1005 = vld [vmem:[%s1004] sm:$0xf]
        %s1006 = scalar_lea.vmem %s4, 4
        %v1007 = vld [vmem:[%s1006] sm:$0xf]
        %s1008 = scalar_lea.vmem [#allocation5], 128
        %v1009 = vld [vmem:[%s1008] sm:$0xff]
        %v1010 = vld [vmem:[%s1008 + $0x8] sm:$0xff]
        %v1011 = vld [vmem:[%s1008 + $0x10] sm:$0xff]
        %v1012 = vld [vmem:[%s1008 + $0x18] sm:$0xff]
        %v1013 = vld [vmem:[%s1008 + $0x20] sm:$0xff]
        %v1014 = vld [vmem:[%s1008 + $0x28] sm:$0xff]
        %v1015 = vld [vmem:[%s1008 + $0x30] sm:$0xff]
        %v1016 = vld [vmem:[%s1008 + $0x38] sm:$0xff]
        %v1017 = vld [vmem:[%s1008 + $0x40] sm:$0xff]
        %v1018 = vld [vmem:[%s1008 + $0x48] sm:$0xff]
        %v1019 = vld [vmem:[%s1008 + $0x50] sm:$0xff]
        %v1020 = vld [vmem:[%s1008 + $0x58] sm:$0xff]
        %v1021 = vld [vmem:[%s1008 + $0x60] sm:$0xff]
        %v1022 = vld [vmem:[%s1008 + $0x68] sm:$0xff]
        %v1023 = vld [vmem:[%s1008 + $0x70] sm:$0xff]
        %v1024 = vld [vmem:[%s1008 + $0x78] sm:$0xff]
        %s1025 = scalar_lea.vmem %s6, 2
        %v1026 = vld [vmem:[%s1025] sm:$0x3]
        %s1027 = scalar_lea.vmem [#allocation7], 128
        %v1028 = vld [vmem:[%s1027] sm:$0xf]
        %v1029 = vld [vmem:[%s1027 + $0x4] sm:$0xf]
        %v1030 = vld [vmem:[%s1027 + $0x8] sm:$0xf]
        %v1031 = vld [vmem:[%s1027 + $0xc] sm:$0xf]
        %v1032 = vld [vmem:[%s1027 + $0x10] sm:$0xf]
        %v1033 = vld [vmem:[%s1027 + $0x14] sm:$0xf]
        %v1034 = vld [vmem:[%s1027 + $0x18] sm:$0xf]
        %v1035 = vld [vmem:[%s1027 + $0x1c] sm:$0xf]
        %v1036 = vld [vmem:[%s1027 + $0x20] sm:$0xf]
        %v1037 = vld [vmem:[%s1027 + $0x24] sm:$0xf]
        %v1038 = vld [vmem:[%s1027 + $0x28] sm:$0xf]
        %v1039 = vld [vmem:[%s1027 + $0x2c] sm:$0xf]
        %v1040 = vld [vmem:[%s1027 + $0x30] sm:$0xf]
        %v1041 = vld [vmem:[%s1027 + $0x34] sm:$0xf]
        %v1042 = vld [vmem:[%s1027 + $0x38] sm:$0xf]
        %v1043 = vld [vmem:[%s1027 + $0x3c] sm:$0xf]
        %v1044 = vld [vmem:[%s1027 + $0x40] sm:$0xf]
        %v1045 = vld [vmem:[%s1027 + $0x44] sm:$0xf]
        %v1046 = vld [vmem:[%s1027 + $0x48] sm:$0xf]
        %v1047 = vld [vmem:[%s1027 + $0x4c] sm:$0xf]
        %v1048 = vld [vmem:[%s1027 + $0x50] sm:$0xf]
        %v1049 = vld [vmem:[%s1027 + $0x54] sm:$0xf]
        %v1050 = vld [vmem:[%s1027 + $0x58] sm:$0xf]
        %v1051 = vld [vmem:[%s1027 + $0x5c] sm:$0xf]
        %v1052 = vld [vmem:[%s1027 + $0x60] sm:$0xf]
        %v1053 = vld [vmem:[%s1027 + $0x64] sm:$0xf]
        %v1054 = vld [vmem:[%s1027 + $0x68] sm:$0xf]
        %v1055 = vld [vmem:[%s1027 + $0x6c] sm:$0xf]
        %v1056 = vld [vmem:[%s1027 + $0x70] sm:$0xf]
        %v1057 = vld [vmem:[%s1027 + $0x74] sm:$0xf]
        %v1058 = vld [vmem:[%s1027 + $0x78] sm:$0xf]
        %v1059 = vld [vmem:[%s1027 + $0x7c] sm:$0xf]
        %s1060 = scalar_lea.vmem %s8, 1
        %v1061 = vld [vmem:[%s1060] sm:$0x1]
        %1062 = vadd.xlane.f32.xlu0 %v999
        %v1063 = vpop.xlane.xlu0 %1062
        %v1064 = vmul.f32 %v1063, %v435
        %v1066 = vlaneseq
        %v1067 = vshrl.u32 %v1066, 7
        %v1068 = vsub.s32 %v439, %v1067
        %v1069 = vrot.slane %v1064, %v1068
        %v1070 = vsel %vm444, %v1069, 0
        %1072 = vmatprep.subr.mxu0 0.0
        %1073 = vmatpush1.msra.mxu0 0.0
        %1074 = vmatprep.subr.mxu0 0.0
        %1075 = vmatpush1.msra.mxu0 0.0
        %1076 = vmatprep.subr.mxu0 0.0
        %1077 = vmatpush1.msra.mxu0 0.0
        %1078 = vmatprep.subr.mxu0 0.0
        %1079 = vmatpush1.msra.mxu0 0.0
        %1080 = vmatprep.subr.mxu0 0.0
        %1081 = vmatpush1.msra.mxu0 0.0
        %1082 = vmatprep.subr.mxu0 0.0
        %1083 = vmatpush1.msra.mxu0 0.0
        %1084 = vmatprep.subr.mxu0 0.0
        %1085 = vmatpush1.msra.mxu0 0.0
        %1086 = vmatprep.subr.mxu0 0.0
        %1087 = vmatpush1.msra.mxu0 0.0
        %1088 = vmatprep.subr.mxu0 0.0
        %1089 = vmatpush1.msra.mxu0 0.0
        %1090 = vmatprep.subr.mxu0 0.0
        %1091 = vmatpush1.msra.mxu0 0.0
        %1092 = vmatprep.subr.mxu0 0.0
        %1093 = vmatpush1.msra.mxu0 0.0
        %1094 = vmatprep.subr.mxu0 0.0
        %1095 = vmatpush1.msra.mxu0 0.0
        %1096 = vmatprep.subr.mxu0 0.0
        %1097 = vmatpush1.msra.mxu0 0.0
        %1098 = vmatprep.subr.mxu0 0.0
        %1099 = vmatpush1.msra.mxu0 0.0
        %1100 = vmatprep.subr.mxu0 0.0
        %1101 = vmatpush1.msra.mxu0 0.0
        %1102 = vmatprep.subr.mxu0 0.0
        %1103 = vmatpush1.msra.mxu0 %v1001
        %1104 = vmatprep.subr.mxu0 0.0
        %1105 = vmatpush2.msra.mxu0 0.0
        %1106 = vmatprep.subr.mxu0 0.0
        %1107 = vmatpush2.msra.mxu0 0.0
        %1108 = vmatprep.subr.mxu0 0.0
        %1109 = vmatpush2.msra.mxu0 0.0
        %1110 = vmatprep.subr.mxu0 0.0
        %1111 = vmatpush2.msra.mxu0 0.0
        %1112 = vmatprep.subr.mxu0 0.0
        %1113 = vmatpush2.msra.mxu0 0.0
        %1114 = vmatprep.subr.mxu0 0.0
        %1115 = vmatpush2.msra.mxu0 0.0
        %1116 = vmatprep.subr.mxu0 0.0
        %1117 = vmatpush2.msra.mxu0 0.0
        %1118 = vmatprep.subr.mxu0 0.0
        %1119 = vmatpush2.msra.mxu0 0.0
        %1120 = vmatprep.subr.mxu0 0.0
        %1121 = vmatpush2.msra.mxu0 0.0
        %1122 = vmatprep.subr.mxu0 0.0
        %1123 = vmatpush2.msra.mxu0 0.0
        %1124 = vmatprep.subr.mxu0 0.0
        %1125 = vmatpush2.msra.mxu0 0.0
        %1126 = vmatprep.subr.mxu0 0.0
        %1127 = vmatpush2.msra.mxu0 0.0
        %1128 = vmatprep.subr.mxu0 0.0
        %1129 = vmatpush2.msra.mxu0 0.0
        %1130 = vmatprep.subr.mxu0 0.0
        %1131 = vmatpush2.msra.mxu0 0.0
        %1132 = vmatprep.subr.mxu0 0.0
        %1133 = vmatpush2.msra.mxu0 0.0
        %1134 = vmatprep.subr.mxu0 0.0
        %1135 = vmatpush2.msra.mxu0 0.0
        %1136 = vmatprep.mubr.f32.mxu0 0.0
        %1137 = vmatmul.mubr.f32.gmra.mxu0 %v1070
        %v1138 = vpop.f32.mrf.mxu0
        %v1139 = vadd.f32 %v1003, %v1138
        %v1140 = vpop.f32.mrf.mxu0
        %1141 = vdwg.mxu0
        %v1142 = vsel %vm517, %v1139, -inf
        %1143 = vmax.xlane.f32.xlu0 %v1142
        %v1144 = vpop.xlane.xlu0 %1143
        %v1145 = vsub.f32 %v1139, %v1144
        %v1146 = vmul.f32 %v1145, 1.442695
        %v1147 = vpow.pop %v1146
        %v1148 = vsel %vm517, %v1147, 0.0
        %1149 = vadd.xlane.f32.xlu0 %v1148
        %v1150 = vpop.xlane.xlu0 %1149
        %v1151 = vrcp.pop %v1150
        %v1152 = vmul.f32 %v1147, %v1151
        %v1154 = vsel %vm529, %v1152, 0
        %v1157 = vsel %vm533, %v1005, 0
        %1159 = vmatprep.subr.mxu0 0.0
        %1160 = vmatpush1.msra.mxu0 0.0
        %1161 = vmatprep.subr.mxu0 0.0
        %1162 = vmatpush1.msra.mxu0 0.0
        %1163 = vmatprep.subr.mxu0 0.0
        %1164 = vmatpush1.msra.mxu0 0.0
        %1165 = vmatprep.subr.mxu0 0.0
        %1166 = vmatpush1.msra.mxu0 0.0
        %1167 = vmatprep.subr.mxu0 0.0
        %1168 = vmatpush1.msra.mxu0 0.0
        %1169 = vmatprep.subr.mxu0 0.0
        %1170 = vmatpush1.msra.mxu0 0.0
        %1171 = vmatprep.subr.mxu0 0.0
        %1172 = vmatpush1.msra.mxu0 0.0
        %1173 = vmatprep.subr.mxu0 0.0
        %1174 = vmatpush1.msra.mxu0 0.0
        %1175 = vmatprep.subr.mxu0 0.0
        %1176 = vmatpush1.msra.mxu0 0.0
        %1177 = vmatprep.subr.mxu0 0.0
        %1178 = vmatpush1.msra.mxu0 0.0
        %1179 = vmatprep.subr.mxu0 0.0
        %1180 = vmatpush1.msra.mxu0 0.0
        %1181 = vmatprep.subr.mxu0 0.0
        %1182 = vmatpush1.msra.mxu0 0.0
        %1183 = vmatprep.subr.mxu0 0.0
        %1184 = vmatpush1.msra.mxu0 0.0
        %1185 = vmatprep.subr.mxu0 0.0
        %1186 = vmatpush1.msra.mxu0 0.0
        %1187 = vmatprep.subr.mxu0 0.0
        %1188 = vmatpush1.msra.mxu0 0.0
        %1189 = vmatprep.subr.mxu0 0.0
        %1190 = vmatpush1.msra.mxu0 %v1157
        %1191 = vmatprep.subr.mxu0 0.0
        %1192 = vmatpush2.msra.mxu0 0.0
        %1193 = vmatprep.subr.mxu0 0.0
        %1194 = vmatpush2.msra.mxu0 0.0
        %1195 = vmatprep.subr.mxu0 0.0
        %1196 = vmatpush2.msra.mxu0 0.0
        %1197 = vmatprep.subr.mxu0 0.0
        %1198 = vmatpush2.msra.mxu0 0.0
        %1199 = vmatprep.subr.mxu0 0.0
        %1200 = vmatpush2.msra.mxu0 0.0
        %1201 = vmatprep.subr.mxu0 0.0
        %1202 = vmatpush2.msra.mxu0 0.0
        %1203 = vmatprep.subr.mxu0 0.0
        %1204 = vmatpush2.msra.mxu0 0.0
        %1205 = vmatprep.subr.mxu0 0.0
        %1206 = vmatpush2.msra.mxu0 0.0
        %1207 = vmatprep.subr.mxu0 0.0
        %1208 = vmatpush2.msra.mxu0 0.0
        %1209 = vmatprep.subr.mxu0 0.0
        %1210 = vmatpush2.msra.mxu0 0.0
        %1211 = vmatprep.subr.mxu0 0.0
        %1212 = vmatpush2.msra.mxu0 0.0
        %1213 = vmatprep.subr.mxu0 0.0
        %1214 = vmatpush2.msra.mxu0 0.0
        %1215 = vmatprep.subr.mxu0 0.0
        %1216 = vmatpush2.msra.mxu0 0.0
        %1217 = vmatprep.subr.mxu0 0.0
        %1218 = vmatpush2.msra.mxu0 0.0
        %1219 = vmatprep.subr.mxu0 0.0
        %1220 = vmatpush2.msra.mxu0 0.0
        %1221 = vmatprep.subr.mxu0 0.0
        %1222 = vmatpush2.msra.mxu0 0.0
        %1223 = vmatprep.mubr.f32.mxu0 0.0
        %1224 = vmatmul.mubr.f32.gmra.mxu0 %v1154
        %v1225 = vpop.f32.mrf.mxu0
        %v1226 = vadd.f32 0.0, %v1225
        %v1227 = vpop.f32.mrf.mxu0
        %1228 = vdwg.mxu0
        %v1230 = vsel %vm533, %v1007, 0
        %1232 = vmatprep.subr.mxu0 0.0
        %1233 = vmatpush1.msra.mxu0 0.0
        %1234 = vmatprep.subr.mxu0 0.0
        %1235 = vmatpush1.msra.mxu0 0.0
        %1236 = vmatprep.subr.mxu0 0.0
        %1237 = vmatpush1.msra.mxu0 0.0
        %1238 = vmatprep.subr.mxu0 0.0
        %1239 = vmatpush1.msra.mxu0 0.0
        %1240 = vmatprep.subr.mxu0 0.0
        %1241 = vmatpush1.msra.mxu0 0.0
        %1242 = vmatprep.subr.mxu0 0.0
        %1243 = vmatpush1.msra.mxu0 0.0
        %1244 = vmatprep.subr.mxu0 0.0
        %1245 = vmatpush1.msra.mxu0 0.0
        %1246 = vmatprep.subr.mxu0 0.0
        %1247 = vmatpush1.msra.mxu0 0.0
        %1248 = vmatprep.subr.mxu0 0.0
        %1249 = vmatpush1.msra.mxu0 0.0
        %1250 = vmatprep.subr.mxu0 0.0
        %1251 = vmatpush1.msra.mxu0 0.0
        %1252 = vmatprep.subr.mxu0 0.0
        %1253 = vmatpush1.msra.mxu0 0.0
        %1254 = vmatprep.subr.mxu0 0.0
        %1255 = vmatpush1.msra.mxu0 0.0
        %1256 = vmatprep.subr.mxu0 0.0
        %1257 = vmatpush1.msra.mxu0 0.0
        %1258 = vmatprep.subr.mxu0 0.0
        %1259 = vmatpush1.msra.mxu0 0.0
        %1260 = vmatprep.subr.mxu0 0.0
        %1261 = vmatpush1.msra.mxu0 0.0
        %1262 = vmatprep.subr.mxu0 0.0
        %1263 = vmatpush1.msra.mxu0 %v1230
        %1264 = vmatprep.subr.mxu0 0.0
        %1265 = vmatpush2.msra.mxu0 0.0
        %1266 = vmatprep.subr.mxu0 0.0
        %1267 = vmatpush2.msra.mxu0 0.0
        %1268 = vmatprep.subr.mxu0 0.0
        %1269 = vmatpush2.msra.mxu0 0.0
        %1270 = vmatprep.subr.mxu0 0.0
        %1271 = vmatpush2.msra.mxu0 0.0
        %1272 = vmatprep.subr.mxu0 0.0
        %1273 = vmatpush2.msra.mxu0 0.0
        %1274 = vmatprep.subr.mxu0 0.0
        %1275 = vmatpush2.msra.mxu0 0.0
        %1276 = vmatprep.subr.mxu0 0.0
        %1277 = vmatpush2.msra.mxu0 0.0
        %1278 = vmatprep.subr.mxu0 0.0
        %1279 = vmatpush2.msra.mxu0 0.0
        %1280 = vmatprep.subr.mxu0 0.0
        %1281 = vmatpush2.msra.mxu0 0.0
        %1282 = vmatprep.subr.mxu0 0.0
        %1283 = vmatpush2.msra.mxu0 0.0
        %1284 = vmatprep.subr.mxu0 0.0
        %1285 = vmatpush2.msra.mxu0 0.0
        %1286 = vmatprep.subr.mxu0 0.0
        %1287 = vmatpush2.msra.mxu0 0.0
        %1288 = vmatprep.subr.mxu0 0.0
        %1289 = vmatpush2.msra.mxu0 0.0
        %1290 = vmatprep.subr.mxu0 0.0
        %1291 = vmatpush2.msra.mxu0 0.0
        %1292 = vmatprep.subr.mxu0 0.0
        %1293 = vmatpush2.msra.mxu0 0.0
        %1294 = vmatprep.subr.mxu0 0.0
        %1295 = vmatpush2.msra.mxu0 0.0
        %1296 = vmatprep.mubr.f32.mxu0 0.0
        %1297 = vmatmul.mubr.f32.gmra.mxu0 %v1154
        %v1298 = vpop.f32.mrf.mxu0
        %v1299 = vadd.f32 0.0, %v1298
        %v1300 = vpop.f32.mrf.mxu0
        %1301 = vdwg.mxu0
        %v1302 = vlaneseq
        %v1303 = vshrl.u32 %v1302, 7
        %v1304 = vsub.s32 0, %v1303
        %v1305 = vrot.slane %v1226, %v1304
        %1307 = vbcast.lane.b32.xlu0 %v1305, 256
        %v1308 = vpop.permute.xlu0 %1307
        %v1309 = vmul.f32 %v1308, %v999
        %v1310 = vrot.slane %v1309, 4
        %v1311 = vadd.f32 %v1309, %v1310
        %v1312 = vrot.slane %v1311, 2
        %v1313 = vadd.f32 %v1311, %v1312
        %v1314 = vrot.slane %v1313, 1
        %v1315 = vadd.f32 %v1313, %v1314
        %1317 = vset.pattern.permute.xlu0 0
        %1318 = vperm.xlu0 %1317, %v1299
        %v1319 = vpop.permute.xlu0 %1318
        %v1321 = vadd.f32 %v1315, %v1319
        %v1322 = vxor.u32 %v1321, 2147483648
        %v1323 = vmul.f32 %v1322, 1.442695
        %v1324 = vpow.pop %v1323
        %v1325 = vadd.f32 %v1324, 1.0
        %v1326 = vrcp.pop %v1325
        %v1327 = vmul.f32 1.0, %v1326
        %v1328 = vlaneseq
        %v1329 = vshrl.u32 %v1328, 7
        %v1330 = vsub.s32 0, %v1329
        %v1331 = vrot.slane %v1327, %v1330
        %v1332 = vmul.f32 %v1331, %v999
        %v1333 = vadd.f32 %v1332, %v999
        %v1334 = vpack.c.bf16 %v1333, %v1333
        %v1336 = vlaneseq
        %v1337 = vshrl.u32 %v1336, 7
        %v1338 = vsub.s32 0, %v1337
        %v1339 = vrot.slane %v1026, %v1338
        %v1340 = vlaneseq
        %v1341 = vshrl.u32 %v1340, 7
        %v1342 = vsub.s32 1, %v1341
        %v1343 = vrot.slane %v1026, %v1342
        %v1362 = vunpack.c.l.b16 %v1009
        %v1363 = vunpack.c.h.b16 %v1009
        %v1364 = vunpack.c.l.b16 %v1010
        %v1365 = vunpack.c.h.b16 %v1010
        %v1366 = vunpack.c.l.b16 %v1011
        %v1367 = vunpack.c.h.b16 %v1011
        %v1368 = vunpack.c.l.b16 %v1012
        %v1369 = vunpack.c.h.b16 %v1012
        %v1370 = vunpack.c.l.b16 %v1013
        %v1371 = vunpack.c.h.b16 %v1013
        %v1372 = vunpack.c.l.b16 %v1014
        %v1373 = vunpack.c.h.b16 %v1014
        %v1374 = vunpack.c.l.b16 %v1015
        %v1375 = vunpack.c.h.b16 %v1015
        %v1376 = vunpack.c.l.b16 %v1016
        %v1377 = vunpack.c.h.b16 %v1016
        %v1378 = vunpack.c.l.b16 %v1017
        %v1379 = vunpack.c.h.b16 %v1017
        %v1380 = vunpack.c.l.b16 %v1018
        %v1381 = vunpack.c.h.b16 %v1018
        %v1382 = vunpack.c.l.b16 %v1019
        %v1383 = vunpack.c.h.b16 %v1019
        %v1384 = vunpack.c.l.b16 %v1020
        %v1385 = vunpack.c.h.b16 %v1020
        %v1386 = vunpack.c.l.b16 %v1021
        %v1387 = vunpack.c.h.b16 %v1021
        %v1388 = vunpack.c.l.b16 %v1022
        %v1389 = vunpack.c.h.b16 %v1022
        %v1390 = vunpack.c.l.b16 %v1023
        %v1391 = vunpack.c.h.b16 %v1023
        %v1392 = vunpack.c.l.b16 %v1024
        %v1393 = vunpack.c.h.b16 %v1024
        %v1394 = vpack.c.b16 %v1364, %v1362
        %v1395 = vpack.c.b16 %v1365, %v1363
        %v1396 = vpack.c.b16 %v1368, %v1366
        %v1397 = vpack.c.b16 %v1369, %v1367
        %v1398 = vpack.c.b16 %v1372, %v1370
        %v1399 = vpack.c.b16 %v1373, %v1371
        %v1400 = vpack.c.b16 %v1376, %v1374
        %v1401 = vpack.c.b16 %v1377, %v1375
        %v1402 = vpack.c.b16 %v1380, %v1378
        %v1403 = vpack.c.b16 %v1381, %v1379
        %v1404 = vpack.c.b16 %v1384, %v1382
        %v1405 = vpack.c.b16 %v1385, %v1383
        %v1406 = vpack.c.b16 %v1388, %v1386
        %v1407 = vpack.c.b16 %v1389, %v1387
        %v1408 = vpack.c.b16 %v1392, %v1390
        %v1409 = vpack.c.b16 %v1393, %v1391
        %1426 = vmatprep.subr.bf16.mxu0 %v1409
        %1427 = vmatpush1.bf16.msra.mxu0 %v1408
        %1428 = vmatprep.subr.bf16.mxu0 %v1407
        %1429 = vmatpush1.bf16.msra.mxu0 %v1406
        %1430 = vmatprep.subr.bf16.mxu0 %v1405
        %1431 = vmatpush1.bf16.msra.mxu0 %v1404
        %1432 = vmatprep.subr.bf16.mxu0 %v1403
        %1433 = vmatpush1.bf16.msra.mxu0 %v1402
        %1434 = vmatprep.subr.bf16.mxu0 %v1401
        %1435 = vmatpush1.bf16.msra.mxu0 %v1400
        %1436 = vmatprep.subr.bf16.mxu0 %v1399
        %1437 = vmatpush1.bf16.msra.mxu0 %v1398
        %1438 = vmatprep.subr.bf16.mxu0 %v1397
        %1439 = vmatpush1.bf16.msra.mxu0 %v1396
        %1440 = vmatprep.subr.bf16.mxu0 %v1395
        %1441 = vmatpush1.bf16.msra.mxu0 %v1394
        %1442 = vmatprep.subr.bf16.mxu0 0
        %1443 = vmatpush2.bf16.msra.mxu0 0
        %1444 = vmatprep.subr.bf16.mxu0 0
        %1445 = vmatpush2.bf16.msra.mxu0 0
        %1446 = vmatprep.subr.bf16.mxu0 0
        %1447 = vmatpush2.bf16.msra.mxu0 0
        %1448 = vmatprep.subr.bf16.mxu0 0
        %1449 = vmatpush2.bf16.msra.mxu0 0
        %1450 = vmatprep.subr.bf16.mxu0 0
        %1451 = vmatpush2.bf16.msra.mxu0 0
        %1452 = vmatprep.subr.bf16.mxu0 0
        %1453 = vmatpush2.bf16.msra.mxu0 0
        %1454 = vmatprep.subr.bf16.mxu0 0
        %1455 = vmatpush2.bf16.msra.mxu0 0
        %1456 = vmatprep.subr.bf16.mxu0 0
        %1457 = vmatpush2.bf16.msra.mxu0 0
        %1458 = vmatprep.mubr.bf16.mxu0 0
        %1459 = vmatmul.mubr.bf16.gmra.mxu0 %v1334
        %v1460 = vpop.f32.mrf.mxu0
        %v1461 = vadd.f32 %v1339, %v1460
        %v1462 = vpop.f32.mrf.mxu0
        %v1463 = vadd.f32 %v1343, %v1462
        %v1464 = vpop.f32.mrf.mxu0
        %v1465 = vpop.f32.mrf.mxu0
        %1466 = vdwg.mxu0
        %v1467 = vmul.f32 %v1461, 0.5
        %v1468 = vmul.f32 %v1463, 0.5
        %v1469 = vmul.f32 %v1461, 0.70710677
        %v1470 = vmul.f32 %v1463, 0.70710677
        %v1471 = verf.f32.pop %v1469
        %v1472 = verf.f32.pop %v1470
        %v1473 = vadd.f32 %v1471, 1.0
        %v1474 = vadd.f32 %v1472, 1.0
        %v1475 = vmul.f32 %v1467, %v1473
        %v1476 = vmul.f32 %v1468, %v1474
        %v1477 = vpack.c.bf16 %v1475, %v1475
        %v1478 = vpack.c.bf16 %v1476, %v1476
        %v1480 = vlaneseq
        %v1481 = vshrl.u32 %v1480, 7
        %v1482 = vsub.s32 0, %v1481
        %v1483 = vrot.slane %v1061, %v1482
        %v1517 = vunpack.c.l.b16 %v1028
        %v1518 = vunpack.c.l.b16 %v1029
        %v1519 = vunpack.c.l.b16 %v1030
        %v1520 = vunpack.c.l.b16 %v1031
        %v1521 = vunpack.c.l.b16 %v1032
        %v1522 = vunpack.c.l.b16 %v1033
        %v1523 = vunpack.c.l.b16 %v1034
        %v1524 = vunpack.c.l.b16 %v1035
        %v1525 = vunpack.c.l.b16 %v1036
        %v1526 = vunpack.c.l.b16 %v1037
        %v1527 = vunpack.c.l.b16 %v1038
        %v1528 = vunpack.c.l.b16 %v1039
        %v1529 = vunpack.c.l.b16 %v1040
        %v1530 = vunpack.c.l.b16 %v1041
        %v1531 = vunpack.c.l.b16 %v1042
        %v1532 = vunpack.c.l.b16 %v1043
        %v1533 = vunpack.c.l.b16 %v1044
        %v1534 = vunpack.c.l.b16 %v1045
        %v1535 = vunpack.c.l.b16 %v1046
        %v1536 = vunpack.c.l.b16 %v1047
        %v1537 = vunpack.c.l.b16 %v1048
        %v1538 = vunpack.c.l.b16 %v1049
        %v1539 = vunpack.c.l.b16 %v1050
        %v1540 = vunpack.c.l.b16 %v1051
        %v1541 = vunpack.c.l.b16 %v1052
        %v1542 = vunpack.c.l.b16 %v1053
        %v1543 = vunpack.c.l.b16 %v1054
        %v1544 = vunpack.c.l.b16 %v1055
        %v1545 = vunpack.c.l.b16 %v1056
        %v1546 = vunpack.c.l.b16 %v1057
        %v1547 = vunpack.c.l.b16 %v1058
        %v1548 = vunpack.c.l.b16 %v1059
        %v1549 = vpack.c.b16 %v1518, %v1517
        %v1550 = vpack.c.b16 %v1520, %v1519
        %v1551 = vpack.c.b16 %v1522, %v1521
        %v1552 = vpack.c.b16 %v1524, %v1523
        %v1553 = vpack.c.b16 %v1526, %v1525
        %v1554 = vpack.c.b16 %v1528, %v1527
        %v1555 = vpack.c.b16 %v1530, %v1529
        %v1556 = vpack.c.b16 %v1532, %v1531
        %v1557 = vpack.c.b16 %v1534, %v1533
        %v1558 = vpack.c.b16 %v1536, %v1535
        %v1559 = vpack.c.b16 %v1538, %v1537
        %v1560 = vpack.c.b16 %v1540, %v1539
        %v1561 = vpack.c.b16 %v1542, %v1541
        %v1562 = vpack.c.b16 %v1544, %v1543
        %v1563 = vpack.c.b16 %v1546, %v1545
        %v1564 = vpack.c.b16 %v1548, %v1547
        %1581 = vmatprep.subr.bf16.mxu0 0
        %1582 = vmatpush1.bf16.msra.mxu0 %v1556
        %1583 = vmatprep.subr.bf16.mxu0 0
        %1584 = vmatpush1.bf16.msra.mxu0 %v1555
        %1585 = vmatprep.subr.bf16.mxu0 0
        %1586 = vmatpush1.bf16.msra.mxu0 %v1554
        %1587 = vmatprep.subr.bf16.mxu0 0
        %1588 = vmatpush1.bf16.msra.mxu0 %v1553
        %1589 = vmatprep.subr.bf16.mxu0 0
        %1590 = vmatpush1.bf16.msra.mxu0 %v1552
        %1591 = vmatprep.subr.bf16.mxu0 0
        %1592 = vmatpush1.bf16.msra.mxu0 %v1551
        %1593 = vmatprep.subr.bf16.mxu0 0
        %1594 = vmatpush1.bf16.msra.mxu0 %v1550
        %1595 = vmatprep.subr.bf16.mxu0 0
        %1596 = vmatpush1.bf16.msra.mxu0 %v1549
        %1597 = vmatprep.subr.bf16.mxu0 0
        %1598 = vmatpush2.bf16.msra.mxu0 %v1564
        %1599 = vmatprep.subr.bf16.mxu0 0
        %1600 = vmatpush2.bf16.msra.mxu0 %v1563
        %1601 = vmatprep.subr.bf16.mxu0 0
        %1602 = vmatpush2.bf16.msra.mxu0 %v1562
        %1603 = vmatprep.subr.bf16.mxu0 0
        %1604 = vmatpush2.bf16.msra.mxu0 %v1561
        %1605 = vmatprep.subr.bf16.mxu0 0
        %1606 = vmatpush2.bf16.msra.mxu0 %v1560
        %1607 = vmatprep.subr.bf16.mxu0 0
        %1608 = vmatpush2.bf16.msra.mxu0 %v1559
        %1609 = vmatprep.subr.bf16.mxu0 0
        %1610 = vmatpush2.bf16.msra.mxu0 %v1558
        %1611 = vmatprep.subr.bf16.mxu0 0
        %1612 = vmatpush2.bf16.msra.mxu0 %v1557
        %1613 = vmatprep.mubr.bf16.mxu0 %v1478
        %1614 = vmatmul.mubr.bf16.gmra.mxu0 %v1477
        %v1615 = vpop.f32.mrf.mxu0
        %v1616 = vadd.f32 %v1483, %v1615
        %v1617 = vpop.f32.mrf.mxu0
        %v1618 = vpop.f32.mrf.mxu0
        %v1619 = vpop.f32.mrf.mxu0
        %1620 = vdwg.mxu0
        %v1621 = vadd.f32 %v1616, %v1333
        %1622 = vst [vmem:[%s376] sm:$0xff] %v1621
        %s1623 = sand.u32 %s229, 1
        %s1624 = scalar_lea.sflag [#allocation4], %s1623
        %s1625 = sand.u32 %s229, 1
        %s1626 = smul.addr %s1625, 8
        %s1627 = scalar_lea.vmem [#allocation8], %s1626
        // Predicated region
        $region69: #{tpu_custom_call.1} parent=55 // pred_check
          %p1628 = pneg %p239
        $region70: #{tpu_custom_call.1} parent=55 // pred_check_branch
          %1630 = sbr.rel (%p1628) target = $region72
        $region71: #{tpu_custom_call.1} parent=55 // pred_region
          %s1632 = ssub.s32 128, 128
          %1633 = vsyncadd %s1624, %s1632
          %s1634 = smul.addr %s27, 128
          %s1635 = scalar_lea.hbm %s9, %s1634
          %s1637 = sshll.u32 %s1627, 4
          %s1638 = int_to_ptr.vmem [resolvable:$true] %s1637
          %1640 = dma.vmem_to_hbm [thread:$0]  %s1638, 128, %s1635, %s1624
        $region72: #{tpu_custom_call.1} parent=55 // pred_fallthru
          _
      $region56: #{tpu_custom_call.1} parent=5 // pred_fallthru
        _
      %p1641 = scmp.le.s32.totalorder 2, %s22
      // Predicated region
      $region73: #{tpu_custom_call.1} parent=5 // pred_check
        %p1642 = pneg %p1641
      $region74: #{tpu_custom_call.1} parent=5 // pred_check_branch
        %1644 = sbr.rel (%p1642) target = $region76
      $region75: #{tpu_custom_call.1} parent=5 // pred_region
        %s1645 = ssub.s32 %s22, 2
        // Predicated region
        $region77: #{tpu_custom_call.1} parent=75 // pred_check
          %p1646 = pneg %p245
        $region78: #{tpu_custom_call.1} parent=75 // pred_check_branch
          %1648 = sbr.rel (%p1646) target = $region80
        $region79: #{tpu_custom_call.1} parent=75 // pred_region
          %s1649 = sand.u32 %s230, 1
          %s1650 = scalar_lea.sflag [#allocation4], %s1649
          %s1651 = sand.u32 %s230, 1
          %s1652 = smul.addr %s1651, 8
          %s1653 = scalar_lea.vmem [#allocation8], %s1652
          %1654 = dma.done %s1650, 128
        $region80: #{tpu_custom_call.1} parent=75 // pred_fallthru
          _
      $region76: #{tpu_custom_call.1} parent=5 // pred_fallthru
        _
    $region6: #{tpu_custom_call.1} parent=1 // loop_footer
      %s26 = sadd.s32 1, %s22
    $region7: #{tpu_custom_call.1} parent=1 // loop_footer_branch
      %21 = sbr.rel target = $region3
    $region8: #{tpu_custom_call.1} parent=1 // loop_exit
      _
    %1655 = vsyncpa [#allocation3], 1
    %s1656 = scalar_lea.sflag [#allocation3], 1
    %1657 = vsyncpa %s1656, 1
    %1658 = vsyncpa [#allocation6], 1
    %1659 = vsyncpa [#allocation4], 1
    %s1660 = scalar_lea.sflag [#allocation4], 1
    %1661 = vsyncpa %s1660, 1

// kernel: tpu_custom_call.1
$region0: #{tpu_custom_call.1}
  #allocation0 [shape = 'u32[]', space=smem, size = 0x4, offset = 0x4, fixed_abs, tag = 'smem constant byte address 0x4 - core index']
  #allocation1 [shape = 'u32[144,128]{1,0:T(1,128)}', space=vmem, size = 0x12000, scoped, tag = 'internal scratch']
  %s0 = inlined_call_operand.hbm [shape: f32[2,8,128], index: 0, kind: input, shape index: {}, may-alias: {0,9}]
  %s1 = inlined_call_operand.vmem [shape: f32[2,8,4], index: 1, kind: input, shape index: {}]
  %s2 = inlined_call_operand.vmem [shape: f32[2,1,4], index: 2, kind: input, shape index: {}]
  %s3 = inlined_call_operand.vmem [shape: f32[2,4,8], index: 3, kind: input, shape index: {}]
  %s4 = inlined_call_operand.vmem [shape: f32[2,4,1], index: 4, kind: input, shape index: {}]
  %s5 = inlined_call_operand.hbm [shape: bf16[2,128,256], index: 5, kind: input, shape index: {}]
  %s6 = inlined_call_operand.vmem [shape: f32[2,1,256], index: 6, kind: input, shape index: {}]
  %s7 = inlined_call_operand.hbm [shape: bf16[2,256,128], index: 7, kind: input, shape index: {}]
  %s8 = inlined_call_operand.vmem [shape: f32[2,1,128], index: 8, kind: input, shape index: {}]
  %s9 = inlined_call_operand.hbm [shape: f32[2,8,128], index: 9, kind: output, shape index: {}, may-alias: {0,9}]
  %s10 = sld [smem:[#allocation0]]
  $region81: #{tpu_custom_call.1} parent=0
    _
  %s12 = ssub.s32 1, %s10
  %s13 = scalar_select 0, %s12, %s10
  $region1: #{tpu_custom_call.1} parent=0
    #allocation2 [shape = 'u8[8192]{0}', space=vmem, size = 0x2000, scoped, tag = 'input window, operand 0']
    #allocation3 [shape = 's32[2]{0}', space=sflag, size = 0x8, scoped, tag = 'scoped memory for tpu_custom_call.1']
    #allocation4 [shape = 's32[2]{0}', space=sflag, size = 0x8, scoped, tag = 'scoped memory for tpu_custom_call.1']
    #allocation5 [shape = 'u8[131072]{0}', space=vmem, size = 0x20000, scoped, tag = 'input window, operand 5, single buffered']
    #allocation6 [shape = 's32[1]{0}', space=sflag, size = 0x4, scoped, tag = 'scoped memory for tpu_custom_call.1']
    #allocation7 [shape = 'u8[131072]{0}', space=vmem, size = 0x20000, scoped, tag = 'input window, operand 7, single buffered']
    #allocation8 [shape = 'u8[8192]{0}', space=vmem, size = 0x2000, scoped, tag = 'output window, operand 0']
    %14 = vsyncpa [#allocation3], 0
    %s15 = scalar_lea.sflag [#allocation3], 1
    %16 = vsyncpa %s15, 0
    %17 = vsyncpa [#allocation6], 0
    %18 = vsyncpa [#allocation4], 0
    %s19 = scalar_lea.sflag [#allocation4], 1
    %20 = vsyncpa %s19, 0
    loop: start=0, step=1, limit=4
    $region2: #{tpu_custom_call.1} parent=1 // loop_pre_header
      _
    $region3: #{tpu_custom_call.1} parent=1 // loop_header
      %s22 = sphi 0, %s26
      %p23 = scmp.ge.s32.totalorder %s22, 4
      %s32 = sphi 0, %s34
      %s35 = sphi 0, %s32
      %s36 = sphi 0, %s35
      %s52 = sphi 0, %s36
      %s56 = sphi 0, %s56
      %s58 = sphi 0, %s56
      %s59 = sphi 0, %s58
      %s73 = sphi 0, %s59
      %s77 = sphi 0, %s77
      %s79 = sphi 0, %s77
      %s80 = sphi 0, %s79
      %s94 = sphi 0, %s80
      %s98 = sphi 0, %s98
      %s100 = sphi 0, %s98
      %s101 = sphi 0, %s100
      %s115 = sphi 0, %s101
      %s119 = sphi 0, %s119
      %s121 = sphi 0, %s119
      %s122 = sphi 0, %s121
      %s136 = sphi 0, %s122
      %s140 = sphi 0, %s140
      %s142 = sphi 0, %s140
      %s143 = sphi 0, %s142
      %s157 = sphi 0, %s143
      %s161 = sphi 0, %s161
      %s163 = sphi 0, %s161
      %s164 = sphi 0, %s163
      %s178 = sphi 0, %s164
      %s182 = sphi 0, %s182
      %s184 = sphi 0, %s182
      %s185 = sphi 0, %s184
      %s199 = sphi 0, %s185
      %s203 = sphi 0, %s203
      %s205 = sphi 0, %s203
      %s206 = sphi 0, %s205
      %s220 = sphi 0, %s206
      %s226 = sphi 0, %s228
      %s229 = sphi 0, %s226
      %s230 = sphi 0, %s229
      %s246 = sphi 0, %s230
    $region4: #{tpu_custom_call.1} parent=1 // loop_header_branch
      %25 = sbr.rel (%p23) target = $region8
    $region5: #{tpu_custom_call.1} parent=1 // loop_body
      %s27 = ssub.s32 %s22, 1
      %s28 = ssub.s32 %s22, 2
      %s29 = sadd.s32 %s22, 1
      %s30 = ssub.s32 %s22, %s29
      %p31 = scmp.eq.s32.totalorder %s30, 0
      %s33 = sadd.s32 %s32, 1
      %s34 = scalar_select %p31, %s32, %s33
      %p37 = pneg %p31
      %p38 = scmp.eq.s32.totalorder %s22, 1
      %p39 = por %p37, %p38
      %p40 = scmp.ne.s32.totalorder %s32, %s35
      %p41 = scmp.eq.s32.totalorder %s22, 0
      %p42 = por %p40, %p41
      %p43 = scmp.ne.s32.totalorder %s32, %s35
      %p44 = scmp.eq.s32.totalorder %s27, 1
      %p45 = por %p43, %p44
      %p46 = scmp.ne.s32.totalorder %s35, %s36
      %p47 = scmp.eq.s32.totalorder %s27, 0
      %p48 = por %p46, %p47
      %p49 = scmp.ne.s32.totalorder %s35, %s36
      %p50 = scmp.eq.s32.totalorder %s28, 1
      %p51 = por %p49, %p50
      %p53 = scmp.ne.s32.totalorder %s36, %s52
      %p54 = scmp.eq.s32.totalorder %s28, 0
      %p55 = por %p53, %p54
      %s57 = sadd.s32 %s56, 1
      %p60 = scmp.eq.s32.totalorder %s22, 1
      %p61 = scmp.ne.s32.totalorder %s56, %s58
      %p62 = scmp.eq.s32.totalorder %s22, 0
      %p63 = por %p61, %p62
      %p64 = scmp.ne.s32.totalorder %s56, %s58
      %p65 = scmp.eq.s32.totalorder %s27, 1
      %p66 = por %p64, %p65
      %p67 = scmp.ne.s32.totalorder %s58, %s59
      %p68 = scmp.eq.s32.totalorder %s27, 0
      %p69 = por %p67, %p68
      %p70 = scmp.ne.s32.totalorder %s58, %s59
      %p71 = scmp.eq.s32.totalorder %s28, 1
      %p72 = por %p70, %p71
      %p74 = scmp.ne.s32.totalorder %s59, %s73
      %p75 = scmp.eq.s32.totalorder %s28, 0
      %p76 = por %p74, %p75
      %s78 = sadd.s32 %s77, 1
      %p81 = scmp.eq.s32.totalorder %s22, 1
      %p82 = scmp.ne.s32.totalorder %s77, %s79
      %p83 = scmp.eq.s32.totalorder %s22, 0
      %p84 = por %p82, %p83
      %p85 = scmp.ne.s32.totalorder %s77, %s79
      %p86 = scmp.eq.s32.totalorder %s27, 1
      %p87 = por %p85, %p86
      %p88 = scmp.ne.s32.totalorder %s79, %s80
      %p89 = scmp.eq.s32.totalorder %s27, 0
      %p90 = por %p88, %p89
      %p91 = scmp.ne.s32.totalorder %s79, %s80
      %p92 = scmp.eq.s32.totalorder %s28, 1
      %p93 = por %p91, %p92
      %p95 = scmp.ne.s32.totalorder %s80, %s94
      %p96 = scmp.eq.s32.totalorder %s28, 0
      %p97 = por %p95, %p96
      %s99 = sadd.s32 %s98, 1
      %p102 = scmp.eq.s32.totalorder %s22, 1
      %p103 = scmp.ne.s32.totalorder %s98, %s100
      %p104 = scmp.eq.s32.totalorder %s22, 0
      %p105 = por %p103, %p104
      %p106 = scmp.ne.s32.totalorder %s98, %s100
      %p107 = scmp.eq.s32.totalorder %s27, 1
      %p108 = por %p106, %p107
      %p109 = scmp.ne.s32.totalorder %s100, %s101
      %p110 = scmp.eq.s32.totalorder %s27, 0
      %p111 = por %p109, %p110
      %p112 = scmp.ne.s32.totalorder %s100, %s101
      %p113 = scmp.eq.s32.totalorder %s28, 1
      %p114 = por %p112, %p113
      %p116 = scmp.ne.s32.totalorder %s101, %s115
      %p117 = scmp.eq.s32.totalorder %s28, 0
      %p118 = por %p116, %p117
      %s120 = sadd.s32 %s119, 1
      %p123 = scmp.eq.s32.totalorder %s22, 1
      %p124 = scmp.ne.s32.totalorder %s119, %s121
      %p125 = scmp.eq.s32.totalorder %s22, 0
      %p126 = por %p124, %p125
      %p127 = scmp.ne.s32.totalorder %s119, %s121
      %p128 = scmp.eq.s32.totalorder %s27, 1
      %p129 = por %p127, %p128
      %p130 = scmp.ne.s32.totalorder %s121, %s122
      %p131 = scmp.eq.s32.totalorder %s27, 0
      %p132 = por %p130, %p131
      %p133 = scmp.ne.s32.totalorder %s121, %s122
      %p134 = scmp.eq.s32.totalorder %s28, 1
      %p135 = por %p133, %p134
      %p137 = scmp.ne.s32.totalorder %s122, %s136
      %p138 = scmp.eq.s32.totalorder %s28, 0
      %p139 = por %p137, %p138
      %s141 = sadd.s32 %s140, 1
      %p144 = scmp.eq.s32.totalorder %s22, 1
      %p145 = scmp.ne.s32.totalorder %s140, %s142
      %p146 = scmp.eq.s32.totalorder %s22, 0
      %p147 = por %p145, %p146
      %p148 = scmp.ne.s32.totalorder %s140, %s142
      %p149 = scmp.eq.s32.totalorder %s27, 1
      %p150 = por %p148, %p149
      %p151 = scmp.ne.s32.totalorder %s142, %s143
      %p152 = scmp.eq.s32.totalorder %s27, 0
      %p153 = por %p151, %p152
      %p154 = scmp.ne.s32.totalorder %s142, %s143
      %p155 = scmp.eq.s32.totalorder %s28, 1
      %p156 = por %p154, %p155
      %p158 = scmp.ne.s32.totalorder %s143, %s157
      %p159 = scmp.eq.s32.totalorder %s28, 0
      %p160 = por %p158, %p159
      %s162 = sadd.s32 %s161, 1
      %p165 = scmp.eq.s32.totalorder %s22, 1
      %p166 = scmp.ne.s32.totalorder %s161, %s163
      %p167 = scmp.eq.s32.totalorder %s22, 0
      %p168 = por %p166, %p167
      %p169 = scmp.ne.s32.totalorder %s161, %s163
      %p170 = scmp.eq.s32.totalorder %s27, 1
      %p171 = por %p169, %p170
      %p172 = scmp.ne.s32.totalorder %s163, %s164
      %p173 = scmp.eq.s32.totalorder %s27, 0
      %p174 = por %p172, %p173
      %p175 = scmp.ne.s32.totalorder %s163, %s164
      %p176 = scmp.eq.s32.totalorder %s28, 1
      %p177 = por %p175, %p176
      %p179 = scmp.ne.s32.totalorder %s164, %s178
      %p180 = scmp.eq.s32.totalorder %s28, 0
      %p181 = por %p179, %p180
      %s183 = sadd.s32 %s182, 1
      %p186 = scmp.eq.s32.totalorder %s22, 1
      %p187 = scmp.ne.s32.totalorder %s182, %s184
      %p188 = scmp.eq.s32.totalorder %s22, 0
      %p189 = por %p187, %p188
      %p190 = scmp.ne.s32.totalorder %s182, %s184
      %p191 = scmp.eq.s32.totalorder %s27, 1
      %p192 = por %p190, %p191
      %p193 = scmp.ne.s32.totalorder %s184, %s185
      %p194 = scmp.eq.s32.totalorder %s27, 0
      %p195 = por %p193, %p194
      %p196 = scmp.ne.s32.totalorder %s184, %s185
      %p197 = scmp.eq.s32.totalorder %s28, 1
      %p198 = por %p196, %p197
      %p200 = scmp.ne.s32.totalorder %s185, %s199
      %p201 = scmp.eq.s32.totalorder %s28, 0
      %p202 = por %p200, %p201
      %s204 = sadd.s32 %s203, 1
      %p207 = scmp.eq.s32.totalorder %s22, 1
      %p208 = scmp.ne.s32.totalorder %s203, %s205
      %p209 = scmp.eq.s32.totalorder %s22, 0
      %p210 = por %p208, %p209
      %p211 = scmp.ne.s32.totalorder %s203, %s205
      %p212 = scmp.eq.s32.totalorder %s27, 1
      %p213 = por %p211, %p212
      %p214 = scmp.ne.s32.totalorder %s205, %s206
      %p215 = scmp.eq.s32.totalorder %s27, 0
      %p216 = por %p214, %p215
      %p217 = scmp.ne.s32.totalorder %s205, %s206
      %p218 = scmp.eq.s32.totalorder %s28, 1
      %p219 = por %p217, %p218
      %p221 = scmp.ne.s32.totalorder %s206, %s220
      %p222 = scmp.eq.s32.totalorder %s28, 0
      %p223 = por %p221, %p222
      %s224 = ssub.s32 %s22, %s29
      %p225 = scmp.eq.s32.totalorder %s224, 0
      %s227 = sadd.s32 %s226, 1
      %s228 = scalar_select %p225, %s226, %s227
      %p231 = pneg %p225
      %p232 = scmp.eq.s32.totalorder %s22, 1
      %p233 = por %p231, %p232
      %p234 = scmp.ne.s32.totalorder %s226, %s229
      %p235 = scmp.eq.s32.totalorder %s22, 0
      %p236 = por %p234, %p235
      %p237 = scmp.ne.s32.totalorder %s226, %s229
      %p238 = scmp.eq.s32.totalorder %s27, 1
      %p239 = por %p237, %p238
      %p240 = scmp.ne.s32.totalorder %s229, %s230
      %p241 = scmp.eq.s32.totalorder %s27, 0
      %p242 = por %p240, %p241
      %p243 = scmp.ne.s32.totalorder %s229, %s230
      %p244 = scmp.eq.s32.totalorder %s28, 1
      %p245 = por %p243, %p244
      %p247 = scmp.ne.s32.totalorder %s230, %s246
      %p248 = scmp.eq.s32.totalorder %s28, 0
      %p249 = por %p247, %p248
      %p250 = scmp.le.s32.totalorder 1, %s22
      %p251 = scmp.lt.s32.totalorder %s22, 3
      %p252 = pnand %p250, %p251
      %p253 = pneg %p252
      // Predicated region
      $region9: #{tpu_custom_call.1} parent=5 // pred_check
        _
      $region10: #{tpu_custom_call.1} parent=5 // pred_check_branch
        %255 = sbr.rel (%p252) target = $region12
      $region11: #{tpu_custom_call.1} parent=5 // pred_region
        %s256 = ssub.s32 %s22, 1
        // Predicated region
        $region13: #{tpu_custom_call.1} parent=11 // pred_check
          %p257 = pneg %p69
        $region14: #{tpu_custom_call.1} parent=11 // pred_check_branch
          %259 = sbr.rel (%p257) target = $region16
        $region15: #{tpu_custom_call.1} parent=11 // pred_region
          _
        $region16: #{tpu_custom_call.1} parent=11 // pred_fallthru
          _
        // Predicated region
        $region17: #{tpu_custom_call.1} parent=11 // pred_check
          %p260 = pneg %p90
        $region18: #{tpu_custom_call.1} parent=11 // pred_check_branch
          %262 = sbr.rel (%p260) target = $region20
        $region19: #{tpu_custom_call.1} parent=11 // pred_region
          _
        $region20: #{tpu_custom_call.1} parent=11 // pred_fallthru
          _
        // Predicated region
        $region21: #{tpu_custom_call.1} parent=11 // pred_check
          %p263 = pneg %p111
        $region22: #{tpu_custom_call.1} parent=11 // pred_check_branch
          %265 = sbr.rel (%p263) target = $region24
        $region23: #{tpu_custom_call.1} parent=11 // pred_region
          _
        $region24: #{tpu_custom_call.1} parent=11 // pred_fallthru
          _
        // Predicated region
        $region25: #{tpu_custom_call.1} parent=11 // pred_check
          %p266 = pneg %p132
        $region26: #{tpu_custom_call.1} parent=11 // pred_check_branch
          %268 = sbr.rel (%p266) target = $region28
        $region27: #{tpu_custom_call.1} parent=11 // pred_region
          _
        $region28: #{tpu_custom_call.1} parent=11 // pred_fallthru
          _
        // Predicated region
        $region29: #{tpu_custom_call.1} parent=11 // pred_check
          %p269 = pneg %p153
        $region30: #{tpu_custom_call.1} parent=11 // pred_check_branch
          %271 = sbr.rel (%p269) target = $region32
        $region31: #{tpu_custom_call.1} parent=11 // pred_region
          %s273 = ssub.s32 4096, 4096
          %274 = vsyncadd [#allocation6], %s273
          %s275 = sshll.u32 [#allocation5], 4
          %s276 = int_to_ptr.vmem [resolvable:$true] %s275
          %281 = dma.hbm_to_vmem [thread:$0]  %s5, 4096, %s276, [#allocation6], 128, 128, 8
        $region32: #{tpu_custom_call.1} parent=11 // pred_fallthru
          _
        // Predicated region
        $region33: #{tpu_custom_call.1} parent=11 // pred_check
          %p282 = pneg %p174
        $region34: #{tpu_custom_call.1} parent=11 // pred_check_branch
          %284 = sbr.rel (%p282) target = $region36
        $region35: #{tpu_custom_call.1} parent=11 // pred_region
          _
        $region36: #{tpu_custom_call.1} parent=11 // pred_fallthru
          _
        // Predicated region
        $region37: #{tpu_custom_call.1} parent=11 // pred_check
          %p285 = pneg %p195
        $region38: #{tpu_custom_call.1} parent=11 // pred_check_branch
          %287 = sbr.rel (%p285) target = $region40
        $region39: #{tpu_custom_call.1} parent=11 // pred_region
          %s289 = ssub.s32 4096, 4096
          %290 = vsyncadd [#allocation6], %s289
          %s291 = sshll.u32 [#allocation7], 4
          %s292 = int_to_ptr.vmem [resolvable:$true] %s291
          %297 = dma.hbm_to_vmem [thread:$0]  %s7, 4096, %s292, [#allocation6], 64, 64, 4
        $region40: #{tpu_custom_call.1} parent=11 // pred_fallthru
          _
        // Predicated region
        $region41: #{tpu_custom_call.1} parent=11 // pred_check
          %p298 = pneg %p216
        $region42: #{tpu_custom_call.1} parent=11 // pred_check_branch
          %300 = sbr.rel (%p298) target = $region44
        $region43: #{tpu_custom_call.1} parent=11 // pred_region
          _
        $region44: #{tpu_custom_call.1} parent=11 // pred_fallthru
          _
      $region12: #{tpu_custom_call.1} parent=5 // pred_fallthru
        _
      %p301 = scmp.lt.s32.totalorder %s22, 2
      // Predicated region
      $region45: #{tpu_custom_call.1} parent=5 // pred_check
        %p302 = pneg %p301
      $region46: #{tpu_custom_call.1} parent=5 // pred_check_branch
        %304 = sbr.rel (%p302) target = $region48
      $region47: #{tpu_custom_call.1} parent=5 // pred_region
        // Predicated region
        $region49: #{tpu_custom_call.1} parent=47 // pred_check
          %p305 = pneg %p42
        $region50: #{tpu_custom_call.1} parent=47 // pred_check_branch
          %307 = sbr.rel (%p305) target = $region52
        $region51: #{tpu_custom_call.1} parent=47 // pred_region
          %s308 = sand.u32 %s32, 1
          %s309 = scalar_lea.sflag [#allocation3], %s308
          %s310 = sand.u32 %s32, 1
          %s311 = smul.addr %s310, 8
          %s312 = scalar_lea.vmem [#allocation2], %s311
          %s314 = ssub.s32 128, 128
          %315 = vsyncadd %s309, %s314
          %s316 = smul.addr %s22, 128
          %s317 = scalar_lea.hbm %s0, %s316
          %s319 = sshll.u32 %s312, 4
          %s320 = int_to_ptr.vmem [resolvable:$true] %s319
          %322 = dma.hbm_to_vmem [thread:$0]  %s317, 128, %s320, %s309
        $region52: #{tpu_custom_call.1} parent=47 // pred_fallthru
          _
      $region48: #{tpu_custom_call.1} parent=5 // pred_fallthru
        _
      %p323 = scmp.le.s32.totalorder 1, %s22
      %p324 = scmp.lt.s32.totalorder %s22, 3
      %p325 = pnand %p323, %p324
      %p326 = pneg %p325
      // Predicated region
      $region53: #{tpu_custom_call.1} parent=5 // pred_check
        _
      $region54: #{tpu_custom_call.1} parent=5 // pred_check_branch
        %328 = sbr.rel (%p325) target = $region56
      $region55: #{tpu_custom_call.1} parent=5 // pred_region
        %s329 = ssub.s32 %s22, 1
        %s330 = sand.u32 %s35, 1
        %s331 = scalar_lea.sflag [#allocation3], %s330
        %s332 = sand.u32 %s35, 1
        %s333 = smul.addr %s332, 8
        %s334 = scalar_lea.vmem [#allocation2], %s333
        // Predicated region
        $region57: #{tpu_custom_call.1} parent=55 // pred_check
          %p335 = pneg %p48
        $region58: #{tpu_custom_call.1} parent=55 // pred_check_branch
          %337 = sbr.rel (%p335) target = $region60
        $region59: #{tpu_custom_call.1} parent=55 // pred_region
          %338 = dma.done %s331, 128
        $region60: #{tpu_custom_call.1} parent=55 // pred_fallthru
          _
        // Predicated region
        $region61: #{tpu_custom_call.1} parent=55 // pred_check
          %p339 = pneg %p153
        $region62: #{tpu_custom_call.1} parent=55 // pred_check_branch
          %341 = sbr.rel (%p339) target = $region64
        $region63: #{tpu_custom_call.1} parent=55 // pred_region
          %342 = dma.done [#allocation6], 4096
        $region64: #{tpu_custom_call.1} parent=55 // pred_fallthru
          _
        // Predicated region
        $region65: #{tpu_custom_call.1} parent=55 // pred_check
          %p343 = pneg %p195
        $region66: #{tpu_custom_call.1} parent=55 // pred_check_branch
          %345 = sbr.rel (%p343) target = $region68
        $region67: #{tpu_custom_call.1} parent=55 // pred_region
          %346 = dma.done [#allocation6], 4096
        $region68: #{tpu_custom_call.1} parent=55 // pred_fallthru
          _
        %s347 = sand.u32 %s35, 1
        %s348 = scalar_lea.sflag [#allocation3], %s347
        %s349 = sand.u32 %s35, 1
        %s350 = smul.addr %s349, 8
        %s351 = scalar_lea.vmem [#allocation2], %s350
        %p352 = pneg %p48
        %p353 = pneg %p45
        %p354 = pneg %p69
        %p355 = pneg %p66
        %p356 = pneg %p90
        %p357 = pneg %p87
        %p358 = pneg %p111
        %p359 = pneg %p108
        %p360 = pneg %p132
        %p361 = pneg %p129
        %p362 = pneg %p153
        %p363 = pneg %p150
        %p364 = pneg %p174
        %p365 = pneg %p171
        %p366 = pneg %p195
        %p367 = pneg %p192
        %p368 = pneg %p216
        %p369 = pneg %p213
        %p370 = pneg %p242
        %p371 = pneg %p239
        %s372 = sand.u32 %s229, 1
        %s373 = scalar_lea.sflag [#allocation4], %s372
        %s374 = sand.u32 %s229, 1
        %s375 = smul.addr %s374, 8
        %s376 = scalar_lea.vmem [#allocation8], %s375
        %v378 = vld [vmem:[%s334] sm:$0xff]
        %v379 = vld [vmem:[%s1] sm:$0xff]
        %v380 = vld [vmem:[%s2] sm:$0x1]
        %v381 = vld [vmem:[%s3] sm:$0xf]
        %v382 = vld [vmem:[%s4] sm:$0xf]
        %v383 = vld [vmem:[#allocation5] sm:$0xff]
        %v384 = vld [vmem:[#allocation5 + $0x8] sm:$0xff]
        %v385 = vld [vmem:[#allocation5 + $0x10] sm:$0xff]
        %v386 = vld [vmem:[#allocation5 + $0x18] sm:$0xff]
        %v387 = vld [vmem:[#allocation5 + $0x20] sm:$0xff]
        %v388 = vld [vmem:[#allocation5 + $0x28] sm:$0xff]
        %v389 = vld [vmem:[#allocation5 + $0x30] sm:$0xff]
        %v390 = vld [vmem:[#allocation5 + $0x38] sm:$0xff]
        %v391 = vld [vmem:[#allocation5 + $0x40] sm:$0xff]
        %v392 = vld [vmem:[#allocation5 + $0x48] sm:$0xff]
        %v393 = vld [vmem:[#allocation5 + $0x50] sm:$0xff]
        %v394 = vld [vmem:[#allocation5 + $0x58] sm:$0xff]
        %v395 = vld [vmem:[#allocation5 + $0x60] sm:$0xff]
        %v396 = vld [vmem:[#allocation5 + $0x68] sm:$0xff]
        %v397 = vld [vmem:[#allocation5 + $0x70] sm:$0xff]
        %v398 = vld [vmem:[#allocation5 + $0x78] sm:$0xff]
        %v399 = vld [vmem:[%s6] sm:$0x3]
        %v400 = vld [vmem:[#allocation7] sm:$0xf]
        %v401 = vld [vmem:[#allocation7 + $0x4] sm:$0xf]
        %v402 = vld [vmem:[#allocation7 + $0x8] sm:$0xf]
        %v403 = vld [vmem:[#allocation7 + $0xc] sm:$0xf]
        %v404 = vld [vmem:[#allocation7 + $0x10] sm:$0xf]
        %v405 = vld [vmem:[#allocation7 + $0x14] sm:$0xf]
        %v406 = vld [vmem:[#allocation7 + $0x18] sm:$0xf]
        %v407 = vld [vmem:[#allocation7 + $0x1c] sm:$0xf]
        %v408 = vld [vmem:[#allocation7 + $0x20] sm:$0xf]
        %v409 = vld [vmem:[#allocation7 + $0x24] sm:$0xf]
        %v410 = vld [vmem:[#allocation7 + $0x28] sm:$0xf]
        %v411 = vld [vmem:[#allocation7 + $0x2c] sm:$0xf]
        %v412 = vld [vmem:[#allocation7 + $0x30] sm:$0xf]
        %v413 = vld [vmem:[#allocation7 + $0x34] sm:$0xf]
        %v414 = vld [vmem:[#allocation7 + $0x38] sm:$0xf]
        %v415 = vld [vmem:[#allocation7 + $0x3c] sm:$0xf]
        %v416 = vld [vmem:[#allocation7 + $0x40] sm:$0xf]
        %v417 = vld [vmem:[#allocation7 + $0x44] sm:$0xf]
        %v418 = vld [vmem:[#allocation7 + $0x48] sm:$0xf]
        %v419 = vld [vmem:[#allocation7 + $0x4c] sm:$0xf]
        %v420 = vld [vmem:[#allocation7 + $0x50] sm:$0xf]
        %v421 = vld [vmem:[#allocation7 + $0x54] sm:$0xf]
        %v422 = vld [vmem:[#allocation7 + $0x58] sm:$0xf]
        %v423 = vld [vmem:[#allocation7 + $0x5c] sm:$0xf]
        %v424 = vld [vmem:[#allocation7 + $0x60] sm:$0xf]
        %v425 = vld [vmem:[#allocation7 + $0x64] sm:$0xf]
        %v426 = vld [vmem:[#allocation7 + $0x68] sm:$0xf]
        %v427 = vld [vmem:[#allocation7 + $0x6c] sm:$0xf]
        %v428 = vld [vmem:[#allocation7 + $0x70] sm:$0xf]
        %v429 = vld [vmem:[#allocation7 + $0x74] sm:$0xf]
        %v430 = vld [vmem:[#allocation7 + $0x78] sm:$0xf]
        %v431 = vld [vmem:[#allocation7 + $0x7c] sm:$0xf]
        %v432 = vld [vmem:[%s8] sm:$0x1]
        %433 = vadd.xlane.f32.xlu0 %v378
        %v434 = vpop.xlane.xlu0 %433
        %v435 = vrcp.pop 128.0
        %v436 = vmul.f32 %v434, %v435
        %v438 = vlaneseq
        %v439 = vand.u32 %v438, 127
        %v440 = vlaneseq
        %v441 = vshrl.u32 %v440, 7
        %v442 = vsub.s32 %v439, %v441
        %v443 = vrot.slane %v436, %v442
        %vm444 = vcmask 64512
        %v445 = vsel %vm444, %v443, 0
        %447 = vmatprep.subr.mxu0 0.0
        %448 = vmatpush1.msra.mxu0 0.0
        %449 = vmatprep.subr.mxu0 0.0
        %450 = vmatpush1.msra.mxu0 0.0
        %451 = vmatprep.subr.mxu0 0.0
        %452 = vmatpush1.msra.mxu0 0.0
        %453 = vmatprep.subr.mxu0 0.0
        %454 = vmatpush1.msra.mxu0 0.0
        %455 = vmatprep.subr.mxu0 0.0
        %456 = vmatpush1.msra.mxu0 0.0
        %457 = vmatprep.subr.mxu0 0.0
        %458 = vmatpush1.msra.mxu0 0.0
        %459 = vmatprep.subr.mxu0 0.0
        %460 = vmatpush1.msra.mxu0 0.0
        %461 = vmatprep.subr.mxu0 0.0
        %462 = vmatpush1.msra.mxu0 0.0
        %463 = vmatprep.subr.mxu0 0.0
        %464 = vmatpush1.msra.mxu0 0.0
        %465 = vmatprep.subr.mxu0 0.0
        %466 = vmatpush1.msra.mxu0 0.0
        %467 = vmatprep.subr.mxu0 0.0
        %468 = vmatpush1.msra.mxu0 0.0
        %469 = vmatprep.subr.mxu0 0.0
        %470 = vmatpush1.msra.mxu0 0.0
        %471 = vmatprep.subr.mxu0 0.0
        %472 = vmatpush1.msra.mxu0 0.0
        %473 = vmatprep.subr.mxu0 0.0
        %474 = vmatpush1.msra.mxu0 0.0
        %475 = vmatprep.subr.mxu0 0.0
        %476 = vmatpush1.msra.mxu0 0.0
        %477 = vmatprep.subr.mxu0 0.0
        %478 = vmatpush1.msra.mxu0 %v379
        %479 = vmatprep.subr.mxu0 0.0
        %480 = vmatpush2.msra.mxu0 0.0
        %481 = vmatprep.subr.mxu0 0.0
        %482 = vmatpush2.msra.mxu0 0.0
        %483 = vmatprep.subr.mxu0 0.0
        %484 = vmatpush2.msra.mxu0 0.0
        %485 = vmatprep.subr.mxu0 0.0
        %486 = vmatpush2.msra.mxu0 0.0
        %487 = vmatprep.subr.mxu0 0.0
        %488 = vmatpush2.msra.mxu0 0.0
        %489 = vmatprep.subr.mxu0 0.0
        %490 = vmatpush2.msra.mxu0 0.0
        %491 = vmatprep.subr.mxu0 0.0
        %492 = vmatpush2.msra.mxu0 0.0
        %493 = vmatprep.subr.mxu0 0.0
        %494 = vmatpush2.msra.mxu0 0.0
        %495 = vmatprep.subr.mxu0 0.0
        %496 = vmatpush2.msra.mxu0 0.0
        %497 = vmatprep.subr.mxu0 0.0
        %498 = vmatpush2.msra.mxu0 0.0
        %499 = vmatprep.subr.mxu0 0.0
        %500 = vmatpush2.msra.mxu0 0.0
        %501 = vmatprep.subr.mxu0 0.0
        %502 = vmatpush2.msra.mxu0 0.0
        %503 = vmatprep.subr.mxu0 0.0
        %504 = vmatpush2.msra.mxu0 0.0
        %505 = vmatprep.subr.mxu0 0.0
        %506 = vmatpush2.msra.mxu0 0.0
        %507 = vmatprep.subr.mxu0 0.0
        %508 = vmatpush2.msra.mxu0 0.0
        %509 = vmatprep.subr.mxu0 0.0
        %510 = vmatpush2.msra.mxu0 0.0
        %511 = vmatprep.mubr.f32.mxu0 0.0
        %512 = vmatmul.mubr.f32.gmra.mxu0 %v445
        %v513 = vpop.f32.mrf.mxu0
        %v514 = vadd.f32 %v380, %v513
        %v515 = vpop.f32.mrf.mxu0
        %516 = vdwg.mxu0
        %vm517 = vcmask 24576
        %v518 = vsel %vm517, %v514, -inf
        %519 = vmax.xlane.f32.xlu0 %v518
        %v520 = vpop.xlane.xlu0 %519
        %v521 = vsub.f32 %v514, %v520
        %v522 = vmul.f32 %v521, 1.442695
        %v523 = vpow.pop %v522
        %v524 = vsel %vm517, %v523, 0.0
        %525 = vadd.xlane.f32.xlu0 %v524
        %v526 = vpop.xlane.xlu0 %525
        %v527 = vrcp.pop %v526
        %v528 = vmul.f32 %v523, %v527
        %vm529 = vcmask 31744
        %v531 = vsel %vm529, %v528, 0
        %vm533 = vcmask 1043456
        %v535 = vsel %vm533, %v381, 0
        %537 = vmatprep.subr.mxu0 0.0
        %538 = vmatpush1.msra.mxu0 0.0
        %539 = vmatprep.subr.mxu0 0.0
        %540 = vmatpush1.msra.mxu0 0.0
        %541 = vmatprep.subr.mxu0 0.0
        %542 = vmatpush1.msra.mxu0 0.0
        %543 = vmatprep.subr.mxu0 0.0
        %544 = vmatpush1.msra.mxu0 0.0
        %545 = vmatprep.subr.mxu0 0.0
        %546 = vmatpush1.msra.mxu0 0.0
        %547 = vmatprep.subr.mxu0 0.0
        %548 = vmatpush1.msra.mxu0 0.0
        %549 = vmatprep.subr.mxu0 0.0
        %550 = vmatpush1.msra.mxu0 0.0
        %551 = vmatprep.subr.mxu0 0.0
        %552 = vmatpush1.msra.mxu0 0.0
        %553 = vmatprep.subr.mxu0 0.0
        %554 = vmatpush1.msra.mxu0 0.0
        %555 = vmatprep.subr.mxu0 0.0
        %556 = vmatpush1.msra.mxu0 0.0
        %557 = vmatprep.subr.mxu0 0.0
        %558 = vmatpush1.msra.mxu0 0.0
        %559 = vmatprep.subr.mxu0 0.0
        %560 = vmatpush1.msra.mxu0 0.0
        %561 = vmatprep.subr.mxu0 0.0
        %562 = vmatpush1.msra.mxu0 0.0
        %563 = vmatprep.subr.mxu0 0.0
        %564 = vmatpush1.msra.mxu0 0.0
        %565 = vmatprep.subr.mxu0 0.0
        %566 = vmatpush1.msra.mxu0 0.0
        %567 = vmatprep.subr.mxu0 0.0
        %568 = vmatpush1.msra.mxu0 %v535
        %569 = vmatprep.subr.mxu0 0.0
        %570 = vmatpush2.msra.mxu0 0.0
        %571 = vmatprep.subr.mxu0 0.0
        %572 = vmatpush2.msra.mxu0 0.0
        %573 = vmatprep.subr.mxu0 0.0
        %574 = vmatpush2.msra.mxu0 0.0
        %575 = vmatprep.subr.mxu0 0.0
        %576 = vmatpush2.msra.mxu0 0.0
        %577 = vmatprep.subr.mxu0 0.0
        %578 = vmatpush2.msra.mxu0 0.0
        %579 = vmatprep.subr.mxu0 0.0
        %580 = vmatpush2.msra.mxu0 0.0
        %581 = vmatprep.subr.mxu0 0.0
        %582 = vmatpush2.msra.mxu0 0.0
        %583 = vmatprep.subr.mxu0 0.0
        %584 = vmatpush2.msra.mxu0 0.0
        %585 = vmatprep.subr.mxu0 0.0
        %586 = vmatpush2.msra.mxu0 0.0
        %587 = vmatprep.subr.mxu0 0.0
        %588 = vmatpush2.msra.mxu0 0.0
        %589 = vmatprep.subr.mxu0 0.0
        %590 = vmatpush2.msra.mxu0 0.0
        %591 = vmatprep.subr.mxu0 0.0
        %592 = vmatpush2.msra.mxu0 0.0
        %593 = vmatprep.subr.mxu0 0.0
        %594 = vmatpush2.msra.mxu0 0.0
        %595 = vmatprep.subr.mxu0 0.0
        %596 = vmatpush2.msra.mxu0 0.0
        %597 = vmatprep.subr.mxu0 0.0
        %598 = vmatpush2.msra.mxu0 0.0
        %599 = vmatprep.subr.mxu0 0.0
        %600 = vmatpush2.msra.mxu0 0.0
        %601 = vmatprep.mubr.f32.mxu0 0.0
        %602 = vmatmul.mubr.f32.gmra.mxu0 %v531
        %v603 = vpop.f32.mrf.mxu0
        %v604 = vadd.f32 0.0, %v603
        %v605 = vpop.f32.mrf.mxu0
        %606 = vdwg.mxu0
        %v608 = vsel %vm533, %v382, 0
        %610 = vmatprep.subr.mxu0 0.0
        %611 = vmatpush1.msra.mxu0 0.0
        %612 = vmatprep.subr.mxu0 0.0
        %613 = vmatpush1.msra.mxu0 0.0
        %614 = vmatprep.subr.mxu0 0.0
        %615 = vmatpush1.msra.mxu0 0.0
        %616 = vmatprep.subr.mxu0 0.0
        %617 = vmatpush1.msra.mxu0 0.0
        %618 = vmatprep.subr.mxu0 0.0
        %619 = vmatpush1.msra.mxu0 0.0
        %620 = vmatprep.subr.mxu0 0.0
        %621 = vmatpush1.msra.mxu0 0.0
        %622 = vmatprep.subr.mxu0 0.0
        %623 = vmatpush1.msra.mxu0 0.0
        %624 = vmatprep.subr.mxu0 0.0
        %625 = vmatpush1.msra.mxu0 0.0
        %626 = vmatprep.subr.mxu0 0.0
        %627 = vmatpush1.msra.mxu0 0.0
        %628 = vmatprep.subr.mxu0 0.0
        %629 = vmatpush1.msra.mxu0 0.0
        %630 = vmatprep.subr.mxu0 0.0
        %631 = vmatpush1.msra.mxu0 0.0
        %632 = vmatprep.subr.mxu0 0.0
        %633 = vmatpush1.msra.mxu0 0.0
        %634 = vmatprep.subr.mxu0 0.0
        %635 = vmatpush1.msra.mxu0 0.0
        %636 = vmatprep.subr.mxu0 0.0
        %637 = vmatpush1.msra.mxu0 0.0
        %638 = vmatprep.subr.mxu0 0.0
        %639 = vmatpush1.msra.mxu0 0.0
        %640 = vmatprep.subr.mxu0 0.0
        %641 = vmatpush1.msra.mxu0 %v608
        %642 = vmatprep.subr.mxu0 0.0
        %643 = vmatpush2.msra.mxu0 0.0
        %644 = vmatprep.subr.mxu0 0.0
        %645 = vmatpush2.msra.mxu0 0.0
        %646 = vmatprep.subr.mxu0 0.0
        %647 = vmatpush2.msra.mxu0 0.0
        %648 = vmatprep.subr.mxu0 0.0
        %649 = vmatpush2.msra.mxu0 0.0
        %650 = vmatprep.subr.mxu0 0.0
        %651 = vmatpush2.msra.mxu0 0.0
        %652 = vmatprep.subr.mxu0 0.0
        %653 = vmatpush2.msra.mxu0 0.0
        %654 = vmatprep.subr.mxu0 0.0
        %655 = vmatpush2.msra.mxu0 0.0
        %656 = vmatprep.subr.mxu0 0.0
        %657 = vmatpush2.msra.mxu0 0.0
        %658 = vmatprep.subr.mxu0 0.0
        %659 = vmatpush2.msra.mxu0 0.0
        %660 = vmatprep.subr.mxu0 0.0
        %661 = vmatpush2.msra.mxu0 0.0
        %662 = vmatprep.subr.mxu0 0.0
        %663 = vmatpush2.msra.mxu0 0.0
        %664 = vmatprep.subr.mxu0 0.0
        %665 = vmatpush2.msra.mxu0 0.0
        %666 = vmatprep.subr.mxu0 0.0
        %667 = vmatpush2.msra.mxu0 0.0
        %668 = vmatprep.subr.mxu0 0.0
        %669 = vmatpush2.msra.mxu0 0.0
        %670 = vmatprep.subr.mxu0 0.0
        %671 = vmatpush2.msra.mxu0 0.0
        %672 = vmatprep.subr.mxu0 0.0
        %673 = vmatpush2.msra.mxu0 0.0
        %674 = vmatprep.mubr.f32.mxu0 0.0
        %675 = vmatmul.mubr.f32.gmra.mxu0 %v531
        %v676 = vpop.f32.mrf.mxu0
        %v677 = vadd.f32 0.0, %v676
        %v678 = vpop.f32.mrf.mxu0
        %679 = vdwg.mxu0
        %v680 = vlaneseq
        %v681 = vshrl.u32 %v680, 7
        %v682 = vsub.s32 0, %v681
        %v683 = vrot.slane %v604, %v682
        %685 = vbcast.lane.b32.xlu0 %v683, 256
        %v686 = vpop.permute.xlu0 %685
        %v687 = vmul.f32 %v686, %v378
        %v688 = vrot.slane %v687, 4
        %v689 = vadd.f32 %v687, %v688
        %v690 = vrot.slane %v689, 2
        %v691 = vadd.f32 %v689, %v690
        %v692 = vrot.slane %v691, 1
        %v693 = vadd.f32 %v691, %v692
        %695 = vset.pattern.permute.xlu0 0
        %696 = vperm.xlu0 %695, %v677
        %v697 = vpop.permute.xlu0 %696
        %v699 = vadd.f32 %v693, %v697
        %v700 = vxor.u32 %v699, 2147483648
        %v701 = vmul.f32 %v700, 1.442695
        %v702 = vpow.pop %v701
        %v703 = vadd.f32 %v702, 1.0
        %v704 = vrcp.pop %v703
        %v705 = vmul.f32 1.0, %v704
        %v706 = vlaneseq
        %v707 = vshrl.u32 %v706, 7
        %v708 = vsub.s32 0, %v707
        %v709 = vrot.slane %v705, %v708
        %v710 = vmul.f32 %v709, %v378
        %v711 = vadd.f32 %v710, %v378
        %v712 = vpack.c.bf16 %v711, %v711
        %v714 = vlaneseq
        %v715 = vshrl.u32 %v714, 7
        %v716 = vsub.s32 0, %v715
        %v717 = vrot.slane %v399, %v716
        %v718 = vlaneseq
        %v719 = vshrl.u32 %v718, 7
        %v720 = vsub.s32 1, %v719
        %v721 = vrot.slane %v399, %v720
        %v740 = vunpack.c.l.b16 %v383
        %v741 = vunpack.c.h.b16 %v383
        %v742 = vunpack.c.l.b16 %v384
        %v743 = vunpack.c.h.b16 %v384
        %v744 = vunpack.c.l.b16 %v385
        %v745 = vunpack.c.h.b16 %v385
        %v746 = vunpack.c.l.b16 %v386
        %v747 = vunpack.c.h.b16 %v386
        %v748 = vunpack.c.l.b16 %v387
        %v749 = vunpack.c.h.b16 %v387
        %v750 = vunpack.c.l.b16 %v388
        %v751 = vunpack.c.h.b16 %v388
        %v752 = vunpack.c.l.b16 %v389
        %v753 = vunpack.c.h.b16 %v389
        %v754 = vunpack.c.l.b16 %v390
        %v755 = vunpack.c.h.b16 %v390
        %v756 = vunpack.c.l.b16 %v391
        %v757 = vunpack.c.h.b16 %v391
        %v758 = vunpack.c.l.b16 %v392
        %v759 = vunpack.c.h.b16 %v392
        %v760 = vunpack.c.l.b16 %v393
        %v761 = vunpack.c.h.b16 %v393
        %v762 = vunpack.c.l.b16 %v394
        %v763 = vunpack.c.h.b16 %v394
        %v764 = vunpack.c.l.b16 %v395
        %v765 = vunpack.c.h.b16 %v395
        %v766 = vunpack.c.l.b16 %v396
        %v767 = vunpack.c.h.b16 %v396
        %v768 = vunpack.c.l.b16 %v397
        %v769 = vunpack.c.h.b16 %v397
        %v770 = vunpack.c.l.b16 %v398
        %v771 = vunpack.c.h.b16 %v398
        %v772 = vpack.c.b16 %v742, %v740
        %v773 = vpack.c.b16 %v743, %v741
        %v774 = vpack.c.b16 %v746, %v744
        %v775 = vpack.c.b16 %v747, %v745
        %v776 = vpack.c.b16 %v750, %v748
        %v777 = vpack.c.b16 %v751, %v749
        %v778 = vpack.c.b16 %v754, %v752
        %v779 = vpack.c.b16 %v755, %v753
        %v780 = vpack.c.b16 %v758, %v756
        %v781 = vpack.c.b16 %v759, %v757
        %v782 = vpack.c.b16 %v762, %v760
        %v783 = vpack.c.b16 %v763, %v761
        %v784 = vpack.c.b16 %v766, %v764
        %v785 = vpack.c.b16 %v767, %v765
        %v786 = vpack.c.b16 %v770, %v768
        %v787 = vpack.c.b16 %v771, %v769
        %804 = vmatprep.subr.bf16.mxu0 %v787
        %805 = vmatpush1.bf16.msra.mxu0 %v786
        %806 = vmatprep.subr.bf16.mxu0 %v785
        %807 = vmatpush1.bf16.msra.mxu0 %v784
        %808 = vmatprep.subr.bf16.mxu0 %v783
        %809 = vmatpush1.bf16.msra.mxu0 %v782
        %810 = vmatprep.subr.bf16.mxu0 %v781
        %811 = vmatpush1.bf16.msra.mxu0 %v780
        %812 = vmatprep.subr.bf16.mxu0 %v779
        %813 = vmatpush1.bf16.msra.mxu0 %v778
        %814 = vmatprep.subr.bf16.mxu0 %v777
        %815 = vmatpush1.bf16.msra.mxu0 %v776
        %816 = vmatprep.subr.bf16.mxu0 %v775
        %817 = vmatpush1.bf16.msra.mxu0 %v774
        %818 = vmatprep.subr.bf16.mxu0 %v773
        %819 = vmatpush1.bf16.msra.mxu0 %v772
        %820 = vmatprep.subr.bf16.mxu0 0
        %821 = vmatpush2.bf16.msra.mxu0 0
        %822 = vmatprep.subr.bf16.mxu0 0
        %823 = vmatpush2.bf16.msra.mxu0 0
        %824 = vmatprep.subr.bf16.mxu0 0
        %825 = vmatpush2.bf16.msra.mxu0 0
        %826 = vmatprep.subr.bf16.mxu0 0
        %827 = vmatpush2.bf16.msra.mxu0 0
        %828 = vmatprep.subr.bf16.mxu0 0
        %829 = vmatpush2.bf16.msra.mxu0 0
        %830 = vmatprep.subr.bf16.mxu0 0
        %831 = vmatpush2.bf16.msra.mxu0 0
        %832 = vmatprep.subr.bf16.mxu0 0
        %833 = vmatpush2.bf16.msra.mxu0 0
        %834 = vmatprep.subr.bf16.mxu0 0
        %835 = vmatpush2.bf16.msra.mxu0 0
        %836 = vmatprep.mubr.bf16.mxu0 0
        %837 = vmatmul.mubr.bf16.gmra.mxu0 %v712
        %v838 = vpop.f32.mrf.mxu0
        %v839 = vadd.f32 %v717, %v838
        %v840 = vpop.f32.mrf.mxu0
        %v841 = vadd.f32 %v721, %v840
        %v842 = vpop.f32.mrf.mxu0
        %v843 = vpop.f32.mrf.mxu0
        %844 = vdwg.mxu0
        %v845 = vmul.f32 %v839, 0.5
        %v846 = vmul.f32 %v841, 0.5
        %v847 = vmul.f32 %v839, 0.70710677
        %v848 = vmul.f32 %v841, 0.70710677
        %v849 = verf.f32.pop %v847
        %v850 = verf.f32.pop %v848
        %v851 = vadd.f32 %v849, 1.0
        %v852 = vadd.f32 %v850, 1.0
        %v853 = vmul.f32 %v845, %v851
        %v854 = vmul.f32 %v846, %v852
        %v855 = vpack.c.bf16 %v853, %v853
        %v856 = vpack.c.bf16 %v854, %v854
        %v858 = vlaneseq
        %v859 = vshrl.u32 %v858, 7
        %v860 = vsub.s32 0, %v859
        %v861 = vrot.slane %v432, %v860
        %v895 = vunpack.c.l.b16 %v400
        %v896 = vunpack.c.l.b16 %v401
        %v897 = vunpack.c.l.b16 %v402
        %v898 = vunpack.c.l.b16 %v403
        %v899 = vunpack.c.l.b16 %v404
        %v900 = vunpack.c.l.b16 %v405
        %v901 = vunpack.c.l.b16 %v406
        %v902 = vunpack.c.l.b16 %v407
        %v903 = vunpack.c.l.b16 %v408
        %v904 = vunpack.c.l.b16 %v409
        %v905 = vunpack.c.l.b16 %v410
        %v906 = vunpack.c.l.b16 %v411
        %v907 = vunpack.c.l.b16 %v412
        %v908 = vunpack.c.l.b16 %v413
        %v909 = vunpack.c.l.b16 %v414
        %v910 = vunpack.c.l.b16 %v415
        %v911 = vunpack.c.l.b16 %v416
        %v912 = vunpack.c.l.b16 %v417
        %v913 = vunpack.c.l.b16 %v418
        %v914 = vunpack.c.l.b16 %v419
        %v915 = vunpack.c.l.b16 %v420
        %v916 = vunpack.c.l.b16 %v421
        %v917 = vunpack.c.l.b16 %v422
        %v918 = vunpack.c.l.b16 %v423
        %v919 = vunpack.c.l.b16 %v424
        %v920 = vunpack.c.l.b16 %v425
        %v921 = vunpack.c.l.b16 %v426
        %v922 = vunpack.c.l.b16 %v427
        %v923 = vunpack.c.l.b16 %v428
        %v924 = vunpack.c.l.b16 %v429
        %v925 = vunpack.c.l.b16 %v430
        %v926 = vunpack.c.l.b16 %v431
        %v927 = vpack.c.b16 %v896, %v895
        %v928 = vpack.c.b16 %v898, %v897
        %v929 = vpack.c.b16 %v900, %v899
        %v930 = vpack.c.b16 %v902, %v901
        %v931 = vpack.c.b16 %v904, %v903
        %v932 = vpack.c.b16 %v906, %v905
        %v933 = vpack.c.b16 %v908, %v907
        %v934 = vpack.c.b16 %v910, %v909
        %v935 = vpack.c.b16 %v912, %v911
        %v936 = vpack.c.b16 %v914, %v913
        %v937 = vpack.c.b16 %v916, %v915
        %v938 = vpack.c.b16 %v918, %v917
        %v939 = vpack.c.b16 %v920, %v919
        %v940 = vpack.c.b16 %v922, %v921
        %v941 = vpack.c.b16 %v924, %v923
        %v942 = vpack.c.b16 %v926, %v925
        %959 = vmatprep.subr.bf16.mxu0 0
        %960 = vmatpush1.bf16.msra.mxu0 %v934
        %961 = vmatprep.subr.bf16.mxu0 0
        %962 = vmatpush1.bf16.msra.mxu0 %v933
        %963 = vmatprep.subr.bf16.mxu0 0
        %964 = vmatpush1.bf16.msra.mxu0 %v932
        %965 = vmatprep.subr.bf16.mxu0 0
        %966 = vmatpush1.bf16.msra.mxu0 %v931
        %967 = vmatprep.subr.bf16.mxu0 0
        %968 = vmatpush1.bf16.msra.mxu0 %v930
        %969 = vmatprep.subr.bf16.mxu0 0
        %970 = vmatpush1.bf16.msra.mxu0 %v929
        %971 = vmatprep.subr.bf16.mxu0 0
        %972 = vmatpush1.bf16.msra.mxu0 %v928
        %973 = vmatprep.subr.bf16.mxu0 0
        %974 = vmatpush1.bf16.msra.mxu0 %v927
        %975 = vmatprep.subr.bf16.mxu0 0
        %976 = vmatpush2.bf16.msra.mxu0 %v942
        %977 = vmatprep.subr.bf16.mxu0 0
        %978 = vmatpush2.bf16.msra.mxu0 %v941
        %979 = vmatprep.subr.bf16.mxu0 0
        %980 = vmatpush2.bf16.msra.mxu0 %v940
        %981 = vmatprep.subr.bf16.mxu0 0
        %982 = vmatpush2.bf16.msra.mxu0 %v939
        %983 = vmatprep.subr.bf16.mxu0 0
        %984 = vmatpush2.bf16.msra.mxu0 %v938
        %985 = vmatprep.subr.bf16.mxu0 0
        %986 = vmatpush2.bf16.msra.mxu0 %v937
        %987 = vmatprep.subr.bf16.mxu0 0
        %988 = vmatpush2.bf16.msra.mxu0 %v936
        %989 = vmatprep.subr.bf16.mxu0 0
        %990 = vmatpush2.bf16.msra.mxu0 %v935
        %991 = vmatprep.mubr.bf16.mxu0 %v856
        %992 = vmatmul.mubr.bf16.gmra.mxu0 %v855
        %v993 = vpop.f32.mrf.mxu0
        %v994 = vadd.f32 %v861, %v993
        %v995 = vpop.f32.mrf.mxu0
        %v996 = vpop.f32.mrf.mxu0
        %v997 = vpop.f32.mrf.mxu0
        %998 = vdwg.mxu0
        %v999 = vadd.f32 %v994, %v711
        %s1000 = scalar_lea.vmem %s1, 8
        %v1001 = vld [vmem:[%s1000] sm:$0xff]
        %s1002 = scalar_lea.vmem %s2, 1
        %v1003 = vld [vmem:[%s1002] sm:$0x1]
        %s1004 = scalar_lea.vmem %s3, 4
        %v1005 = vld [vmem:[%s1004] sm:$0xf]
        %s1006 = scalar_lea.vmem %s4, 4
        %v1007 = vld [vmem:[%s1006] sm:$0xf]
        %s1008 = scalar_lea.vmem [#allocation5], 128
        %v1009 = vld [vmem:[%s1008] sm:$0xff]
        %v1010 = vld [vmem:[%s1008 + $0x8] sm:$0xff]
        %v1011 = vld [vmem:[%s1008 + $0x10] sm:$0xff]
        %v1012 = vld [vmem:[%s1008 + $0x18] sm:$0xff]
        %v1013 = vld [vmem:[%s1008 + $0x20] sm:$0xff]
        %v1014 = vld [vmem:[%s1008 + $0x28] sm:$0xff]
        %v1015 = vld [vmem:[%s1008 + $0x30] sm:$0xff]
        %v1016 = vld [vmem:[%s1008 + $0x38] sm:$0xff]
        %v1017 = vld [vmem:[%s1008 + $0x40] sm:$0xff]
        %v1018 = vld [vmem:[%s1008 + $0x48] sm:$0xff]
        %v1019 = vld [vmem:[%s1008 + $0x50] sm:$0xff]
        %v1020 = vld [vmem:[%s1008 + $0x58] sm:$0xff]
        %v1021 = vld [vmem:[%s1008 + $0x60] sm:$0xff]
        %v1022 = vld [vmem:[%s1008 + $0x68] sm:$0xff]
        %v1023 = vld [vmem:[%s1008 + $0x70] sm:$0xff]
        %v1024 = vld [vmem:[%s1008 + $0x78] sm:$0xff]
        %s1025 = scalar_lea.vmem %s6, 2
        %v1026 = vld [vmem:[%s1025] sm:$0x3]
        %s1027 = scalar_lea.vmem [#allocation7], 128
        %v1028 = vld [vmem:[%s1027] sm:$0xf]
        %v1029 = vld [vmem:[%s1027 + $0x4] sm:$0xf]
        %v1030 = vld [vmem:[%s1027 + $0x8] sm:$0xf]
        %v1031 = vld [vmem:[%s1027 + $0xc] sm:$0xf]
        %v1032 = vld [vmem:[%s1027 + $0x10] sm:$0xf]
        %v1033 = vld [vmem:[%s1027 + $0x14] sm:$0xf]
        %v1034 = vld [vmem:[%s1027 + $0x18] sm:$0xf]
        %v1035 = vld [vmem:[%s1027 + $0x1c] sm:$0xf]
        %v1036 = vld [vmem:[%s1027 + $0x20] sm:$0xf]
        %v1037 = vld [vmem:[%s1027 + $0x24] sm:$0xf]
        %v1038 = vld [vmem:[%s1027 + $0x28] sm:$0xf]
        %v1039 = vld [vmem:[%s1027 + $0x2c] sm:$0xf]
        %v1040 = vld [vmem:[%s1027 + $0x30] sm:$0xf]
        %v1041 = vld [vmem:[%s1027 + $0x34] sm:$0xf]
        %v1042 = vld [vmem:[%s1027 + $0x38] sm:$0xf]
        %v1043 = vld [vmem:[%s1027 + $0x3c] sm:$0xf]
        %v1044 = vld [vmem:[%s1027 + $0x40] sm:$0xf]
        %v1045 = vld [vmem:[%s1027 + $0x44] sm:$0xf]
        %v1046 = vld [vmem:[%s1027 + $0x48] sm:$0xf]
        %v1047 = vld [vmem:[%s1027 + $0x4c] sm:$0xf]
        %v1048 = vld [vmem:[%s1027 + $0x50] sm:$0xf]
        %v1049 = vld [vmem:[%s1027 + $0x54] sm:$0xf]
        %v1050 = vld [vmem:[%s1027 + $0x58] sm:$0xf]
        %v1051 = vld [vmem:[%s1027 + $0x5c] sm:$0xf]
        %v1052 = vld [vmem:[%s1027 + $0x60] sm:$0xf]
        %v1053 = vld [vmem:[%s1027 + $0x64] sm:$0xf]
        %v1054 = vld [vmem:[%s1027 + $0x68] sm:$0xf]
        %v1055 = vld [vmem:[%s1027 + $0x6c] sm:$0xf]
        %v1056 = vld [vmem:[%s1027 + $0x70] sm:$0xf]
        %v1057 = vld [vmem:[%s1027 + $0x74] sm:$0xf]
        %v1058 = vld [vmem:[%s1027 + $0x78] sm:$0xf]
        %v1059 = vld [vmem:[%s1027 + $0x7c] sm:$0xf]
        %s1060 = scalar_lea.vmem %s8, 1
        %v1061 = vld [vmem:[%s1060] sm:$0x1]
        %1062 = vadd.xlane.f32.xlu0 %v999
        %v1063 = vpop.xlane.xlu0 %1062
        %v1064 = vmul.f32 %v1063, %v435
        %v1066 = vlaneseq
        %v1067 = vshrl.u32 %v1066, 7
        %v1068 = vsub.s32 %v439, %v1067
        %v1069 = vrot.slane %v1064, %v1068
        %v1070 = vsel %vm444, %v1069, 0
        %1072 = vmatprep.subr.mxu0 0.0
        %1073 = vmatpush1.msra.mxu0 0.0
        %1074 = vmatprep.subr.mxu0 0.0
        %1075 = vmatpush1.msra.mxu0 0.0
        %1076 = vmatprep.subr.mxu0 0.0
        %1077 = vmatpush1.msra.mxu0 0.0
        %1078 = vmatprep.subr.mxu0 0.0
        %1079 = vmatpush1.msra.mxu0 0.0
        %1080 = vmatprep.subr.mxu0 0.0
        %1081 = vmatpush1.msra.mxu0 0.0
        %1082 = vmatprep.subr.mxu0 0.0
        %1083 = vmatpush1.msra.mxu0 0.0
        %1084 = vmatprep.subr.mxu0 0.0
        %1085 = vmatpush1.msra.mxu0 0.0
        %1086 = vmatprep.subr.mxu0 0.0
        %1087 = vmatpush1.msra.mxu0 0.0
        %1088 = vmatprep.subr.mxu0 0.0
        %1089 = vmatpush1.msra.mxu0 0.0
        %1090 = vmatprep.subr.mxu0 0.0
        %1091 = vmatpush1.msra.mxu0 0.0
        %1092 = vmatprep.subr.mxu0 0.0
        %1093 = vmatpush1.msra.mxu0 0.0
        %1094 = vmatprep.subr.mxu0 0.0
        %1095 = vmatpush1.msra.mxu0 0.0
        %1096 = vmatprep.subr.mxu0 0.0
        %1097 = vmatpush1.msra.mxu0 0.0
        %1098 = vmatprep.subr.mxu0 0.0
        %1099 = vmatpush1.msra.mxu0 0.0
        %1100 = vmatprep.subr.mxu0 0.0
        %1101 = vmatpush1.msra.mxu0 0.0
        %1102 = vmatprep.subr.mxu0 0.0
        %1103 = vmatpush1.msra.mxu0 %v1001
        %1104 = vmatprep.subr.mxu0 0.0
        %1105 = vmatpush2.msra.mxu0 0.0
        %1106 = vmatprep.subr.mxu0 0.0
        %1107 = vmatpush2.msra.mxu0 0.0
        %1108 = vmatprep.subr.mxu0 0.0
        %1109 = vmatpush2.msra.mxu0 0.0
        %1110 = vmatprep.subr.mxu0 0.0
        %1111 = vmatpush2.msra.mxu0 0.0
        %1112 = vmatprep.subr.mxu0 0.0
        %1113 = vmatpush2.msra.mxu0 0.0
        %1114 = vmatprep.subr.mxu0 0.0
        %1115 = vmatpush2.msra.mxu0 0.0
        %1116 = vmatprep.subr.mxu0 0.0
        %1117 = vmatpush2.msra.mxu0 0.0
        %1118 = vmatprep.subr.mxu0 0.0
        %1119 = vmatpush2.msra.mxu0 0.0
        %1120 = vmatprep.subr.mxu0 0.0
        %1121 = vmatpush2.msra.mxu0 0.0
        %1122 = vmatprep.subr.mxu0 0.0
        %1123 = vmatpush2.msra.mxu0 0.0
        %1124 = vmatprep.subr.mxu0 0.0
        %1125 = vmatpush2.msra.mxu0 0.0
        %1126 = vmatprep.subr.mxu0 0.0
        %1127 = vmatpush2.msra.mxu0 0.0
        %1128 = vmatprep.subr.mxu0 0.0
        %1129 = vmatpush2.msra.mxu0 0.0
        %1130 = vmatprep.subr.mxu0 0.0
        %1131 = vmatpush2.msra.mxu0 0.0
        %1132 = vmatprep.subr.mxu0 0.0
        %1133 = vmatpush2.msra.mxu0 0.0
        %1134 = vmatprep.subr.mxu0 0.0
        %1135 = vmatpush2.msra.mxu0 0.0
        %1136 = vmatprep.mubr.f32.mxu0 0.0
        %1137 = vmatmul.mubr.f32.gmra.mxu0 %v1070
        %v1138 = vpop.f32.mrf.mxu0
        %v1139 = vadd.f32 %v1003, %v1138
        %v1140 = vpop.f32.mrf.mxu0
        %1141 = vdwg.mxu0
        %v1142 = vsel %vm517, %v1139, -inf
        %1143 = vmax.xlane.f32.xlu0 %v1142
        %v1144 = vpop.xlane.xlu0 %1143
        %v1145 = vsub.f32 %v1139, %v1144
        %v1146 = vmul.f32 %v1145, 1.442695
        %v1147 = vpow.pop %v1146
        %v1148 = vsel %vm517, %v1147, 0.0
        %1149 = vadd.xlane.f32.xlu0 %v1148
        %v1150 = vpop.xlane.xlu0 %1149
        %v1151 = vrcp.pop %v1150
        %v1152 = vmul.f32 %v1147, %v1151
        %v1154 = vsel %vm529, %v1152, 0
        %v1157 = vsel %vm533, %v1005, 0
        %1159 = vmatprep.subr.mxu0 0.0
        %1160 = vmatpush1.msra.mxu0 0.0
        %1161 = vmatprep.subr.mxu0 0.0
        %1162 = vmatpush1.msra.mxu0 0.0
        %1163 = vmatprep.subr.mxu0 0.0
        %1164 = vmatpush1.msra.mxu0 0.0
        %1165 = vmatprep.subr.mxu0 0.0
        %1166 = vmatpush1.msra.mxu0 0.0
        %1167 = vmatprep.subr.mxu0 0.0
        %1168 = vmatpush1.msra.mxu0 0.0
        %1169 = vmatprep.subr.mxu0 0.0
        %1170 = vmatpush1.msra.mxu0 0.0
        %1171 = vmatprep.subr.mxu0 0.0
        %1172 = vmatpush1.msra.mxu0 0.0
        %1173 = vmatprep.subr.mxu0 0.0
        %1174 = vmatpush1.msra.mxu0 0.0
        %1175 = vmatprep.subr.mxu0 0.0
        %1176 = vmatpush1.msra.mxu0 0.0
        %1177 = vmatprep.subr.mxu0 0.0
        %1178 = vmatpush1.msra.mxu0 0.0
        %1179 = vmatprep.subr.mxu0 0.0
        %1180 = vmatpush1.msra.mxu0 0.0
        %1181 = vmatprep.subr.mxu0 0.0
        %1182 = vmatpush1.msra.mxu0 0.0
        %1183 = vmatprep.subr.mxu0 0.0
        %1184 = vmatpush1.msra.mxu0 0.0
        %1185 = vmatprep.subr.mxu0 0.0
        %1186 = vmatpush1.msra.mxu0 0.0
        %1187 = vmatprep.subr.mxu0 0.0
        %1188 = vmatpush1.msra.mxu0 0.0
        %1189 = vmatprep.subr.mxu0 0.0
        %1190 = vmatpush1.msra.mxu0 %v1157
        %1191 = vmatprep.subr.mxu0 0.0
        %1192 = vmatpush2.msra.mxu0 0.0
        %1193 = vmatprep.subr.mxu0 0.0
        %1194 = vmatpush2.msra.mxu0 0.0
        %1195 = vmatprep.subr.mxu0 0.0
        %1196 = vmatpush2.msra.mxu0 0.0
        %1197 = vmatprep.subr.mxu0 0.0
        %1198 = vmatpush2.msra.mxu0 0.0
        %1199 = vmatprep.subr.mxu0 0.0
        %1200 = vmatpush2.msra.mxu0 0.0
        %1201 = vmatprep.subr.mxu0 0.0
        %1202 = vmatpush2.msra.mxu0 0.0
        %1203 = vmatprep.subr.mxu0 0.0
        %1204 = vmatpush2.msra.mxu0 0.0
        %1205 = vmatprep.subr.mxu0 0.0
        %1206 = vmatpush2.msra.mxu0 0.0
        %1207 = vmatprep.subr.mxu0 0.0
        %1208 = vmatpush2.msra.mxu0 0.0
        %1209 = vmatprep.subr.mxu0 0.0
        %1210 = vmatpush2.msra.mxu0 0.0
        %1211 = vmatprep.subr.mxu0 0.0
        %1212 = vmatpush2.msra.mxu0 0.0
        %1213 = vmatprep.subr.mxu0 0.0
        %1214 = vmatpush2.msra.mxu0 0.0
        %1215 = vmatprep.subr.mxu0 0.0
        %1216 = vmatpush2.msra.mxu0 0.0
        %1217 = vmatprep.subr.mxu0 0.0
        %1218 = vmatpush2.msra.mxu0 0.0
        %1219 = vmatprep.subr.mxu0 0.0
        %1220 = vmatpush2.msra.mxu0 0.0
        %1221 = vmatprep.subr.mxu0 0.0
        %1222 = vmatpush2.msra.mxu0 0.0
        %1223 = vmatprep.mubr.f32.mxu0 0.0
        %1224 = vmatmul.mubr.f32.gmra.mxu0 %v1154
        %v1225 = vpop.f32.mrf.mxu0
        %v1226 = vadd.f32 0.0, %v1225
        %v1227 = vpop.f32.mrf.mxu0
        %1228 = vdwg.mxu0
        %v1230 = vsel %vm533, %v1007, 0
        %1232 = vmatprep.subr.mxu0 0.0
        %1233 = vmatpush1.msra.mxu0 0.0
        %1234 = vmatprep.subr.mxu0 0.0
        %1235 = vmatpush1.msra.mxu0 0.0
        %1236 = vmatprep.subr.mxu0 0.0
        %1237 = vmatpush1.msra.mxu0 0.0
        %1238 = vmatprep.subr.mxu0 0.0
        %1239 = vmatpush1.msra.mxu0 0.0
        %1240 = vmatprep.subr.mxu0 0.0
        %1241 = vmatpush1.msra.mxu0 0.0
        %1242 = vmatprep.subr.mxu0 0.0
        %1243 = vmatpush1.msra.mxu0 0.0
        %1244 = vmatprep.subr.mxu0 0.0
        %1245 = vmatpush1.msra.mxu0 0.0
        %1246 = vmatprep.subr.mxu0 0.0
        %1247 = vmatpush1.msra.mxu0 0.0
        %1248 = vmatprep.subr.mxu0 0.0
        %1249 = vmatpush1.msra.mxu0 0.0
        %1250 = vmatprep.subr.mxu0 0.0
        %1251 = vmatpush1.msra.mxu0 0.0
        %1252 = vmatprep.subr.mxu0 0.0
        %1253 = vmatpush1.msra.mxu0 0.0
        %1254 = vmatprep.subr.mxu0 0.0
        %1255 = vmatpush1.msra.mxu0 0.0
        %1256 = vmatprep.subr.mxu0 0.0
        %1257 = vmatpush1.msra.mxu0 0.0
        %1258 = vmatprep.subr.mxu0 0.0
        %1259 = vmatpush1.msra.mxu0 0.0
        %1260 = vmatprep.subr.mxu0 0.0
        %1261 = vmatpush1.msra.mxu0 0.0
        %1262 = vmatprep.subr.mxu0 0.0
        %1263 = vmatpush1.msra.mxu0 %v1230
        %1264 = vmatprep.subr.mxu0 0.0
        %1265 = vmatpush2.msra.mxu0 0.0
        %1266 = vmatprep.subr.mxu0 0.0
        %1267 = vmatpush2.msra.mxu0 0.0
        %1268 = vmatprep.subr.mxu0 0.0
        %1269 = vmatpush2.msra.mxu0 0.0
        %1270 = vmatprep.subr.mxu0 0.0
        %1271 = vmatpush2.msra.mxu0 0.0
        %1272 = vmatprep.subr.mxu0 0.0
        %1273 = vmatpush2.msra.mxu0 0.0
        %1274 = vmatprep.subr.mxu0 0.0
        %1275 = vmatpush2.msra.mxu0 0.0
        %1276 = vmatprep.subr.mxu0 0.0
        %1277 = vmatpush2.msra.mxu0 0.0
        %1278 = vmatprep.subr.mxu0 0.0
        %1279 = vmatpush2.msra.mxu0 0.0
        %1280 = vmatprep.subr.mxu0 0.0
        %1281 = vmatpush2.msra.mxu0 0.0
        %1282 = vmatprep.subr.mxu0 0.0
        %1283 = vmatpush2.msra.mxu0 0.0
        %1284 = vmatprep.subr.mxu0 0.0
        %1285 = vmatpush2.msra.mxu0 0.0
        %1286 = vmatprep.subr.mxu0 0.0
        %1287 = vmatpush2.msra.mxu0 0.0
        %1288 = vmatprep.subr.mxu0 0.0
        %1289 = vmatpush2.msra.mxu0 0.0
        %1290 = vmatprep.subr.mxu0 0.0
        %1291 = vmatpush2.msra.mxu0 0.0
        %1292 = vmatprep.subr.mxu0 0.0
        %1293 = vmatpush2.msra.mxu0 0.0
        %1294 = vmatprep.subr.mxu0 0.0
        %1295 = vmatpush2.msra.mxu0 0.0
        %1296 = vmatprep.mubr.f32.mxu0 0.0
        %1297 = vmatmul.mubr.f32.gmra.mxu0 %v1154
        %v1298 = vpop.f32.mrf.mxu0
        %v1299 = vadd.f32 0.0, %v1298
        %v1300 = vpop.f32.mrf.mxu0
        %1301 = vdwg.mxu0
        %v1302 = vlaneseq
        %v1303 = vshrl.u32 %v1302, 7
        %v1304 = vsub.s32 0, %v1303
        %v1305 = vrot.slane %v1226, %v1304
        %1307 = vbcast.lane.b32.xlu0 %v1305, 256
        %v1308 = vpop.permute.xlu0 %1307
        %v1309 = vmul.f32 %v1308, %v999
        %v1310 = vrot.slane %v1309, 4
        %v1311 = vadd.f32 %v1309, %v1310
        %v1312 = vrot.slane %v1311, 2
        %v1313 = vadd.f32 %v1311, %v1312
        %v1314 = vrot.slane %v1313, 1
        %v1315 = vadd.f32 %v1313, %v1314
        %1317 = vset.pattern.permute.xlu0 0
        %1318 = vperm.xlu0 %1317, %v1299
        %v1319 = vpop.permute.xlu0 %1318
        %v1321 = vadd.f32 %v1315, %v1319
        %v1322 = vxor.u32 %v1321, 2147483648
        %v1323 = vmul.f32 %v1322, 1.442695
        %v1324 = vpow.pop %v1323
        %v1325 = vadd.f32 %v1324, 1.0
        %v1326 = vrcp.pop %v1325
        %v1327 = vmul.f32 1.0, %v1326
        %v1328 = vlaneseq
        %v1329 = vshrl.u32 %v1328, 7
        %v1330 = vsub.s32 0, %v1329
        %v1331 = vrot.slane %v1327, %v1330
        %v1332 = vmul.f32 %v1331, %v999
        %v1333 = vadd.f32 %v1332, %v999
        %v1334 = vpack.c.bf16 %v1333, %v1333
        %v1336 = vlaneseq
        %v1337 = vshrl.u32 %v1336, 7
        %v1338 = vsub.s32 0, %v1337
        %v1339 = vrot.slane %v1026, %v1338
        %v1340 = vlaneseq
        %v1341 = vshrl.u32 %v1340, 7
        %v1342 = vsub.s32 1, %v1341
        %v1343 = vrot.slane %v1026, %v1342
        %v1362 = vunpack.c.l.b16 %v1009
        %v1363 = vunpack.c.h.b16 %v1009
        %v1364 = vunpack.c.l.b16 %v1010
        %v1365 = vunpack.c.h.b16 %v1010
        %v1366 = vunpack.c.l.b16 %v1011
        %v1367 = vunpack.c.h.b16 %v1011
        %v1368 = vunpack.c.l.b16 %v1012
        %v1369 = vunpack.c.h.b16 %v1012
        %v1370 = vunpack.c.l.b16 %v1013
        %v1371 = vunpack.c.h.b16 %v1013
        %v1372 = vunpack.c.l.b16 %v1014
        %v1373 = vunpack.c.h.b16 %v1014
        %v1374 = vunpack.c.l.b16 %v1015
        %v1375 = vunpack.c.h.b16 %v1015
        %v1376 = vunpack.c.l.b16 %v1016
        %v1377 = vunpack.c.h.b16 %v1016
        %v1378 = vunpack.c.l.b16 %v1017
        %v1379 = vunpack.c.h.b16 %v1017
        %v1380 = vunpack.c.l.b16 %v1018
        %v1381 = vunpack.c.h.b16 %v1018
        %v1382 = vunpack.c.l.b16 %v1019
        %v1383 = vunpack.c.h.b16 %v1019
        %v1384 = vunpack.c.l.b16 %v1020
        %v1385 = vunpack.c.h.b16 %v1020
        %v1386 = vunpack.c.l.b16 %v1021
        %v1387 = vunpack.c.h.b16 %v1021
        %v1388 = vunpack.c.l.b16 %v1022
        %v1389 = vunpack.c.h.b16 %v1022
        %v1390 = vunpack.c.l.b16 %v1023
        %v1391 = vunpack.c.h.b16 %v1023
        %v1392 = vunpack.c.l.b16 %v1024
        %v1393 = vunpack.c.h.b16 %v1024
        %v1394 = vpack.c.b16 %v1364, %v1362
        %v1395 = vpack.c.b16 %v1365, %v1363
        %v1396 = vpack.c.b16 %v1368, %v1366
        %v1397 = vpack.c.b16 %v1369, %v1367
        %v1398 = vpack.c.b16 %v1372, %v1370
        %v1399 = vpack.c.b16 %v1373, %v1371
        %v1400 = vpack.c.b16 %v1376, %v1374
        %v1401 = vpack.c.b16 %v1377, %v1375
        %v1402 = vpack.c.b16 %v1380, %v1378
        %v1403 = vpack.c.b16 %v1381, %v1379
        %v1404 = vpack.c.b16 %v1384, %v1382
        %v1405 = vpack.c.b16 %v1385, %v1383
        %v1406 = vpack.c.b16 %v1388, %v1386
        %v1407 = vpack.c.b16 %v1389, %v1387
        %v1408 = vpack.c.b16 %v1392, %v1390
        %v1409 = vpack.c.b16 %v1393, %v1391
        %1426 = vmatprep.subr.bf16.mxu0 %v1409
        %1427 = vmatpush1.bf16.msra.mxu0 %v1408
        %1428 = vmatprep.subr.bf16.mxu0 %v1407
        %1429 = vmatpush1.bf16.msra.mxu0 %v1406
        %1430 = vmatprep.subr.bf16.mxu0 %v1405
        %1431 = vmatpush1.bf16.msra.mxu0 %v1404
        %1432 = vmatprep.subr.bf16.mxu0 %v1403
        %1433 = vmatpush1.bf16.msra.mxu0 %v1402
        %1434 = vmatprep.subr.bf16.mxu0 %v1401
        %1435 = vmatpush1.bf16.msra.mxu0 %v1400
        %1436 = vmatprep.subr.bf16.mxu0 %v1399
        %1437 = vmatpush1.bf16.msra.mxu0 %v1398
        %1438 = vmatprep.subr.bf16.mxu0 %v1397
        %1439 = vmatpush1.bf16.msra.mxu0 %v1396
        %1440 = vmatprep.subr.bf16.mxu0 %v1395
        %1441 = vmatpush1.bf16.msra.mxu0 %v1394
        %1442 = vmatprep.subr.bf16.mxu0 0
        %1443 = vmatpush2.bf16.msra.mxu0 0
        %1444 = vmatprep.subr.bf16.mxu0 0
        %1445 = vmatpush2.bf16.msra.mxu0 0
        %1446 = vmatprep.subr.bf16.mxu0 0
        %1447 = vmatpush2.bf16.msra.mxu0 0
        %1448 = vmatprep.subr.bf16.mxu0 0
        %1449 = vmatpush2.bf16.msra.mxu0 0
        %1450 = vmatprep.subr.bf16.mxu0 0
        %1451 = vmatpush2.bf16.msra.mxu0 0
        %1452 = vmatprep.subr.bf16.mxu0 0
        %1453 = vmatpush2.bf16.msra.mxu0 0
        %1454 = vmatprep.subr.bf16.mxu0 0
        %1455 = vmatpush2.bf16.msra.mxu0 0
        %1456 = vmatprep.subr.bf16.mxu0 0
        %1457 = vmatpush2.bf16.msra.mxu0 0
        %1458 = vmatprep.mubr.bf16.mxu0 0
        %1459 = vmatmul.mubr.bf16.gmra.mxu0 %v1334
        %v1460 = vpop.f32.mrf.mxu0
        %v1461 = vadd.f32 %v1339, %v1460
        %v1462 = vpop.f32.mrf.mxu0
        %v1463 = vadd.f32 %v1343, %v1462
        %v1464 = vpop.f32.mrf.mxu0
        %v1465 = vpop.f32.mrf.mxu0
        %1466 = vdwg.mxu0
        %v1467 = vmul.f32 %v1461, 0.5
        %v1468 = vmul.f32 %v1463, 0.5
        %v1469 = vmul.f32 %v1461, 0.70710677
        %v1470 = vmul.f32 %v1463, 0.70710677
        %v1471 = verf.f32.pop %v1469
        %v1472 = verf.f32.pop %v1470
        %v1473 = vadd.f32 %v1471, 1.0
        %v1474 = vadd.f32 %v1472, 1.0
        %v1475 = vmul.f32 %v1467, %v1473
        %v1476 = vmul.f32 %v1468, %v1474
        %v1477 = vpack.c.bf16 %v1475, %v1475
        %v1478 = vpack.c.bf16 %v1476, %v1476
        %v1480 = vlaneseq
        %v1481 = vshrl.u32 %v1480, 7
        %v1482 = vsub.s32 0, %v1481
        %v1483 = vrot.slane %v1061, %v1482
        %v1517 = vunpack.c.l.b16 %v1028
        %v1518 = vunpack.c.l.b16 %v1029
        %v1519 = vunpack.c.l.b16 %v1030
        %v1520 = vunpack.c.l.b16 %v1031
        %v1521 = vunpack.c.l.b16 %v1032
        %v1522 = vunpack.c.l.b16 %v1033
        %v1523 = vunpack.c.l.b16 %v1034
        %v1524 = vunpack.c.l.b16 %v1035
        %v1525 = vunpack.c.l.b16 %v1036
        %v1526 = vunpack.c.l.b16 %v1037
        %v1527 = vunpack.c.l.b16 %v1038
        %v1528 = vunpack.c.l.b16 %v1039
        %v1529 = vunpack.c.l.b16 %v1040
        %v1530 = vunpack.c.l.b16 %v1041
        %v1531 = vunpack.c.l.b16 %v1042
        %v1532 = vunpack.c.l.b16 %v1043
        %v1533 = vunpack.c.l.b16 %v1044
        %v1534 = vunpack.c.l.b16 %v1045
        %v1535 = vunpack.c.l.b16 %v1046
        %v1536 = vunpack.c.l.b16 %v1047
        %v1537 = vunpack.c.l.b16 %v1048
        %v1538 = vunpack.c.l.b16 %v1049
        %v1539 = vunpack.c.l.b16 %v1050
        %v1540 = vunpack.c.l.b16 %v1051
        %v1541 = vunpack.c.l.b16 %v1052
        %v1542 = vunpack.c.l.b16 %v1053
        %v1543 = vunpack.c.l.b16 %v1054
        %v1544 = vunpack.c.l.b16 %v1055
        %v1545 = vunpack.c.l.b16 %v1056
        %v1546 = vunpack.c.l.b16 %v1057
        %v1547 = vunpack.c.l.b16 %v1058
        %v1548 = vunpack.c.l.b16 %v1059
        %v1549 = vpack.c.b16 %v1518, %v1517
        %v1550 = vpack.c.b16 %v1520, %v1519
        %v1551 = vpack.c.b16 %v1522, %v1521
        %v1552 = vpack.c.b16 %v1524, %v1523
        %v1553 = vpack.c.b16 %v1526, %v1525
        %v1554 = vpack.c.b16 %v1528, %v1527
        %v1555 = vpack.c.b16 %v1530, %v1529
        %v1556 = vpack.c.b16 %v1532, %v1531
        %v1557 = vpack.c.b16 %v1534, %v1533
        %v1558 = vpack.c.b16 %v1536, %v1535
        %v1559 = vpack.c.b16 %v1538, %v1537
        %v1560 = vpack.c.b16 %v1540, %v1539
        %v1561 = vpack.c.b16 %v1542, %v1541
        %v1562 = vpack.c.b16 %v1544, %v1543
        %v1563 = vpack.c.b16 %v1546, %v1545
        %v1564 = vpack.c.b16 %v1548, %v1547
        %1581 = vmatprep.subr.bf16.mxu0 0
        %1582 = vmatpush1.bf16.msra.mxu0 %v1556
        %1583 = vmatprep.subr.bf16.mxu0 0
        %1584 = vmatpush1.bf16.msra.mxu0 %v1555
        %1585 = vmatprep.subr.bf16.mxu0 0
        %1586 = vmatpush1.bf16.msra.mxu0 %v1554
        %1587 = vmatprep.subr.bf16.mxu0 0
        %1588 = vmatpush1.bf16.msra.mxu0 %v1553
        %1589 = vmatprep.subr.bf16.mxu0 0
        %1590 = vmatpush1.bf16.msra.mxu0 %v1552
        %1591 = vmatprep.subr.bf16.mxu0 0
        %1592 = vmatpush1.bf16.msra.mxu0 %v1551
        %1593 = vmatprep.subr.bf16.mxu0 0
        %1594 = vmatpush1.bf16.msra.mxu0 %v1550
        %1595 = vmatprep.subr.bf16.mxu0 0
        %1596 = vmatpush1.bf16.msra.mxu0 %v1549
        %1597 = vmatprep.subr.bf16.mxu0 0
        %1598 = vmatpush2.bf16.msra.mxu0 %v1564
        %1599 = vmatprep.subr.bf16.mxu0 0
        %1600 = vmatpush2.bf16.msra.mxu0 %v1563
        %1601 = vmatprep.subr.bf16.mxu0 0
        %1602 = vmatpush2.bf16.msra.mxu0 %v1562
        %1603 = vmatprep.subr.bf16.mxu0 0
        %1604 = vmatpush2.bf16.msra.mxu0 %v1561
        %1605 = vmatprep.subr.bf16.mxu0 0
        %1606 = vmatpush2.bf16.msra.mxu0 %v1560
        %1607 = vmatprep.subr.bf16.mxu0 0
        %1608 = vmatpush2.bf16.msra.mxu0 %v1559
        %1609 = vmatprep.subr.bf16.mxu0 0
        %1610 = vmatpush2.bf16.msra.mxu0 %v1558
        %1611 = vmatprep.subr.bf16.mxu0 0
        %1612 = vmatpush2.bf16.msra.mxu0 %v1557
        %1613 = vmatprep.mubr.bf16.mxu0 %v1478
        %1614 = vmatmul.mubr.bf16.gmra.mxu0 %v1477
        %v1615 = vpop.f32.mrf.mxu0
        %v1616 = vadd.f32 %v1483, %v1615
        %v1617 = vpop.f32.mrf.mxu0
        %v1618 = vpop.f32.mrf.mxu0
        %v1619 = vpop.f32.mrf.mxu0
        %1620 = vdwg.mxu0
        %v1621 = vadd.f32 %v1616, %v1333
        %1622 = vst [vmem:[%s376] sm:$0xff] %v1621
        %s1623 = sand.u32 %s229, 1
        %s1624 = scalar_lea.sflag [#allocation4], %s1623
        %s1625 = sand.u32 %s229, 1
        %s1626 = smul.addr %s1625, 8
        %s1627 = scalar_lea.vmem [#allocation8], %s1626
        // Predicated region
        $region69: #{tpu_custom_call.1} parent=55 // pred_check
          %p1628 = pneg %p239
        $region70: #{tpu_custom_call.1} parent=55 // pred_check_branch
          %1630 = sbr.rel (%p1628) target = $region72
        $region71: #{tpu_custom_call.1} parent=55 // pred_region
          %s1632 = ssub.s32 128, 128
          %1633 = vsyncadd %s1624, %s1632
          %s1634 = smul.addr %s27, 128
          %s1635 = scalar_lea.hbm %s9, %s1634
          %s1637 = sshll.u32 %s1627, 4
          %s1638 = int_to_ptr.vmem [resolvable:$true] %s1637
          %1640 = dma.vmem_to_hbm [thread:$0]  %s1638, 128, %s1635, %s1624
        $region72: #{tpu_custom_call.1} parent=55 // pred_fallthru
          _
      $region56: #{tpu_custom_call.1} parent=5 // pred_fallthru
        _
      %p1641 = scmp.le.s32.totalorder 2, %s22
      // Predicated region
      $region73: #{tpu_custom_call.1} parent=5 // pred_check
        %p1642 = pneg %p1641
      $region74: #{tpu_custom_call.1} parent=5 // pred_check_branch
        %1644 = sbr.rel (%p1642) target = $region76
      $region75: #{tpu_custom_call.1} parent=5 // pred_region
        %s1645 = ssub.s32 %s22, 2
        // Predicated region
        $region77: #{tpu_custom_call.1} parent=75 // pred_check
          %p1646 = pneg %p245
        $region78: #{tpu_custom_call.1} parent=75 // pred_check_branch
          %1648 = sbr.rel (%p1646) target = $region80
        $region79: #{tpu_custom_call.1} parent=75 // pred_region
          %s1649 = sand.u32 %s230, 1
          %s1650 = scalar_lea.sflag [#allocation4], %s1649
          %s1651 = sand.u32 %s230, 1
          %s1652 = smul.addr %s1651, 8
          %s1653 = scalar_lea.vmem [#allocation8], %s1652
          %1654 = dma.done %s1650, 128
        $region80: #{tpu_custom_call.1} parent=75 // pred_fallthru
          _
      $region76: #{tpu_custom_call.1} parent=5 // pred_fallthru
        _
    $region6: #{tpu_custom_call.1} parent=1 // loop_footer
      %s26 = sadd.s32 1, %s22
    $region7: #{tpu_custom_call.1} parent=1 // loop_footer_branch
      %21 = sbr.rel target = $region3
    $region8: #{tpu_custom_call.1} parent=1 // loop_exit
      _
    %1655 = vsyncpa [#allocation3], 1
    %s1656 = scalar_lea.sflag [#allocation3], 1
    %1657 = vsyncpa %s1656, 1
    %1658 = vsyncpa [#allocation6], 1
    %1659 = vsyncpa [#allocation4], 1
    %s1660 = scalar_lea.sflag [#allocation4], 1
    %1661 = vsyncpa %s1660, 1

</llo_original>
